<compile_context>
chip_gen: v5e
topology: v5e:2x2
jax: 0.10.0
libtpu: 0.0.40
codegen_flags: <defaults>
</compile_context>

<pallas_src>
import math

import jax
import jax.numpy as jnp
from jax.experimental import pallas as pl
from jax.experimental.pallas import tpu as pltpu

TWO_PI = 2.0 * math.pi

# Original (unpacked) parameter layout, used by init_params / reference:
#   [0:4]    fc1        : W(3,100), b(1,100), W(100,64), b(1,64)
#   [4:7]    fourier B  : B1(64,50), B2(64,50), B3(64,50)
#   [7:29]   fourier FF : 11 linears (300->128, 128->128 x9, 128->64), each W,b
#   [29:37]  fc2        : 4 linears (64->128, 128->128, 128->128, 128->32), each W,b
_FC1_OFF, _FC1_N = 0, 2
_B_OFF = 4
_FF_OFF, _FF_N = 7, 11
_FC2_OFF, _FC2_N = 29, 4
_NUM_PARAMS = 37


def _round_up(v, m):
    return ((v + m - 1) // m) * m


def _pad_to(a, shape):
    pads = [(0, t - s) for s, t in zip(a.shape, shape)]
    return jnp.pad(a, pads)


# --------------------------------------------------------------------------- #
# Kernel
# --------------------------------------------------------------------------- #
def spacenet_kernel(x_ref,
                    fc1_w1, fc1_b1, fc1_w2, fc1_b2,
                    b_fused,
                    ff_wc, ff_ws, ff_b0,
                    ff_w, ff_b,
                    fc2_w, fc2_b,
                    out_ref):
    f32 = jnp.float32

    x = x_ref[...]                                                   # (bm, 3)

    # ---- fc1: 3 -> 128(pad of 100) -> 128(pad of 64), tanh between + outer tanh
    h = jnp.tanh(jnp.dot(x, fc1_w1[...], preferred_element_type=f32) + fc1_b1[...])
    h = jnp.dot(h, fc1_w2[...], preferred_element_type=f32) + fc1_b2[...]
    h = jnp.tanh(h)                                                  # (bm,128), cols 64.. == 0

    # ---- Multiscale Fourier: one fused projection, lane-aligned cos/sin
    proj = TWO_PI * jnp.dot(h, b_fused[...], preferred_element_type=f32)   # (bm,256)
    c = jnp.cos(proj)     # padded cols -> cos(0)=1, killed by zero rows in ff_wc
    s = jnp.sin(proj)     # padded cols -> 0

    # First Fourier-FF layer split over cos/sin halves (no lane concat needed).
    g = (jnp.dot(c, ff_wc[...], preferred_element_type=f32)
         + jnp.dot(s, ff_ws[...], preferred_element_type=f32)
         + ff_b0[...])
    g = jnp.tanh(g)                                                  # (bm,128)

    # Layers 1..9: 128x128 with tanh; layer 10: 128->64 (padded to 128), no inner tanh.
    for li in range(9):
        g = jnp.tanh(jnp.dot(g, ff_w[li], preferred_element_type=f32) + ff_b[li])
    g = jnp.dot(g, ff_w[9], preferred_element_type=f32) + ff_b[9]
    g = jnp.tanh(g)                                                  # outer tanh; cols 64.. == 0

    # ---- fc2: 4 padded 128x128 layers, tanh between + outer tanh
    for li in range(3):
        g = jnp.tanh(jnp.dot(g, fc2_w[li], preferred_element_type=f32) + fc2_b[li])
    g = jnp.dot(g, fc2_w[3], preferred_element_type=f32) + fc2_b[3]
    out_ref[...] = jnp.tanh(g).astype(out_ref.dtype)                 # (bm,128), cols 32.. == 0


# --------------------------------------------------------------------------- #
# Parameter packing (offline: fuse / permute / zero-pad to 128-lane multiples)
# --------------------------------------------------------------------------- #
def pack_params(params):
    assert len(params) == _NUM_PARAMS

    # fc1
    fc1_w1 = _pad_to(params[0], (3, 128))        # (3,100)   -> (3,128)
    fc1_b1 = _pad_to(params[1], (1, 128))
    fc1_w2 = _pad_to(params[2], (128, 128))      # (100,64)  -> (128,128)
    fc1_b2 = _pad_to(params[3], (1, 128))

    # Fused Fourier projection matrix: [B1|B2|B3] (64,150) -> (128,256) zero-padded.
    bcat = jnp.concatenate([params[4], params[5], params[6]], axis=1)
    b_fused = _pad_to(bcat, (128, 256))

    # First Fourier-FF layer (300,128): original row order is
    # [cos1, sin1, cos2, sin2, cos3, sin3] (50 rows each).  Regroup into a cos-half
    # and a sin-half matching the fused [cos1|cos2|cos3] / [sin1|sin2|sin3] lane order,
    # then zero-pad rows 150->256 (kills the cos(0)=1 padding columns).
    w0, b0 = params[_FF_OFF], params[_FF_OFF + 1]
    cos_rows = jnp.concatenate([w0[0:50], w0[100:150], w0[200:250]], axis=0)
    sin_rows = jnp.concatenate([w0[50:100], w0[150:200], w0[250:300]], axis=0)
    ff_wc = _pad_to(cos_rows, (256, 128))
    ff_ws = _pad_to(sin_rows, (256, 128))
    ff_b0 = b0                                   # (1,128) already aligned

    # Fourier-FF layers 1..10 stacked: (10,128,128) weights, (10,1,128) biases.
    ws, bs = [], []
    for li in range(1, 11):
        w = params[_FF_OFF + 2 * li]
        b = params[_FF_OFF + 2 * li + 1]
        ws.append(_pad_to(w, (128, 128)))
        bs.append(_pad_to(b, (1, 128)))
    ff_w = jnp.stack(ws)
    ff_b = jnp.stack(bs)

    # fc2: 4 layers stacked (all pad to 128x128).
    ws, bs = [], []
    for li in range(_FC2_N):
        w = params[_FC2_OFF + 2 * li]
        b = params[_FC2_OFF + 2 * li + 1]
        ws.append(_pad_to(w, (128, 128)))
        bs.append(_pad_to(b, (1, 128)))
    fc2_w = jnp.stack(ws)
    fc2_b = jnp.stack(bs)

    return (fc1_w1, fc1_b1, fc1_w2, fc1_b2, b_fused,
            ff_wc, ff_ws, ff_b0, ff_w, ff_b, fc2_w, fc2_b)


# --------------------------------------------------------------------------- #
# Wrapper
# --------------------------------------------------------------------------- #
def _const_spec(a):
    zeros = (0,) * a.ndim
    return pl.BlockSpec(a.shape, lambda i, _z=zeros: _z)


def spacenet_forward(x, packed, *, bm=512):
    batch, in_dim = x.shape

    # Pick an effective batch tile: large for real batches, clamped for tiny ones,
    # always a multiple of 8 (sublane). Pad the batch to a multiple of the tile.
    bm_eff = _round_up(min(bm, _round_up(batch, 8)), 8)
    padded_batch = _round_up(batch, bm_eff)
    if padded_batch != batch:
        x = jnp.pad(x, ((0, padded_batch - batch), (0, 0)))
    grid = (padded_batch // bm_eff,)

    in_specs = [pl.BlockSpec((bm_eff, in_dim), lambda i: (i, 0))]
    in_specs += [_const_spec(p) for p in packed]
    out_specs = pl.BlockSpec((bm_eff, 128), lambda i: (i, 0))

    out_padded = pl.pallas_call(
        spacenet_kernel,
        out_shape=jax.ShapeDtypeStruct((padded_batch, 128), jnp.float32),
        grid_spec=pltpu.PrefetchScalarGridSpec(
            num_scalar_prefetch=0,
            grid=grid,
            in_specs=in_specs,
            out_specs=out_specs,
        ),
        compiler_params=pltpu.CompilerParams(
            dimension_semantics=("parallel",),       # batch grid shards across TCs (v7x)
            vmem_limit_bytes=48 * 1024 * 1024,       # headroom; fits v5e/v6e/v7x
        ),
    )(x, *packed)

    # Lane-dense kernel output; strip batch and lane padding here.
    return out_padded[:batch, :32]


# --------------------------------------------------------------------------- #
# Params / reference
# --------------------------------------------------------------------------- #
def init_params(key):
    """Deterministic synthetic parameters with PyTorch-Linear-style init."""
    params = []

    def linear(k, din, dout):
        kw, kb = jax.random.split(k)
        bound = 1.0 / math.sqrt(din)
        w = jax.random.uniform(kw, (din, dout), jnp.float32, -bound, bound)
        b = jax.random.uniform(kb, (1, dout), jnp.float32, -bound, bound)
        return w, b

    keys = iter(jax.random.split(key, 64))

    # fc1: 3 -> [100] -> 64
    for din, dout in [(3, 100), (100, 64)]:
        w, b = linear(next(keys), din, dout)
        params += [w, b]

    # Fourier embedding matrices: N(0, sigma^2), shape (64, 50) each
    for sigma in (1.0, 1.0, 0.01):
        params.append(sigma * jax.random.normal(next(keys), (64, 50), jnp.float32))

    # Fourier final FF: 300 -> [128]*10 -> 64
    dims = [300] + [128] * 10 + [64]
    for din, dout in zip(dims[:-1], dims[1:]):
        w, b = linear(next(keys), din, dout)
        params += [w, b]

    # fc2: 64 -> [128]*3 -> 32
    dims = [64] + [128] * 3 + [32]
    for din, dout in zip(dims[:-1], dims[1:]):
        w, b = linear(next(keys), din, dout)
        params += [w, b]

    assert len(params) == _NUM_PARAMS
    return params


def spacenet_reference(x, params):
    """Pure-JAX reference mirroring the original (unpacked/unpadded) math."""
    def feedforward(h, offset, n_lin):
        for li in range(n_lin):
            w = params[offset + 2 * li]
            b = params[offset + 2 * li + 1]
            h = h @ w + b
            if li < n_lin - 1:
                h = jnp.tanh(h)
        return h

    h = jnp.tanh(feedforward(x, _FC1_OFF, _FC1_N))
    parts = []
    for k in range(3):
        proj = TWO_PI * (h @ params[_B_OFF + k])
        parts += [jnp.cos(proj), jnp.sin(proj)]
    emb = jnp.concatenate(parts, axis=-1)
    h2 = jnp.tanh(feedforward(emb, _FF_OFF, _FF_N))
    return jnp.tanh(feedforward(h2, _FC2_OFF, _FC2_N))


if __name__ == "__main__":
    params = init_params(jax.random.PRNGKey(0))
    packed = pack_params(params)

    # Small test batch; bm=16 exercises a multi-step grid (grid=3) plus batch padding
    # (40 -> 48).  Real workloads should use the default bm=512.
    x = jax.random.normal(jax.random.PRNGKey(1), (40, 3), jnp.float32)

    out = spacenet_forward(x, packed, bm=16)
    out = jax.block_until_ready(out)
    assert out.shape == (40, 32) and out.dtype == jnp.float32

    ref = spacenet_reference(x, params)
    assert jnp.allclose(out, ref, atol=3e-4, rtol=3e-4), \
        float(jnp.max(jnp.abs(out - ref)))

    print("KERNEL_OK")
</pallas_src>

<mosaic_0001>
module attributes {stable_mosaic.version = 11 : i64} {
  func.func @spacenet_kernel(%arg0: i32, %arg1: memref<16x3xf32, #tpu.memory_space<vmem>>, %arg2: memref<3x128xf32, #tpu.memory_space<vmem>>, %arg3: memref<1x128xf32, #tpu.memory_space<vmem>>, %arg4: memref<128x128xf32, #tpu.memory_space<vmem>>, %arg5: memref<1x128xf32, #tpu.memory_space<vmem>>, %arg6: memref<128x256xf32, #tpu.memory_space<vmem>>, %arg7: memref<256x128xf32, #tpu.memory_space<vmem>>, %arg8: memref<256x128xf32, #tpu.memory_space<vmem>>, %arg9: memref<1x128xf32, #tpu.memory_space<vmem>>, %arg10: memref<10x128x128xf32, #tpu.memory_space<vmem>>, %arg11: memref<10x1x128xf32, #tpu.memory_space<vmem>>, %arg12: memref<4x128x128xf32, #tpu.memory_space<vmem>>, %arg13: memref<4x1x128xf32, #tpu.memory_space<vmem>>, %arg14: memref<16x128xf32, #tpu.memory_space<vmem>>) attributes {dimension_semantics = [#tpu.dimension_semantics<parallel>], iteration_bounds = array<i64: 3>, scalar_prefetch = 0 : i64, scratch_operands = 0 : i64, tpu.core_type = #tpu.core_type<tc>, window_params = [{transform_indices = @transform_0, window_bounds = array<i64: 16, 3>}, {pipeline_mode = #tpu.pipeline_mode<synchronous>, transform_indices = @transform_1, window_bounds = array<i64: 3, 128>}, {pipeline_mode = #tpu.pipeline_mode<synchronous>, transform_indices = @transform_2, window_bounds = array<i64: 1, 128>}, {pipeline_mode = #tpu.pipeline_mode<synchronous>, transform_indices = @transform_3, window_bounds = array<i64: 128, 128>}, {pipeline_mode = #tpu.pipeline_mode<synchronous>, transform_indices = @transform_4, window_bounds = array<i64: 1, 128>}, {pipeline_mode = #tpu.pipeline_mode<synchronous>, transform_indices = @transform_5, window_bounds = array<i64: 128, 256>}, {pipeline_mode = #tpu.pipeline_mode<synchronous>, transform_indices = @transform_6, window_bounds = array<i64: 256, 128>}, {pipeline_mode = #tpu.pipeline_mode<synchronous>, transform_indices = @transform_7, window_bounds = array<i64: 256, 128>}, {pipeline_mode = #tpu.pipeline_mode<synchronous>, transform_indices = @transform_8, window_bounds = array<i64: 1, 128>}, {pipeline_mode = #tpu.pipeline_mode<synchronous>, transform_indices = @transform_9, window_bounds = array<i64: 10, 128, 128>}, {pipeline_mode = #tpu.pipeline_mode<synchronous>, transform_indices = @transform_10, window_bounds = array<i64: 10, 1, 128>}, {pipeline_mode = #tpu.pipeline_mode<synchronous>, transform_indices = @transform_11, window_bounds = array<i64: 4, 128, 128>}, {pipeline_mode = #tpu.pipeline_mode<synchronous>, transform_indices = @transform_12, window_bounds = array<i64: 4, 1, 128>}, {transform_indices = @transform_13, window_bounds = array<i64: 16, 128>}]} {
    %c0 = arith.constant 0 : index
    %c0_0 = arith.constant 0 : index
    %0 = vector.load %arg1[%c0, %c0_0] : memref<16x3xf32, #tpu.memory_space<vmem>>, vector<16x3xf32>
    %c0_1 = arith.constant 0 : index
    %c0_2 = arith.constant 0 : index
    %1 = vector.load %arg2[%c0_1, %c0_2] : memref<3x128xf32, #tpu.memory_space<vmem>>, vector<3x128xf32>
    %cst = arith.constant dense<0.000000e+00> : vector<16x128xf32>
    %2 = tpu.matmul %0, %1, %cst {dimension_numbers = #tpu.dot_dimension_numbers<[1], [0], [0], [1], [0, 0, 1, 1], [], []>} : vector<16x3xf32>, vector<3x128xf32>, vector<16x128xf32> -> vector<16x128xf32>
    %c0_3 = arith.constant 0 : index
    %c0_4 = arith.constant 0 : index
    %3 = vector.load %arg3[%c0_3, %c0_4] : memref<1x128xf32, #tpu.memory_space<vmem>>, vector<1x128xf32>
    %4 = vector.broadcast %3 : vector<1x128xf32> to vector<16x128xf32>
    %5 = arith.addf %2, %4 : vector<16x128xf32>
    %6 = math.tanh %5 : vector<16x128xf32>
    %c0_5 = arith.constant 0 : index
    %c0_6 = arith.constant 0 : index
    %7 = vector.load %arg4[%c0_5, %c0_6] : memref<128x128xf32, #tpu.memory_space<vmem>>, vector<128x128xf32>
    %cst_7 = arith.constant dense<0.000000e+00> : vector<16x128xf32>
    %8 = tpu.matmul %6, %7, %cst_7 {dimension_numbers = #tpu.dot_dimension_numbers<[1], [0], [0], [1], [0, 0, 1, 1], [], []>} : vector<16x128xf32>, vector<128x128xf32>, vector<16x128xf32> -> vector<16x128xf32>
    %c0_8 = arith.constant 0 : index
    %c0_9 = arith.constant 0 : index
    %9 = vector.load %arg5[%c0_8, %c0_9] : memref<1x128xf32, #tpu.memory_space<vmem>>, vector<1x128xf32>
    %10 = vector.broadcast %9 : vector<1x128xf32> to vector<16x128xf32>
    %11 = arith.addf %8, %10 : vector<16x128xf32>
    %12 = math.tanh %11 : vector<16x128xf32>
    %c0_10 = arith.constant 0 : index
    %c0_11 = arith.constant 0 : index
    %13 = vector.load %arg6[%c0_10, %c0_11] : memref<128x256xf32, #tpu.memory_space<vmem>>, vector<128x256xf32>
    %cst_12 = arith.constant dense<0.000000e+00> : vector<16x256xf32>
    %14 = tpu.matmul %12, %13, %cst_12 {dimension_numbers = #tpu.dot_dimension_numbers<[1], [0], [0], [1], [0, 0, 1, 1], [], []>} : vector<16x128xf32>, vector<128x256xf32>, vector<16x256xf32> -> vector<16x256xf32>
    %cst_13 = arith.constant 6.28318548 : f32
    %15 = vector.broadcast %cst_13 : f32 to vector<16x256xf32>
    %16 = arith.mulf %15, %14 : vector<16x256xf32>
    %17 = math.cos %16 : vector<16x256xf32>
    %18 = math.sin %16 : vector<16x256xf32>
    %c0_14 = arith.constant 0 : index
    %c0_15 = arith.constant 0 : index
    %19 = vector.load %arg7[%c0_14, %c0_15] : memref<256x128xf32, #tpu.memory_space<vmem>>, vector<256x128xf32>
    %cst_16 = arith.constant dense<0.000000e+00> : vector<16x128xf32>
    %20 = tpu.matmul %17, %19, %cst_16 {dimension_numbers = #tpu.dot_dimension_numbers<[1], [0], [0], [1], [0, 0, 1, 1], [], []>} : vector<16x256xf32>, vector<256x128xf32>, vector<16x128xf32> -> vector<16x128xf32>
    %c0_17 = arith.constant 0 : index
    %c0_18 = arith.constant 0 : index
    %21 = vector.load %arg8[%c0_17, %c0_18] : memref<256x128xf32, #tpu.memory_space<vmem>>, vector<256x128xf32>
    %cst_19 = arith.constant dense<0.000000e+00> : vector<16x128xf32>
    %22 = tpu.matmul %18, %21, %cst_19 {dimension_numbers = #tpu.dot_dimension_numbers<[1], [0], [0], [1], [0, 0, 1, 1], [], []>} : vector<16x256xf32>, vector<256x128xf32>, vector<16x128xf32> -> vector<16x128xf32>
    %23 = arith.addf %20, %22 : vector<16x128xf32>
    %c0_20 = arith.constant 0 : index
    %c0_21 = arith.constant 0 : index
    %24 = vector.load %arg9[%c0_20, %c0_21] : memref<1x128xf32, #tpu.memory_space<vmem>>, vector<1x128xf32>
    %25 = vector.broadcast %24 : vector<1x128xf32> to vector<16x128xf32>
    %26 = arith.addf %23, %25 : vector<16x128xf32>
    %27 = math.tanh %26 : vector<16x128xf32>
    %c0_22 = arith.constant 0 : index
    %c0_23 = arith.constant 0 : index
    %c0_24 = arith.constant 0 : index
    %28 = vector.load %arg10[%c0_22, %c0_23, %c0_24] : memref<10x128x128xf32, #tpu.memory_space<vmem>>, vector<1x128x128xf32>
    %29 = vector.shape_cast %28 : vector<1x128x128xf32> to vector<128x128xf32>
    %cst_25 = arith.constant dense<0.000000e+00> : vector<16x128xf32>
    %30 = tpu.matmul %27, %29, %cst_25 {dimension_numbers = #tpu.dot_dimension_numbers<[1], [0], [0], [1], [0, 0, 1, 1], [], []>} : vector<16x128xf32>, vector<128x128xf32>, vector<16x128xf32> -> vector<16x128xf32>
    %c0_26 = arith.constant 0 : index
    %c0_27 = arith.constant 0 : index
    %c0_28 = arith.constant 0 : index
    %31 = vector.load %arg11[%c0_26, %c0_27, %c0_28] : memref<10x1x128xf32, #tpu.memory_space<vmem>>, vector<1x1x128xf32>
    %32 = vector.shape_cast %31 : vector<1x1x128xf32> to vector<1x128xf32>
    %33 = vector.broadcast %32 : vector<1x128xf32> to vector<16x128xf32>
    %34 = arith.addf %30, %33 : vector<16x128xf32>
    %35 = math.tanh %34 : vector<16x128xf32>
    %c1 = arith.constant 1 : index
    %c0_29 = arith.constant 0 : index
    %c0_30 = arith.constant 0 : index
    %36 = vector.load %arg10[%c1, %c0_29, %c0_30] : memref<10x128x128xf32, #tpu.memory_space<vmem>>, vector<1x128x128xf32>
    %37 = vector.shape_cast %36 : vector<1x128x128xf32> to vector<128x128xf32>
    %cst_31 = arith.constant dense<0.000000e+00> : vector<16x128xf32>
    %38 = tpu.matmul %35, %37, %cst_31 {dimension_numbers = #tpu.dot_dimension_numbers<[1], [0], [0], [1], [0, 0, 1, 1], [], []>} : vector<16x128xf32>, vector<128x128xf32>, vector<16x128xf32> -> vector<16x128xf32>
    %c1_32 = arith.constant 1 : index
    %c0_33 = arith.constant 0 : index
    %c0_34 = arith.constant 0 : index
    %39 = vector.load %arg11[%c1_32, %c0_33, %c0_34] : memref<10x1x128xf32, #tpu.memory_space<vmem>>, vector<1x1x128xf32>
    %40 = vector.shape_cast %39 : vector<1x1x128xf32> to vector<1x128xf32>
    %41 = vector.broadcast %40 : vector<1x128xf32> to vector<16x128xf32>
    %42 = arith.addf %38, %41 : vector<16x128xf32>
    %43 = math.tanh %42 : vector<16x128xf32>
    %c2 = arith.constant 2 : index
    %c0_35 = arith.constant 0 : index
    %c0_36 = arith.constant 0 : index
    %44 = vector.load %arg10[%c2, %c0_35, %c0_36] : memref<10x128x128xf32, #tpu.memory_space<vmem>>, vector<1x128x128xf32>
    %45 = vector.shape_cast %44 : vector<1x128x128xf32> to vector<128x128xf32>
    %cst_37 = arith.constant dense<0.000000e+00> : vector<16x128xf32>
    %46 = tpu.matmul %43, %45, %cst_37 {dimension_numbers = #tpu.dot_dimension_numbers<[1], [0], [0], [1], [0, 0, 1, 1], [], []>} : vector<16x128xf32>, vector<128x128xf32>, vector<16x128xf32> -> vector<16x128xf32>
    %c2_38 = arith.constant 2 : index
    %c0_39 = arith.constant 0 : index
    %c0_40 = arith.constant 0 : index
    %47 = vector.load %arg11[%c2_38, %c0_39, %c0_40] : memref<10x1x128xf32, #tpu.memory_space<vmem>>, vector<1x1x128xf32>
    %48 = vector.shape_cast %47 : vector<1x1x128xf32> to vector<1x128xf32>
    %49 = vector.broadcast %48 : vector<1x128xf32> to vector<16x128xf32>
    %50 = arith.addf %46, %49 : vector<16x128xf32>
    %51 = math.tanh %50 : vector<16x128xf32>
    %c3 = arith.constant 3 : index
    %c0_41 = arith.constant 0 : index
    %c0_42 = arith.constant 0 : index
    %52 = vector.load %arg10[%c3, %c0_41, %c0_42] : memref<10x128x128xf32, #tpu.memory_space<vmem>>, vector<1x128x128xf32>
    %53 = vector.shape_cast %52 : vector<1x128x128xf32> to vector<128x128xf32>
    %cst_43 = arith.constant dense<0.000000e+00> : vector<16x128xf32>
    %54 = tpu.matmul %51, %53, %cst_43 {dimension_numbers = #tpu.dot_dimension_numbers<[1], [0], [0], [1], [0, 0, 1, 1], [], []>} : vector<16x128xf32>, vector<128x128xf32>, vector<16x128xf32> -> vector<16x128xf32>
    %c3_44 = arith.constant 3 : index
    %c0_45 = arith.constant 0 : index
    %c0_46 = arith.constant 0 : index
    %55 = vector.load %arg11[%c3_44, %c0_45, %c0_46] : memref<10x1x128xf32, #tpu.memory_space<vmem>>, vector<1x1x128xf32>
    %56 = vector.shape_cast %55 : vector<1x1x128xf32> to vector<1x128xf32>
    %57 = vector.broadcast %56 : vector<1x128xf32> to vector<16x128xf32>
    %58 = arith.addf %54, %57 : vector<16x128xf32>
    %59 = math.tanh %58 : vector<16x128xf32>
    %c4 = arith.constant 4 : index
    %c0_47 = arith.constant 0 : index
    %c0_48 = arith.constant 0 : index
    %60 = vector.load %arg10[%c4, %c0_47, %c0_48] : memref<10x128x128xf32, #tpu.memory_space<vmem>>, vector<1x128x128xf32>
    %61 = vector.shape_cast %60 : vector<1x128x128xf32> to vector<128x128xf32>
    %cst_49 = arith.constant dense<0.000000e+00> : vector<16x128xf32>
    %62 = tpu.matmul %59, %61, %cst_49 {dimension_numbers = #tpu.dot_dimension_numbers<[1], [0], [0], [1], [0, 0, 1, 1], [], []>} : vector<16x128xf32>, vector<128x128xf32>, vector<16x128xf32> -> vector<16x128xf32>
    %c4_50 = arith.constant 4 : index
    %c0_51 = arith.constant 0 : index
    %c0_52 = arith.constant 0 : index
    %63 = vector.load %arg11[%c4_50, %c0_51, %c0_52] : memref<10x1x128xf32, #tpu.memory_space<vmem>>, vector<1x1x128xf32>
    %64 = vector.shape_cast %63 : vector<1x1x128xf32> to vector<1x128xf32>
    %65 = vector.broadcast %64 : vector<1x128xf32> to vector<16x128xf32>
    %66 = arith.addf %62, %65 : vector<16x128xf32>
    %67 = math.tanh %66 : vector<16x128xf32>
    %c5 = arith.constant 5 : index
    %c0_53 = arith.constant 0 : index
    %c0_54 = arith.constant 0 : index
    %68 = vector.load %arg10[%c5, %c0_53, %c0_54] : memref<10x128x128xf32, #tpu.memory_space<vmem>>, vector<1x128x128xf32>
    %69 = vector.shape_cast %68 : vector<1x128x128xf32> to vector<128x128xf32>
    %cst_55 = arith.constant dense<0.000000e+00> : vector<16x128xf32>
    %70 = tpu.matmul %67, %69, %cst_55 {dimension_numbers = #tpu.dot_dimension_numbers<[1], [0], [0], [1], [0, 0, 1, 1], [], []>} : vector<16x128xf32>, vector<128x128xf32>, vector<16x128xf32> -> vector<16x128xf32>
    %c5_56 = arith.constant 5 : index
    %c0_57 = arith.constant 0 : index
    %c0_58 = arith.constant 0 : index
    %71 = vector.load %arg11[%c5_56, %c0_57, %c0_58] : memref<10x1x128xf32, #tpu.memory_space<vmem>>, vector<1x1x128xf32>
    %72 = vector.shape_cast %71 : vector<1x1x128xf32> to vector<1x128xf32>
    %73 = vector.broadcast %72 : vector<1x128xf32> to vector<16x128xf32>
    %74 = arith.addf %70, %73 : vector<16x128xf32>
    %75 = math.tanh %74 : vector<16x128xf32>
    %c6 = arith.constant 6 : index
    %c0_59 = arith.constant 0 : index
    %c0_60 = arith.constant 0 : index
    %76 = vector.load %arg10[%c6, %c0_59, %c0_60] : memref<10x128x128xf32, #tpu.memory_space<vmem>>, vector<1x128x128xf32>
    %77 = vector.shape_cast %76 : vector<1x128x128xf32> to vector<128x128xf32>
    %cst_61 = arith.constant dense<0.000000e+00> : vector<16x128xf32>
    %78 = tpu.matmul %75, %77, %cst_61 {dimension_numbers = #tpu.dot_dimension_numbers<[1], [0], [0], [1], [0, 0, 1, 1], [], []>} : vector<16x128xf32>, vector<128x128xf32>, vector<16x128xf32> -> vector<16x128xf32>
    %c6_62 = arith.constant 6 : index
    %c0_63 = arith.constant 0 : index
    %c0_64 = arith.constant 0 : index
    %79 = vector.load %arg11[%c6_62, %c0_63, %c0_64] : memref<10x1x128xf32, #tpu.memory_space<vmem>>, vector<1x1x128xf32>
    %80 = vector.shape_cast %79 : vector<1x1x128xf32> to vector<1x128xf32>
    %81 = vector.broadcast %80 : vector<1x128xf32> to vector<16x128xf32>
    %82 = arith.addf %78, %81 : vector<16x128xf32>
    %83 = math.tanh %82 : vector<16x128xf32>
    %c7 = arith.constant 7 : index
    %c0_65 = arith.constant 0 : index
    %c0_66 = arith.constant 0 : index
    %84 = vector.load %arg10[%c7, %c0_65, %c0_66] : memref<10x128x128xf32, #tpu.memory_space<vmem>>, vector<1x128x128xf32>
    %85 = vector.shape_cast %84 : vector<1x128x128xf32> to vector<128x128xf32>
    %cst_67 = arith.constant dense<0.000000e+00> : vector<16x128xf32>
    %86 = tpu.matmul %83, %85, %cst_67 {dimension_numbers = #tpu.dot_dimension_numbers<[1], [0], [0], [1], [0, 0, 1, 1], [], []>} : vector<16x128xf32>, vector<128x128xf32>, vector<16x128xf32> -> vector<16x128xf32>
    %c7_68 = arith.constant 7 : index
    %c0_69 = arith.constant 0 : index
    %c0_70 = arith.constant 0 : index
    %87 = vector.load %arg11[%c7_68, %c0_69, %c0_70] : memref<10x1x128xf32, #tpu.memory_space<vmem>>, vector<1x1x128xf32>
    %88 = vector.shape_cast %87 : vector<1x1x128xf32> to vector<1x128xf32>
    %89 = vector.broadcast %88 : vector<1x128xf32> to vector<16x128xf32>
    %90 = arith.addf %86, %89 : vector<16x128xf32>
    %91 = math.tanh %90 : vector<16x128xf32>
    %c8 = arith.constant 8 : index
    %c0_71 = arith.constant 0 : index
    %c0_72 = arith.constant 0 : index
    %92 = vector.load %arg10[%c8, %c0_71, %c0_72] : memref<10x128x128xf32, #tpu.memory_space<vmem>>, vector<1x128x128xf32>
    %93 = vector.shape_cast %92 : vector<1x128x128xf32> to vector<128x128xf32>
    %cst_73 = arith.constant dense<0.000000e+00> : vector<16x128xf32>
    %94 = tpu.matmul %91, %93, %cst_73 {dimension_numbers = #tpu.dot_dimension_numbers<[1], [0], [0], [1], [0, 0, 1, 1], [], []>} : vector<16x128xf32>, vector<128x128xf32>, vector<16x128xf32> -> vector<16x128xf32>
    %c8_74 = arith.constant 8 : index
    %c0_75 = arith.constant 0 : index
    %c0_76 = arith.constant 0 : index
    %95 = vector.load %arg11[%c8_74, %c0_75, %c0_76] : memref<10x1x128xf32, #tpu.memory_space<vmem>>, vector<1x1x128xf32>
    %96 = vector.shape_cast %95 : vector<1x1x128xf32> to vector<1x128xf32>
    %97 = vector.broadcast %96 : vector<1x128xf32> to vector<16x128xf32>
    %98 = arith.addf %94, %97 : vector<16x128xf32>
    %99 = math.tanh %98 : vector<16x128xf32>
    %c9 = arith.constant 9 : index
    %c0_77 = arith.constant 0 : index
    %c0_78 = arith.constant 0 : index
    %100 = vector.load %arg10[%c9, %c0_77, %c0_78] : memref<10x128x128xf32, #tpu.memory_space<vmem>>, vector<1x128x128xf32>
    %101 = vector.shape_cast %100 : vector<1x128x128xf32> to vector<128x128xf32>
    %cst_79 = arith.constant dense<0.000000e+00> : vector<16x128xf32>
    %102 = tpu.matmul %99, %101, %cst_79 {dimension_numbers = #tpu.dot_dimension_numbers<[1], [0], [0], [1], [0, 0, 1, 1], [], []>} : vector<16x128xf32>, vector<128x128xf32>, vector<16x128xf32> -> vector<16x128xf32>
    %c9_80 = arith.constant 9 : index
    %c0_81 = arith.constant 0 : index
    %c0_82 = arith.constant 0 : index
    %103 = vector.load %arg11[%c9_80, %c0_81, %c0_82] : memref<10x1x128xf32, #tpu.memory_space<vmem>>, vector<1x1x128xf32>
    %104 = vector.shape_cast %103 : vector<1x1x128xf32> to vector<1x128xf32>
    %105 = vector.broadcast %104 : vector<1x128xf32> to vector<16x128xf32>
    %106 = arith.addf %102, %105 : vector<16x128xf32>
    %107 = math.tanh %106 : vector<16x128xf32>
    %c0_83 = arith.constant 0 : index
    %c0_84 = arith.constant 0 : index
    %c0_85 = arith.constant 0 : index
    %108 = vector.load %arg12[%c0_83, %c0_84, %c0_85] : memref<4x128x128xf32, #tpu.memory_space<vmem>>, vector<1x128x128xf32>
    %109 = vector.shape_cast %108 : vector<1x128x128xf32> to vector<128x128xf32>
    %cst_86 = arith.constant dense<0.000000e+00> : vector<16x128xf32>
    %110 = tpu.matmul %107, %109, %cst_86 {dimension_numbers = #tpu.dot_dimension_numbers<[1], [0], [0], [1], [0, 0, 1, 1], [], []>} : vector<16x128xf32>, vector<128x128xf32>, vector<16x128xf32> -> vector<16x128xf32>
    %c0_87 = arith.constant 0 : index
    %c0_88 = arith.constant 0 : index
    %c0_89 = arith.constant 0 : index
    %111 = vector.load %arg13[%c0_87, %c0_88, %c0_89] : memref<4x1x128xf32, #tpu.memory_space<vmem>>, vector<1x1x128xf32>
    %112 = vector.shape_cast %111 : vector<1x1x128xf32> to vector<1x128xf32>
    %113 = vector.broadcast %112 : vector<1x128xf32> to vector<16x128xf32>
    %114 = arith.addf %110, %113 : vector<16x128xf32>
    %115 = math.tanh %114 : vector<16x128xf32>
    %c1_90 = arith.constant 1 : index
    %c0_91 = arith.constant 0 : index
    %c0_92 = arith.constant 0 : index
    %116 = vector.load %arg12[%c1_90, %c0_91, %c0_92] : memref<4x128x128xf32, #tpu.memory_space<vmem>>, vector<1x128x128xf32>
    %117 = vector.shape_cast %116 : vector<1x128x128xf32> to vector<128x128xf32>
    %cst_93 = arith.constant dense<0.000000e+00> : vector<16x128xf32>
    %118 = tpu.matmul %115, %117, %cst_93 {dimension_numbers = #tpu.dot_dimension_numbers<[1], [0], [0], [1], [0, 0, 1, 1], [], []>} : vector<16x128xf32>, vector<128x128xf32>, vector<16x128xf32> -> vector<16x128xf32>
    %c1_94 = arith.constant 1 : index
    %c0_95 = arith.constant 0 : index
    %c0_96 = arith.constant 0 : index
    %119 = vector.load %arg13[%c1_94, %c0_95, %c0_96] : memref<4x1x128xf32, #tpu.memory_space<vmem>>, vector<1x1x128xf32>
    %120 = vector.shape_cast %119 : vector<1x1x128xf32> to vector<1x128xf32>
    %121 = vector.broadcast %120 : vector<1x128xf32> to vector<16x128xf32>
    %122 = arith.addf %118, %121 : vector<16x128xf32>
    %123 = math.tanh %122 : vector<16x128xf32>
    %c2_97 = arith.constant 2 : index
    %c0_98 = arith.constant 0 : index
    %c0_99 = arith.constant 0 : index
    %124 = vector.load %arg12[%c2_97, %c0_98, %c0_99] : memref<4x128x128xf32, #tpu.memory_space<vmem>>, vector<1x128x128xf32>
    %125 = vector.shape_cast %124 : vector<1x128x128xf32> to vector<128x128xf32>
    %cst_100 = arith.constant dense<0.000000e+00> : vector<16x128xf32>
    %126 = tpu.matmul %123, %125, %cst_100 {dimension_numbers = #tpu.dot_dimension_numbers<[1], [0], [0], [1], [0, 0, 1, 1], [], []>} : vector<16x128xf32>, vector<128x128xf32>, vector<16x128xf32> -> vector<16x128xf32>
    %c2_101 = arith.constant 2 : index
    %c0_102 = arith.constant 0 : index
    %c0_103 = arith.constant 0 : index
    %127 = vector.load %arg13[%c2_101, %c0_102, %c0_103] : memref<4x1x128xf32, #tpu.memory_space<vmem>>, vector<1x1x128xf32>
    %128 = vector.shape_cast %127 : vector<1x1x128xf32> to vector<1x128xf32>
    %129 = vector.broadcast %128 : vector<1x128xf32> to vector<16x128xf32>
    %130 = arith.addf %126, %129 : vector<16x128xf32>
    %131 = math.tanh %130 : vector<16x128xf32>
    %c3_104 = arith.constant 3 : index
    %c0_105 = arith.constant 0 : index
    %c0_106 = arith.constant 0 : index
    %132 = vector.load %arg12[%c3_104, %c0_105, %c0_106] : memref<4x128x128xf32, #tpu.memory_space<vmem>>, vector<1x128x128xf32>
    %133 = vector.shape_cast %132 : vector<1x128x128xf32> to vector<128x128xf32>
    %cst_107 = arith.constant dense<0.000000e+00> : vector<16x128xf32>
    %134 = tpu.matmul %131, %133, %cst_107 {dimension_numbers = #tpu.dot_dimension_numbers<[1], [0], [0], [1], [0, 0, 1, 1], [], []>} : vector<16x128xf32>, vector<128x128xf32>, vector<16x128xf32> -> vector<16x128xf32>
    %c3_108 = arith.constant 3 : index
    %c0_109 = arith.constant 0 : index
    %c0_110 = arith.constant 0 : index
    %135 = vector.load %arg13[%c3_108, %c0_109, %c0_110] : memref<4x1x128xf32, #tpu.memory_space<vmem>>, vector<1x1x128xf32>
    %136 = vector.shape_cast %135 : vector<1x1x128xf32> to vector<1x128xf32>
    %137 = vector.broadcast %136 : vector<1x128xf32> to vector<16x128xf32>
    %138 = arith.addf %134, %137 : vector<16x128xf32>
    %139 = math.tanh %138 : vector<16x128xf32>
    %c0_111 = arith.constant 0 : index
    %c0_112 = arith.constant 0 : index
    %140 = vector.load %arg14[%c0_111, %c0_112] : memref<16x128xf32, #tpu.memory_space<vmem>>, vector<16x128xf32>
    tpu.vector_store %arg14[%c0_111, %c0_112], %139 {strides = array<i32>} : memref<16x128xf32, #tpu.memory_space<vmem>>, vector<16x128xf32>,
    return
  }
  func.func @transform_0(%arg0: i32) -> (i32, i32) {
    %c0_i32 = arith.constant 0 : i32
    %c0_i32_0 = arith.constant 0 : i32
    return %arg0, %c0_i32 : i32, i32
  }
  func.func @transform_1(%arg0: i32) -> (i32, i32) {
    %c0_i32 = arith.constant 0 : i32
    %c0_i32_0 = arith.constant 0 : i32
    %c0_i32_1 = arith.constant 0 : i32
    return %c0_i32, %c0_i32_0 : i32, i32
  }
  func.func @transform_2(%arg0: i32) -> (i32, i32) {
    %c0_i32 = arith.constant 0 : i32
    %c0_i32_0 = arith.constant 0 : i32
    %c0_i32_1 = arith.constant 0 : i32
    return %c0_i32, %c0_i32_0 : i32, i32
  }
  func.func @transform_3(%arg0: i32) -> (i32, i32) {
    %c0_i32 = arith.constant 0 : i32
    %c0_i32_0 = arith.constant 0 : i32
    %c0_i32_1 = arith.constant 0 : i32
    return %c0_i32, %c0_i32_0 : i32, i32
  }
  func.func @transform_4(%arg0: i32) -> (i32, i32) {
    %c0_i32 = arith.constant 0 : i32
    %c0_i32_0 = arith.constant 0 : i32
    %c0_i32_1 = arith.constant 0 : i32
    return %c0_i32, %c0_i32_0 : i32, i32
  }
  func.func @transform_5(%arg0: i32) -> (i32, i32) {
    %c0_i32 = arith.constant 0 : i32
    %c0_i32_0 = arith.constant 0 : i32
    %c0_i32_1 = arith.constant 0 : i32
    return %c0_i32, %c0_i32_0 : i32, i32
  }
  func.func @transform_6(%arg0: i32) -> (i32, i32) {
    %c0_i32 = arith.constant 0 : i32
    %c0_i32_0 = arith.constant 0 : i32
    %c0_i32_1 = arith.constant 0 : i32
    return %c0_i32, %c0_i32_0 : i32, i32
  }
  func.func @transform_7(%arg0: i32) -> (i32, i32) {
    %c0_i32 = arith.constant 0 : i32
    %c0_i32_0 = arith.constant 0 : i32
    %c0_i32_1 = arith.constant 0 : i32
    return %c0_i32, %c0_i32_0 : i32, i32
  }
  func.func @transform_8(%arg0: i32) -> (i32, i32) {
    %c0_i32 = arith.constant 0 : i32
    %c0_i32_0 = arith.constant 0 : i32
    %c0_i32_1 = arith.constant 0 : i32
    return %c0_i32, %c0_i32_0 : i32, i32
  }
  func.func @transform_9(%arg0: i32) -> (i32, i32, i32) {
    %c0_i32 = arith.constant 0 : i32
    %c0_i32_0 = arith.constant 0 : i32
    %c0_i32_1 = arith.constant 0 : i32
    %c0_i32_2 = arith.constant 0 : i32
    return %c0_i32, %c0_i32_0, %c0_i32_1 : i32, i32, i32
  }
  func.func @transform_10(%arg0: i32) -> (i32, i32, i32) {
    %c0_i32 = arith.constant 0 : i32
    %c0_i32_0 = arith.constant 0 : i32
    %c0_i32_1 = arith.constant 0 : i32
    %c0_i32_2 = arith.constant 0 : i32
    return %c0_i32, %c0_i32_0, %c0_i32_1 : i32, i32, i32
  }
  func.func @transform_11(%arg0: i32) -> (i32, i32, i32) {
    %c0_i32 = arith.constant 0 : i32
    %c0_i32_0 = arith.constant 0 : i32
    %c0_i32_1 = arith.constant 0 : i32
    %c0_i32_2 = arith.constant 0 : i32
    return %c0_i32, %c0_i32_0, %c0_i32_1 : i32, i32, i32
  }
  func.func @transform_12(%arg0: i32) -> (i32, i32, i32) {
    %c0_i32 = arith.constant 0 : i32
    %c0_i32_0 = arith.constant 0 : i32
    %c0_i32_1 = arith.constant 0 : i32
    %c0_i32_2 = arith.constant 0 : i32
    return %c0_i32, %c0_i32_0, %c0_i32_1 : i32, i32, i32
  }
  func.func @transform_13(%arg0: i32) -> (i32, i32) {
    %c0_i32 = arith.constant 0 : i32
    %c0_i32_0 = arith.constant 0 : i32
    return %arg0, %c0_i32 : i32, i32
  }
}

</mosaic_0001>

<llo_original>
// kernel: tpu_custom_call.1
$region0: #{tpu_custom_call.1}
  #allocation0 [shape = 'u32[]', space=smem, size = 0x4, offset = 0x4, fixed_abs, tag = 'smem constant byte address 0x4 - core index']
  #allocation1 [shape = 'u32[72,128]{1,0:T(1,128)}', space=vmem, size = 0x9000, scoped, tag = 'internal scratch']
  %s0 = inlined_call_operand.vmem [shape: f32[48,3], index: 0, kind: input, shape index: {}]
  %s1 = inlined_call_operand.vmem [shape: f32[3,128], index: 1, kind: input, shape index: {}]
  %s2 = inlined_call_operand.vmem [shape: f32[1,128], index: 2, kind: input, shape index: {}]
  %s3 = inlined_call_operand.hbm [shape: f32[128,128], index: 3, kind: input, shape index: {}]
  %s4 = inlined_call_operand.vmem [shape: f32[1,128], index: 4, kind: input, shape index: {}]
  %s5 = inlined_call_operand.hbm [shape: f32[128,256], index: 5, kind: input, shape index: {}]
  %s6 = inlined_call_operand.hbm [shape: f32[256,128], index: 6, kind: input, shape index: {}]
  %s7 = inlined_call_operand.hbm [shape: f32[256,128], index: 7, kind: input, shape index: {}]
  %s8 = inlined_call_operand.vmem [shape: f32[1,128], index: 8, kind: input, shape index: {}]
  %s9 = inlined_call_operand.hbm [shape: f32[10,128,128], index: 9, kind: input, shape index: {}]
  %s10 = inlined_call_operand.vmem [shape: f32[10,1,128], index: 10, kind: input, shape index: {}]
  %s11 = inlined_call_operand.hbm [shape: f32[4,128,128], index: 11, kind: input, shape index: {}]
  %s12 = inlined_call_operand.vmem [shape: f32[4,1,128], index: 12, kind: input, shape index: {}]
  %s13 = inlined_call_operand.hbm [shape: f32[48,128], index: 13, kind: output, shape index: {}]
  %s14 = sld [smem:[#allocation0]]
  $region109: #{tpu_custom_call.1} parent=0
    _
  %s16 = ssub.s32 1, %s14
  %s17 = scalar_select 0, %s16, %s14
  $region1: #{tpu_custom_call.1} parent=0
    #allocation2 [shape = 'u8[65536]{0}', space=vmem, size = 0x10000, scoped, tag = 'input window, operand 3, single buffered']
    #allocation3 [shape = 's32[2]{0}', space=sflag, size = 0x8, scoped, tag = 'scoped memory for tpu_custom_call.1']
    #allocation4 [shape = 's32[2]{0}', space=sflag, size = 0x8, scoped, tag = 'scoped memory for tpu_custom_call.1']
    #allocation5 [shape = 'u8[131072]{0}', space=vmem, size = 0x20000, scoped, tag = 'input window, operand 5, single buffered']
    #allocation6 [shape = 's32[1]{0}', space=sflag, size = 0x4, scoped, tag = 'scoped memory for tpu_custom_call.1']
    #allocation7 [shape = 'u8[131072]{0}', space=vmem, size = 0x20000, scoped, tag = 'input window, operand 6, single buffered']
    #allocation8 [shape = 'u8[131072]{0}', space=vmem, size = 0x20000, scoped, tag = 'input window, operand 7, single buffered']
    #allocation9 [shape = 's32[1]{0}', space=sflag, size = 0x4, scoped, tag = 'scoped memory for tpu_custom_call.1']
    #allocation10 [shape = 'u8[655360]{0}', space=vmem, size = 0xa0000, scoped, tag = 'input window, operand 9, single buffered']
    #allocation11 [shape = 'u8[262144]{0}', space=vmem, size = 0x40000, scoped, tag = 'input window, operand 11, single buffered']
    #allocation12 [shape = 's32[1]{0}', space=sflag, size = 0x4, scoped, tag = 'scoped memory for tpu_custom_call.1']
    #allocation13 [shape = 'u8[16384]{0}', space=vmem, size = 0x4000, scoped, tag = 'output window, operand 0']
    %18 = vsyncpa [#allocation3], 0
    %19 = vsyncpa [#allocation6], 0
    %20 = vsyncpa [#allocation9], 0
    %21 = vsyncpa [#allocation12], 0
    %22 = vsyncpa [#allocation4], 0
    %s23 = scalar_lea.sflag [#allocation4], 1
    %24 = vsyncpa %s23, 0
    loop: start=0, step=1, limit=5
    $region2: #{tpu_custom_call.1} parent=1 // loop_pre_header
      _
    $region3: #{tpu_custom_call.1} parent=1 // loop_header
      %s26 = sphi 0, %s30
      %p27 = scmp.ge.s32.totalorder %s26, 5
      %s36 = sphi 0, %s38
      %s39 = sphi 0, %s36
      %s40 = sphi 0, %s39
      %s56 = sphi 0, %s40
      %s60 = sphi 0, %s60
      %s62 = sphi 0, %s60
      %s63 = sphi 0, %s62
      %s77 = sphi 0, %s63
      %s81 = sphi 0, %s81
      %s83 = sphi 0, %s81
      %s84 = sphi 0, %s83
      %s98 = sphi 0, %s84
      %s102 = sphi 0, %s102
      %s104 = sphi 0, %s102
      %s105 = sphi 0, %s104
      %s119 = sphi 0, %s105
      %s123 = sphi 0, %s123
      %s125 = sphi 0, %s123
      %s126 = sphi 0, %s125
      %s140 = sphi 0, %s126
      %s144 = sphi 0, %s144
      %s146 = sphi 0, %s144
      %s147 = sphi 0, %s146
      %s161 = sphi 0, %s147
      %s165 = sphi 0, %s165
      %s167 = sphi 0, %s165
      %s168 = sphi 0, %s167
      %s182 = sphi 0, %s168
      %s186 = sphi 0, %s186
      %s188 = sphi 0, %s186
      %s189 = sphi 0, %s188
      %s203 = sphi 0, %s189
      %s207 = sphi 0, %s207
      %s209 = sphi 0, %s207
      %s210 = sphi 0, %s209
      %s224 = sphi 0, %s210
      %s228 = sphi 0, %s228
      %s230 = sphi 0, %s228
      %s231 = sphi 0, %s230
      %s245 = sphi 0, %s231
      %s249 = sphi 0, %s249
      %s251 = sphi 0, %s249
      %s252 = sphi 0, %s251
      %s266 = sphi 0, %s252
      %s270 = sphi 0, %s270
      %s272 = sphi 0, %s270
      %s273 = sphi 0, %s272
      %s287 = sphi 0, %s273
      %s291 = sphi 0, %s291
      %s293 = sphi 0, %s291
      %s294 = sphi 0, %s293
      %s308 = sphi 0, %s294
      %s314 = sphi 0, %s316
      %s317 = sphi 0, %s314
      %s318 = sphi 0, %s317
      %s334 = sphi 0, %s318
    $region4: #{tpu_custom_call.1} parent=1 // loop_header_branch
      %29 = sbr.rel (%p27) target = $region8
    $region5: #{tpu_custom_call.1} parent=1 // loop_body
      %s31 = ssub.s32 %s26, 1
      %s32 = ssub.s32 %s26, 2
      %s33 = sadd.s32 %s26, 1
      %s34 = ssub.s32 %s26, %s33
      %p35 = scmp.eq.s32.totalorder %s34, 0
      %s37 = sadd.s32 %s36, 1
      %s38 = scalar_select %p35, %s36, %s37
      %p41 = pneg %p35
      %p42 = scmp.eq.s32.totalorder %s26, 2
      %p43 = por %p41, %p42
      %p44 = scmp.ne.s32.totalorder %s36, %s39
      %p45 = scmp.eq.s32.totalorder %s26, 0
      %p46 = por %p44, %p45
      %p47 = scmp.ne.s32.totalorder %s36, %s39
      %p48 = scmp.eq.s32.totalorder %s31, 2
      %p49 = por %p47, %p48
      %p50 = scmp.ne.s32.totalorder %s39, %s40
      %p51 = scmp.eq.s32.totalorder %s31, 0
      %p52 = por %p50, %p51
      %p53 = scmp.ne.s32.totalorder %s39, %s40
      %p54 = scmp.eq.s32.totalorder %s32, 2
      %p55 = por %p53, %p54
      %p57 = scmp.ne.s32.totalorder %s40, %s56
      %p58 = scmp.eq.s32.totalorder %s32, 0
      %p59 = por %p57, %p58
      %s61 = sadd.s32 %s60, 1
      %p64 = scmp.eq.s32.totalorder %s26, 2
      %p65 = scmp.ne.s32.totalorder %s60, %s62
      %p66 = scmp.eq.s32.totalorder %s26, 0
      %p67 = por %p65, %p66
      %p68 = scmp.ne.s32.totalorder %s60, %s62
      %p69 = scmp.eq.s32.totalorder %s31, 2
      %p70 = por %p68, %p69
      %p71 = scmp.ne.s32.totalorder %s62, %s63
      %p72 = scmp.eq.s32.totalorder %s31, 0
      %p73 = por %p71, %p72
      %p74 = scmp.ne.s32.totalorder %s62, %s63
      %p75 = scmp.eq.s32.totalorder %s32, 2
      %p76 = por %p74, %p75
      %p78 = scmp.ne.s32.totalorder %s63, %s77
      %p79 = scmp.eq.s32.totalorder %s32, 0
      %p80 = por %p78, %p79
      %s82 = sadd.s32 %s81, 1
      %p85 = scmp.eq.s32.totalorder %s26, 2
      %p86 = scmp.ne.s32.totalorder %s81, %s83
      %p87 = scmp.eq.s32.totalorder %s26, 0
      %p88 = por %p86, %p87
      %p89 = scmp.ne.s32.totalorder %s81, %s83
      %p90 = scmp.eq.s32.totalorder %s31, 2
      %p91 = por %p89, %p90
      %p92 = scmp.ne.s32.totalorder %s83, %s84
      %p93 = scmp.eq.s32.totalorder %s31, 0
      %p94 = por %p92, %p93
      %p95 = scmp.ne.s32.totalorder %s83, %s84
      %p96 = scmp.eq.s32.totalorder %s32, 2
      %p97 = por %p95, %p96
      %p99 = scmp.ne.s32.totalorder %s84, %s98
      %p100 = scmp.eq.s32.totalorder %s32, 0
      %p101 = por %p99, %p100
      %s103 = sadd.s32 %s102, 1
      %p106 = scmp.eq.s32.totalorder %s26, 2
      %p107 = scmp.ne.s32.totalorder %s102, %s104
      %p108 = scmp.eq.s32.totalorder %s26, 0
      %p109 = por %p107, %p108
      %p110 = scmp.ne.s32.totalorder %s102, %s104
      %p111 = scmp.eq.s32.totalorder %s31, 2
      %p112 = por %p110, %p111
      %p113 = scmp.ne.s32.totalorder %s104, %s105
      %p114 = scmp.eq.s32.totalorder %s31, 0
      %p115 = por %p113, %p114
      %p116 = scmp.ne.s32.totalorder %s104, %s105
      %p117 = scmp.eq.s32.totalorder %s32, 2
      %p118 = por %p116, %p117
      %p120 = scmp.ne.s32.totalorder %s105, %s119
      %p121 = scmp.eq.s32.totalorder %s32, 0
      %p122 = por %p120, %p121
      %s124 = sadd.s32 %s123, 1
      %p127 = scmp.eq.s32.totalorder %s26, 2
      %p128 = scmp.ne.s32.totalorder %s123, %s125
      %p129 = scmp.eq.s32.totalorder %s26, 0
      %p130 = por %p128, %p129
      %p131 = scmp.ne.s32.totalorder %s123, %s125
      %p132 = scmp.eq.s32.totalorder %s31, 2
      %p133 = por %p131, %p132
      %p134 = scmp.ne.s32.totalorder %s125, %s126
      %p135 = scmp.eq.s32.totalorder %s31, 0
      %p136 = por %p134, %p135
      %p137 = scmp.ne.s32.totalorder %s125, %s126
      %p138 = scmp.eq.s32.totalorder %s32, 2
      %p139 = por %p137, %p138
      %p141 = scmp.ne.s32.totalorder %s126, %s140
      %p142 = scmp.eq.s32.totalorder %s32, 0
      %p143 = por %p141, %p142
      %s145 = sadd.s32 %s144, 1
      %p148 = scmp.eq.s32.totalorder %s26, 2
      %p149 = scmp.ne.s32.totalorder %s144, %s146
      %p150 = scmp.eq.s32.totalorder %s26, 0
      %p151 = por %p149, %p150
      %p152 = scmp.ne.s32.totalorder %s144, %s146
      %p153 = scmp.eq.s32.totalorder %s31, 2
      %p154 = por %p152, %p153
      %p155 = scmp.ne.s32.totalorder %s146, %s147
      %p156 = scmp.eq.s32.totalorder %s31, 0
      %p157 = por %p155, %p156
      %p158 = scmp.ne.s32.totalorder %s146, %s147
      %p159 = scmp.eq.s32.totalorder %s32, 2
      %p160 = por %p158, %p159
      %p162 = scmp.ne.s32.totalorder %s147, %s161
      %p163 = scmp.eq.s32.totalorder %s32, 0
      %p164 = por %p162, %p163
      %s166 = sadd.s32 %s165, 1
      %p169 = scmp.eq.s32.totalorder %s26, 2
      %p170 = scmp.ne.s32.totalorder %s165, %s167
      %p171 = scmp.eq.s32.totalorder %s26, 0
      %p172 = por %p170, %p171
      %p173 = scmp.ne.s32.totalorder %s165, %s167
      %p174 = scmp.eq.s32.totalorder %s31, 2
      %p175 = por %p173, %p174
      %p176 = scmp.ne.s32.totalorder %s167, %s168
      %p177 = scmp.eq.s32.totalorder %s31, 0
      %p178 = por %p176, %p177
      %p179 = scmp.ne.s32.totalorder %s167, %s168
      %p180 = scmp.eq.s32.totalorder %s32, 2
      %p181 = por %p179, %p180
      %p183 = scmp.ne.s32.totalorder %s168, %s182
      %p184 = scmp.eq.s32.totalorder %s32, 0
      %p185 = por %p183, %p184
      %s187 = sadd.s32 %s186, 1
      %p190 = scmp.eq.s32.totalorder %s26, 2
      %p191 = scmp.ne.s32.totalorder %s186, %s188
      %p192 = scmp.eq.s32.totalorder %s26, 0
      %p193 = por %p191, %p192
      %p194 = scmp.ne.s32.totalorder %s186, %s188
      %p195 = scmp.eq.s32.totalorder %s31, 2
      %p196 = por %p194, %p195
      %p197 = scmp.ne.s32.totalorder %s188, %s189
      %p198 = scmp.eq.s32.totalorder %s31, 0
      %p199 = por %p197, %p198
      %p200 = scmp.ne.s32.totalorder %s188, %s189
      %p201 = scmp.eq.s32.totalorder %s32, 2
      %p202 = por %p200, %p201
      %p204 = scmp.ne.s32.totalorder %s189, %s203
      %p205 = scmp.eq.s32.totalorder %s32, 0
      %p206 = por %p204, %p205
      %s208 = sadd.s32 %s207, 1
      %p211 = scmp.eq.s32.totalorder %s26, 2
      %p212 = scmp.ne.s32.totalorder %s207, %s209
      %p213 = scmp.eq.s32.totalorder %s26, 0
      %p214 = por %p212, %p213
      %p215 = scmp.ne.s32.totalorder %s207, %s209
      %p216 = scmp.eq.s32.totalorder %s31, 2
      %p217 = por %p215, %p216
      %p218 = scmp.ne.s32.totalorder %s209, %s210
      %p219 = scmp.eq.s32.totalorder %s31, 0
      %p220 = por %p218, %p219
      %p221 = scmp.ne.s32.totalorder %s209, %s210
      %p222 = scmp.eq.s32.totalorder %s32, 2
      %p223 = por %p221, %p222
      %p225 = scmp.ne.s32.totalorder %s210, %s224
      %p226 = scmp.eq.s32.totalorder %s32, 0
      %p227 = por %p225, %p226
      %s229 = sadd.s32 %s228, 1
      %p232 = scmp.eq.s32.totalorder %s26, 2
      %p233 = scmp.ne.s32.totalorder %s228, %s230
      %p234 = scmp.eq.s32.totalorder %s26, 0
      %p235 = por %p233, %p234
      %p236 = scmp.ne.s32.totalorder %s228, %s230
      %p237 = scmp.eq.s32.totalorder %s31, 2
      %p238 = por %p236, %p237
      %p239 = scmp.ne.s32.totalorder %s230, %s231
      %p240 = scmp.eq.s32.totalorder %s31, 0
      %p241 = por %p239, %p240
      %p242 = scmp.ne.s32.totalorder %s230, %s231
      %p243 = scmp.eq.s32.totalorder %s32, 2
      %p244 = por %p242, %p243
      %p246 = scmp.ne.s32.totalorder %s231, %s245
      %p247 = scmp.eq.s32.totalorder %s32, 0
      %p248 = por %p246, %p247
      %s250 = sadd.s32 %s249, 1
      %p253 = scmp.eq.s32.totalorder %s26, 2
      %p254 = scmp.ne.s32.totalorder %s249, %s251
      %p255 = scmp.eq.s32.totalorder %s26, 0
      %p256 = por %p254, %p255
      %p257 = scmp.ne.s32.totalorder %s249, %s251
      %p258 = scmp.eq.s32.totalorder %s31, 2
      %p259 = por %p257, %p258
      %p260 = scmp.ne.s32.totalorder %s251, %s252
      %p261 = scmp.eq.s32.totalorder %s31, 0
      %p262 = por %p260, %p261
      %p263 = scmp.ne.s32.totalorder %s251, %s252
      %p264 = scmp.eq.s32.totalorder %s32, 2
      %p265 = por %p263, %p264
      %p267 = scmp.ne.s32.totalorder %s252, %s266
      %p268 = scmp.eq.s32.totalorder %s32, 0
      %p269 = por %p267, %p268
      %s271 = sadd.s32 %s270, 1
      %p274 = scmp.eq.s32.totalorder %s26, 2
      %p275 = scmp.ne.s32.totalorder %s270, %s272
      %p276 = scmp.eq.s32.totalorder %s26, 0
      %p277 = por %p275, %p276
      %p278 = scmp.ne.s32.totalorder %s270, %s272
      %p279 = scmp.eq.s32.totalorder %s31, 2
      %p280 = por %p278, %p279
      %p281 = scmp.ne.s32.totalorder %s272, %s273
      %p282 = scmp.eq.s32.totalorder %s31, 0
      %p283 = por %p281, %p282
      %p284 = scmp.ne.s32.totalorder %s272, %s273
      %p285 = scmp.eq.s32.totalorder %s32, 2
      %p286 = por %p284, %p285
      %p288 = scmp.ne.s32.totalorder %s273, %s287
      %p289 = scmp.eq.s32.totalorder %s32, 0
      %p290 = por %p288, %p289
      %s292 = sadd.s32 %s291, 1
      %p295 = scmp.eq.s32.totalorder %s26, 2
      %p296 = scmp.ne.s32.totalorder %s291, %s293
      %p297 = scmp.eq.s32.totalorder %s26, 0
      %p298 = por %p296, %p297
      %p299 = scmp.ne.s32.totalorder %s291, %s293
      %p300 = scmp.eq.s32.totalorder %s31, 2
      %p301 = por %p299, %p300
      %p302 = scmp.ne.s32.totalorder %s293, %s294
      %p303 = scmp.eq.s32.totalorder %s31, 0
      %p304 = por %p302, %p303
      %p305 = scmp.ne.s32.totalorder %s293, %s294
      %p306 = scmp.eq.s32.totalorder %s32, 2
      %p307 = por %p305, %p306
      %p309 = scmp.ne.s32.totalorder %s294, %s308
      %p310 = scmp.eq.s32.totalorder %s32, 0
      %p311 = por %p309, %p310
      %s312 = ssub.s32 %s26, %s33
      %p313 = scmp.eq.s32.totalorder %s312, 0
      %s315 = sadd.s32 %s314, 1
      %s316 = scalar_select %p313, %s314, %s315
      %p319 = pneg %p313
      %p320 = scmp.eq.s32.totalorder %s26, 2
      %p321 = por %p319, %p320
      %p322 = scmp.ne.s32.totalorder %s314, %s317
      %p323 = scmp.eq.s32.totalorder %s26, 0
      %p324 = por %p322, %p323
      %p325 = scmp.ne.s32.totalorder %s314, %s317
      %p326 = scmp.eq.s32.totalorder %s31, 2
      %p327 = por %p325, %p326
      %p328 = scmp.ne.s32.totalorder %s317, %s318
      %p329 = scmp.eq.s32.totalorder %s31, 0
      %p330 = por %p328, %p329
      %p331 = scmp.ne.s32.totalorder %s317, %s318
      %p332 = scmp.eq.s32.totalorder %s32, 2
      %p333 = por %p331, %p332
      %p335 = scmp.ne.s32.totalorder %s318, %s334
      %p336 = scmp.eq.s32.totalorder %s32, 0
      %p337 = por %p335, %p336
      %p338 = scmp.le.s32.totalorder 1, %s26
      %p339 = scmp.lt.s32.totalorder %s26, 4
      %p340 = pnand %p338, %p339
      %p341 = pneg %p340
      // Predicated region
      $region9: #{tpu_custom_call.1} parent=5 // pred_check
        _
      $region10: #{tpu_custom_call.1} parent=5 // pred_check_branch
        %343 = sbr.rel (%p340) target = $region12
      $region11: #{tpu_custom_call.1} parent=5 // pred_region
        %s344 = ssub.s32 %s26, 1
        // Predicated region
        $region13: #{tpu_custom_call.1} parent=11 // pred_check
          %p345 = pneg %p73
        $region14: #{tpu_custom_call.1} parent=11 // pred_check_branch
          %347 = sbr.rel (%p345) target = $region16
        $region15: #{tpu_custom_call.1} parent=11 // pred_region
          _
        $region16: #{tpu_custom_call.1} parent=11 // pred_fallthru
          _
        // Predicated region
        $region17: #{tpu_custom_call.1} parent=11 // pred_check
          %p348 = pneg %p94
        $region18: #{tpu_custom_call.1} parent=11 // pred_check_branch
          %350 = sbr.rel (%p348) target = $region20
        $region19: #{tpu_custom_call.1} parent=11 // pred_region
          _
        $region20: #{tpu_custom_call.1} parent=11 // pred_fallthru
          _
        // Predicated region
        $region21: #{tpu_custom_call.1} parent=11 // pred_check
          %p351 = pneg %p115
        $region22: #{tpu_custom_call.1} parent=11 // pred_check_branch
          %353 = sbr.rel (%p351) target = $region24
        $region23: #{tpu_custom_call.1} parent=11 // pred_region
          %355 = vsyncadd [#allocation3], 0
          %s356 = sshll.u32 %s3, 4
          %s357 = int_to_ptr.hbm [resolvable:$true] %s356
          %s358 = sshll.u32 [#allocation2], 4
          %s359 = int_to_ptr.vmem [resolvable:$true] %s358
          %364 = dma.hbm_to_vmem [thread:$0]  %s357, 2048, %s359, [#allocation3], 128, 128, 8
        $region24: #{tpu_custom_call.1} parent=11 // pred_fallthru
          _
        // Predicated region
        $region25: #{tpu_custom_call.1} parent=11 // pred_check
          %p365 = pneg %p136
        $region26: #{tpu_custom_call.1} parent=11 // pred_check_branch
          %367 = sbr.rel (%p365) target = $region28
        $region27: #{tpu_custom_call.1} parent=11 // pred_region
          _
        $region28: #{tpu_custom_call.1} parent=11 // pred_fallthru
          _
        // Predicated region
        $region29: #{tpu_custom_call.1} parent=11 // pred_check
          %p368 = pneg %p157
        $region30: #{tpu_custom_call.1} parent=11 // pred_check_branch
          %370 = sbr.rel (%p368) target = $region32
        $region31: #{tpu_custom_call.1} parent=11 // pred_region
          %372 = vsyncadd [#allocation6], 0
          %s373 = sshll.u32 %s5, 4
          %s374 = int_to_ptr.hbm [resolvable:$true] %s373
          %s375 = sshll.u32 [#allocation5], 4
          %s376 = int_to_ptr.vmem [resolvable:$true] %s375
          %381 = dma.hbm_to_vmem [thread:$0]  %s374, 4096, %s376, [#allocation6], 256, 256, 16
        $region32: #{tpu_custom_call.1} parent=11 // pred_fallthru
          _
        // Predicated region
        $region33: #{tpu_custom_call.1} parent=11 // pred_check
          %p382 = pneg %p178
        $region34: #{tpu_custom_call.1} parent=11 // pred_check_branch
          %384 = sbr.rel (%p382) target = $region36
        $region35: #{tpu_custom_call.1} parent=11 // pred_region
          %386 = vsyncadd [#allocation6], 0
          %s387 = sshll.u32 %s6, 4
          %s388 = int_to_ptr.hbm [resolvable:$true] %s387
          %s389 = sshll.u32 [#allocation7], 4
          %s390 = int_to_ptr.vmem [resolvable:$true] %s389
          %395 = dma.hbm_to_vmem [thread:$0]  %s388, 4096, %s390, [#allocation6], 128, 128, 8
        $region36: #{tpu_custom_call.1} parent=11 // pred_fallthru
          _
        // Predicated region
        $region37: #{tpu_custom_call.1} parent=11 // pred_check
          %p396 = pneg %p199
        $region38: #{tpu_custom_call.1} parent=11 // pred_check_branch
          %398 = sbr.rel (%p396) target = $region40
        $region39: #{tpu_custom_call.1} parent=11 // pred_region
          %400 = vsyncadd [#allocation9], 0
          %s401 = sshll.u32 %s7, 4
          %s402 = int_to_ptr.hbm [resolvable:$true] %s401
          %s403 = sshll.u32 [#allocation8], 4
          %s404 = int_to_ptr.vmem [resolvable:$true] %s403
          %409 = dma.hbm_to_vmem [thread:$0]  %s402, 4096, %s404, [#allocation9], 128, 128, 8
        $region40: #{tpu_custom_call.1} parent=11 // pred_fallthru
          _
        // Predicated region
        $region41: #{tpu_custom_call.1} parent=11 // pred_check
          %p410 = pneg %p220
        $region42: #{tpu_custom_call.1} parent=11 // pred_check_branch
          %412 = sbr.rel (%p410) target = $region44
        $region43: #{tpu_custom_call.1} parent=11 // pred_region
          _
        $region44: #{tpu_custom_call.1} parent=11 // pred_fallthru
          _
        // Predicated region
        $region45: #{tpu_custom_call.1} parent=11 // pred_check
          %p413 = pneg %p241
        $region46: #{tpu_custom_call.1} parent=11 // pred_check_branch
          %415 = sbr.rel (%p413) target = $region48
        $region47: #{tpu_custom_call.1} parent=11 // pred_region
          %417 = vsyncadd [#allocation9], 0
          %s418 = sshll.u32 %s9, 4
          %s419 = int_to_ptr.hbm [resolvable:$true] %s418
          %s420 = sshll.u32 [#allocation10], 4
          %s421 = int_to_ptr.vmem [resolvable:$true] %s420
          %426 = dma.hbm_to_vmem [thread:$0]  %s419, 20480, %s421, [#allocation9], 128, 128, 8
        $region48: #{tpu_custom_call.1} parent=11 // pred_fallthru
          _
        // Predicated region
        $region49: #{tpu_custom_call.1} parent=11 // pred_check
          %p427 = pneg %p262
        $region50: #{tpu_custom_call.1} parent=11 // pred_check_branch
          %429 = sbr.rel (%p427) target = $region52
        $region51: #{tpu_custom_call.1} parent=11 // pred_region
          _
        $region52: #{tpu_custom_call.1} parent=11 // pred_fallthru
          _
        // Predicated region
        $region53: #{tpu_custom_call.1} parent=11 // pred_check
          %p430 = pneg %p283
        $region54: #{tpu_custom_call.1} parent=11 // pred_check_branch
          %432 = sbr.rel (%p430) target = $region56
        $region55: #{tpu_custom_call.1} parent=11 // pred_region
          %434 = vsyncadd [#allocation12], 0
          %s435 = sshll.u32 %s11, 4
          %s436 = int_to_ptr.hbm [resolvable:$true] %s435
          %s437 = sshll.u32 [#allocation11], 4
          %s438 = int_to_ptr.vmem [resolvable:$true] %s437
          %443 = dma.hbm_to_vmem [thread:$0]  %s436, 8192, %s438, [#allocation12], 128, 128, 8
        $region56: #{tpu_custom_call.1} parent=11 // pred_fallthru
          _
        // Predicated region
        $region57: #{tpu_custom_call.1} parent=11 // pred_check
          %p444 = pneg %p304
        $region58: #{tpu_custom_call.1} parent=11 // pred_check_branch
          %446 = sbr.rel (%p444) target = $region60
        $region59: #{tpu_custom_call.1} parent=11 // pred_region
          _
        $region60: #{tpu_custom_call.1} parent=11 // pred_fallthru
          _
      $region12: #{tpu_custom_call.1} parent=5 // pred_fallthru
        _
      %p447 = scmp.lt.s32.totalorder %s26, 3
      // Predicated region
      $region61: #{tpu_custom_call.1} parent=5 // pred_check
        %p448 = pneg %p447
      $region62: #{tpu_custom_call.1} parent=5 // pred_check_branch
        %450 = sbr.rel (%p448) target = $region64
      $region63: #{tpu_custom_call.1} parent=5 // pred_region
        // Predicated region
        $region65: #{tpu_custom_call.1} parent=63 // pred_check
          %p451 = pneg %p46
        $region66: #{tpu_custom_call.1} parent=63 // pred_check_branch
          %453 = sbr.rel (%p451) target = $region68
        $region67: #{tpu_custom_call.1} parent=63 // pred_region
          %s454 = smul.u32 2, %s26
          %p455 = scmp.lt.s32.totalorder %s454, 5
          %s456 = scalar_select %p455, %s454, 5
          %s457 = smul.addr %s456, 8
          %s458 = scalar_lea.vmem %s0, %s457
          %s459 = smul.u32 2, %s26
        $region68: #{tpu_custom_call.1} parent=63 // pred_fallthru
          _
      $region64: #{tpu_custom_call.1} parent=5 // pred_fallthru
        _
      %p460 = scmp.le.s32.totalorder 1, %s26
      %p461 = scmp.lt.s32.totalorder %s26, 4
      %p462 = pnand %p460, %p461
      %p463 = pneg %p462
      // Predicated region
      $region69: #{tpu_custom_call.1} parent=5 // pred_check
        _
      $region70: #{tpu_custom_call.1} parent=5 // pred_check_branch
        %465 = sbr.rel (%p462) target = $region72
      $region71: #{tpu_custom_call.1} parent=5 // pred_region
        %s466 = ssub.s32 %s26, 1
        // Predicated region
        $region73: #{tpu_custom_call.1} parent=71 // pred_check
          %p467 = pneg %p115
        $region74: #{tpu_custom_call.1} parent=71 // pred_check_branch
          %469 = sbr.rel (%p467) target = $region76
        $region75: #{tpu_custom_call.1} parent=71 // pred_region
          %471 = dma.done [#allocation3], 2048
        $region76: #{tpu_custom_call.1} parent=71 // pred_fallthru
          _
        // Predicated region
        $region77: #{tpu_custom_call.1} parent=71 // pred_check
          %p472 = pneg %p157
        $region78: #{tpu_custom_call.1} parent=71 // pred_check_branch
          %474 = sbr.rel (%p472) target = $region80
        $region79: #{tpu_custom_call.1} parent=71 // pred_region
          %476 = dma.done [#allocation6], 4096
        $region80: #{tpu_custom_call.1} parent=71 // pred_fallthru
          _
        // Predicated region
        $region81: #{tpu_custom_call.1} parent=71 // pred_check
          %p477 = pneg %p178
        $region82: #{tpu_custom_call.1} parent=71 // pred_check_branch
          %479 = sbr.rel (%p477) target = $region84
        $region83: #{tpu_custom_call.1} parent=71 // pred_region
          %481 = dma.done [#allocation6], 4096
        $region84: #{tpu_custom_call.1} parent=71 // pred_fallthru
          _
        // Predicated region
        $region85: #{tpu_custom_call.1} parent=71 // pred_check
          %p482 = pneg %p199
        $region86: #{tpu_custom_call.1} parent=71 // pred_check_branch
          %484 = sbr.rel (%p482) target = $region88
        $region87: #{tpu_custom_call.1} parent=71 // pred_region
          %486 = dma.done [#allocation9], 4096
        $region88: #{tpu_custom_call.1} parent=71 // pred_fallthru
          _
        // Predicated region
        $region89: #{tpu_custom_call.1} parent=71 // pred_check
          %p487 = pneg %p241
        $region90: #{tpu_custom_call.1} parent=71 // pred_check_branch
          %489 = sbr.rel (%p487) target = $region92
        $region91: #{tpu_custom_call.1} parent=71 // pred_region
          %491 = dma.done [#allocation9], 20480
        $region92: #{tpu_custom_call.1} parent=71 // pred_fallthru
          _
        // Predicated region
        $region93: #{tpu_custom_call.1} parent=71 // pred_check
          %p492 = pneg %p283
        $region94: #{tpu_custom_call.1} parent=71 // pred_check_branch
          %494 = sbr.rel (%p492) target = $region96
        $region95: #{tpu_custom_call.1} parent=71 // pred_region
          %496 = dma.done [#allocation12], 8192
        $region96: #{tpu_custom_call.1} parent=71 // pred_fallthru
          _
        %s497 = smul.u32 2, %s31
        %p498 = scmp.lt.s32.totalorder %s497, 5
        %s499 = scalar_select %p498, %s497, 5
        %s500 = smul.addr %s499, 8
        %s501 = scalar_lea.vmem %s0, %s500
        %p502 = pneg %p52
        %p503 = pneg %p49
        %p504 = pneg %p73
        %p505 = pneg %p70
        %p506 = pneg %p94
        %p507 = pneg %p91
        %p508 = pneg %p115
        %p509 = pneg %p112
        %p510 = pneg %p136
        %p511 = pneg %p133
        %p512 = pneg %p157
        %p513 = pneg %p154
        %p514 = pneg %p178
        %p515 = pneg %p175
        %p516 = pneg %p199
        %p517 = pneg %p196
        %p518 = pneg %p220
        %p519 = pneg %p217
        %p520 = pneg %p241
        %p521 = pneg %p238
        %p522 = pneg %p262
        %p523 = pneg %p259
        %p524 = pneg %p283
        %p525 = pneg %p280
        %p526 = pneg %p304
        %p527 = pneg %p301
        %p528 = pneg %p330
        %p529 = pneg %p327
        %s530 = sand.u32 %s317, 1
        %s531 = scalar_lea.sflag [#allocation4], %s530
        %s532 = sand.u32 %s317, 1
        %s533 = smul.addr %s532, 16
        %s534 = scalar_lea.vmem [#allocation13], %s533
        %s535 = smul.u32 2, %s31
        %p536 = scmp.lt.s32.totalorder %s535, 5
        %s537 = scalar_select %p536, %s535, 5
        %s538 = smul.addr %s537, 8
        %s539 = scalar_lea.vmem %s0, %s538
        %s540 = smul.u32 2, %s31
        %s541 = smul.u32 2, %s31
        %v542 = vld [vmem:[%s539] sm:$0xff]
        %v543 = vld [vmem:[%s539 + $0x8] sm:$0xff]
        %v544 = vld [vmem:[%s1] sm:$0x7]
        %v545 = vld [vmem:[%s2] sm:$0x1]
        %v547 = vperm.slane %v545, 0
        %vm549 = vcmask 23552
        %v551 = vsel %vm549, %v542, 0
        %v554 = vsel %vm549, %v543, 0
        %vm556 = vcmask 1042432
        %v558 = vsel %vm556, %v544, 0
        %560 = vmatpush.msra.mxu0 0.0
        %561 = vmatpush.msra.mxu0 0.0
        %562 = vmatpush.msra.mxu0 0.0
        %563 = vmatpush.msra.mxu0 0.0
        %564 = vmatpush.msra.mxu0 0.0
        %565 = vmatpush.msra.mxu0 0.0
        %566 = vmatpush.msra.mxu0 0.0
        %567 = vmatpush.msra.mxu0 0.0
        %568 = vmatpush.msra.mxu0 0.0
        %569 = vmatpush.msra.mxu0 0.0
        %570 = vmatpush.msra.mxu0 0.0
        %571 = vmatpush.msra.mxu0 0.0
        %572 = vmatpush.msra.mxu0 0.0
        %573 = vmatpush.msra.mxu0 0.0
        %574 = vmatpush.msra.mxu0 0.0
        %575 = vmatpush.msra.mxu0 %v558
        %576 = vmatmul.f32.gmra.mxu0 %v551
        %v577 = vpop.f32.mrf.mxu0
        %v578 = vadd.f32 %v547, %v577
        %579 = vmatmul.f32.gmra.mxu0 %v554
        %v580 = vpop.f32.mrf.mxu0
        %v581 = vadd.f32 %v547, %v580
        %582 = vdwg.mxu0
        %v583 = vtanh.pop %v578
        %v584 = vtanh.pop %v581
        %v585 = vld [vmem:[#allocation2] sm:$0xff]
        %v586 = vld [vmem:[#allocation2 + $0x8] sm:$0xff]
        %v587 = vld [vmem:[#allocation2 + $0x10] sm:$0xff]
        %v588 = vld [vmem:[#allocation2 + $0x18] sm:$0xff]
        %v589 = vld [vmem:[#allocation2 + $0x20] sm:$0xff]
        %v590 = vld [vmem:[#allocation2 + $0x28] sm:$0xff]
        %v591 = vld [vmem:[#allocation2 + $0x30] sm:$0xff]
        %v592 = vld [vmem:[#allocation2 + $0x38] sm:$0xff]
        %v593 = vld [vmem:[#allocation2 + $0x40] sm:$0xff]
        %v594 = vld [vmem:[#allocation2 + $0x48] sm:$0xff]
        %v595 = vld [vmem:[#allocation2 + $0x50] sm:$0xff]
        %v596 = vld [vmem:[#allocation2 + $0x58] sm:$0xff]
        %v597 = vld [vmem:[#allocation2 + $0x60] sm:$0xff]
        %v598 = vld [vmem:[#allocation2 + $0x68] sm:$0xff]
        %v599 = vld [vmem:[#allocation2 + $0x70] sm:$0xff]
        %v600 = vld [vmem:[#allocation2 + $0x78] sm:$0xff]
        %v601 = vld [vmem:[%s4] sm:$0x1]
        %v603 = vperm.slane %v601, 0
        %605 = vmatpush.msra.mxu0 %v600
        %606 = vmatpush.msra.mxu0 %v599
        %607 = vmatpush.msra.mxu0 %v598
        %608 = vmatpush.msra.mxu0 %v597
        %609 = vmatpush.msra.mxu0 %v596
        %610 = vmatpush.msra.mxu0 %v595
        %611 = vmatpush.msra.mxu0 %v594
        %612 = vmatpush.msra.mxu0 %v593
        %613 = vmatpush.msra.mxu0 %v592
        %614 = vmatpush.msra.mxu0 %v591
        %615 = vmatpush.msra.mxu0 %v590
        %616 = vmatpush.msra.mxu0 %v589
        %617 = vmatpush.msra.mxu0 %v588
        %618 = vmatpush.msra.mxu0 %v587
        %619 = vmatpush.msra.mxu0 %v586
        %620 = vmatpush.msra.mxu0 %v585
        %621 = vmatmul.f32.gmra.mxu0 %v583
        %v622 = vpop.f32.mrf.mxu0
        %v623 = vadd.f32 %v603, %v622
        %624 = vmatmul.f32.gmra.mxu0 %v584
        %v625 = vpop.f32.mrf.mxu0
        %v626 = vadd.f32 %v603, %v625
        %627 = vdwg.mxu0
        %v628 = vtanh.pop %v623
        %v629 = vtanh.pop %v626
        %v630 = vld [vmem:[#allocation5] sm:$0xff]
        %v631 = vld [vmem:[#allocation5 + $0x8] sm:$0xff]
        %v632 = vld [vmem:[#allocation5 + $0x10] sm:$0xff]
        %v633 = vld [vmem:[#allocation5 + $0x18] sm:$0xff]
        %v634 = vld [vmem:[#allocation5 + $0x20] sm:$0xff]
        %v635 = vld [vmem:[#allocation5 + $0x28] sm:$0xff]
        %v636 = vld [vmem:[#allocation5 + $0x30] sm:$0xff]
        %v637 = vld [vmem:[#allocation5 + $0x38] sm:$0xff]
        %v638 = vld [vmem:[#allocation5 + $0x40] sm:$0xff]
        %v639 = vld [vmem:[#allocation5 + $0x48] sm:$0xff]
        %v640 = vld [vmem:[#allocation5 + $0x50] sm:$0xff]
        %v641 = vld [vmem:[#allocation5 + $0x58] sm:$0xff]
        %v642 = vld [vmem:[#allocation5 + $0x60] sm:$0xff]
        %v643 = vld [vmem:[#allocation5 + $0x68] sm:$0xff]
        %v644 = vld [vmem:[#allocation5 + $0x70] sm:$0xff]
        %v645 = vld [vmem:[#allocation5 + $0x78] sm:$0xff]
        %v646 = vld [vmem:[#allocation5 + $0x80] sm:$0xff]
        %v647 = vld [vmem:[#allocation5 + $0x88] sm:$0xff]
        %v648 = vld [vmem:[#allocation5 + $0x90] sm:$0xff]
        %v649 = vld [vmem:[#allocation5 + $0x98] sm:$0xff]
        %v650 = vld [vmem:[#allocation5 + $0xa0] sm:$0xff]
        %v651 = vld [vmem:[#allocation5 + $0xa8] sm:$0xff]
        %v652 = vld [vmem:[#allocation5 + $0xb0] sm:$0xff]
        %v653 = vld [vmem:[#allocation5 + $0xb8] sm:$0xff]
        %v654 = vld [vmem:[#allocation5 + $0xc0] sm:$0xff]
        %v655 = vld [vmem:[#allocation5 + $0xc8] sm:$0xff]
        %v656 = vld [vmem:[#allocation5 + $0xd0] sm:$0xff]
        %v657 = vld [vmem:[#allocation5 + $0xd8] sm:$0xff]
        %v658 = vld [vmem:[#allocation5 + $0xe0] sm:$0xff]
        %v659 = vld [vmem:[#allocation5 + $0xe8] sm:$0xff]
        %v660 = vld [vmem:[#allocation5 + $0xf0] sm:$0xff]
        %v661 = vld [vmem:[#allocation5 + $0xf8] sm:$0xff]
        %662 = vmatpush.msra.mxu0 %v660
        %663 = vmatpush.msra.mxu0 %v658
        %664 = vmatpush.msra.mxu0 %v656
        %665 = vmatpush.msra.mxu0 %v654
        %666 = vmatpush.msra.mxu0 %v652
        %667 = vmatpush.msra.mxu0 %v650
        %668 = vmatpush.msra.mxu0 %v648
        %669 = vmatpush.msra.mxu0 %v646
        %670 = vmatpush.msra.mxu0 %v644
        %671 = vmatpush.msra.mxu0 %v642
        %672 = vmatpush.msra.mxu0 %v640
        %673 = vmatpush.msra.mxu0 %v638
        %674 = vmatpush.msra.mxu0 %v636
        %675 = vmatpush.msra.mxu0 %v634
        %676 = vmatpush.msra.mxu0 %v632
        %677 = vmatpush.msra.mxu0 %v630
        %678 = vmatmul.f32.gmra.mxu0 %v628
        %v679 = vpop.f32.mrf.mxu0
        %v680 = vadd.f32 0.0, %v679
        %681 = vmatmul.f32.gmra.mxu0 %v629
        %v682 = vpop.f32.mrf.mxu0
        %v683 = vadd.f32 0.0, %v682
        %684 = vdwg.mxu0
        %685 = vmatpush.msra.mxu0 %v661
        %686 = vmatpush.msra.mxu0 %v659
        %687 = vmatpush.msra.mxu0 %v657
        %688 = vmatpush.msra.mxu0 %v655
        %689 = vmatpush.msra.mxu0 %v653
        %690 = vmatpush.msra.mxu0 %v651
        %691 = vmatpush.msra.mxu0 %v649
        %692 = vmatpush.msra.mxu0 %v647
        %693 = vmatpush.msra.mxu0 %v645
        %694 = vmatpush.msra.mxu0 %v643
        %695 = vmatpush.msra.mxu0 %v641
        %696 = vmatpush.msra.mxu0 %v639
        %697 = vmatpush.msra.mxu0 %v637
        %698 = vmatpush.msra.mxu0 %v635
        %699 = vmatpush.msra.mxu0 %v633
        %700 = vmatpush.msra.mxu0 %v631
        %701 = vmatmul.f32.gmra.mxu0 %v628
        %v702 = vpop.f32.mrf.mxu0
        %v703 = vadd.f32 0.0, %v702
        %704 = vmatmul.f32.gmra.mxu0 %v629
        %v705 = vpop.f32.mrf.mxu0
        %v706 = vadd.f32 0.0, %v705
        %707 = vdwg.mxu0
        %v708 = vmul.f32 %v680, 6.2831855
        %v709 = vmul.f32 %v703, 6.2831855
        %v710 = vmul.f32 %v683, 6.2831855
        %v711 = vmul.f32 %v706, 6.2831855
        %v712 = vand.u32 2147483647, %v708
        %vm713 = vcmp.le.f32.partialorder %v712, 0.7853982
        %vm714 = vcmp.lt.s32.totalorder %v708, 0
        %v715 = vand.u32 %v708, 2139095040
        %v716 = vshrl.u32 %v715, 23
        %v717 = vsub.s32 %v716, 127
        %v718 = vand.u32 2147483647, %v708
        %v719 = vand.u32 %v718, 8388607
        %v720 = vor.u32 %v719, 8388608
        %v721 = vsub.s32 0, %v720
        %v722 = vadd.s32 %v717, 1
        %vm723 = vcmp.gt.s32.totalorder %v722, 0
        %v724 = vsel %vm723, %v722, 0
        %v725 = vshrl.u32 %v724, 5
        %v726 = vand.u32 %v724, 31
        %v727 = vsub.s32 32, %v726
        %v728 = vshrl.u32 683565275, %v727
        %v729 = vshll.u32 683565275, %v726
        %v730 = vshrl.u32 2475754826, %v727
        %v731 = vor.u32 %v729, %v730
        %v732 = vshll.u32 2475754826, %v726
        %v733 = vshrl.u32 2131351028, %v727
        %v734 = vor.u32 %v732, %v733
        %v735 = vshll.u32 2131351028, %v726
        %v736 = vshrl.u32 2102212464, %v727
        %v737 = vor.u32 %v735, %v736
        %v738 = vshll.u32 2102212464, %v726
        %v739 = vshrl.u32 920167782, %v727
        %v740 = vor.u32 %v738, %v739
        %v741 = vshll.u32 920167782, %v726
        %v742 = vshrl.u32 1326507024, %v727
        %v743 = vor.u32 %v741, %v742
        %vm744 = vcmp.lt.s32.totalorder %v725, 1
        %vm745 = vcmp.lt.s32.totalorder %v725, 2
        %vm746 = vcmp.lt.s32.totalorder %v725, 3
        %vm747 = vcmp.lt.s32.totalorder %v725, 4
        %v748 = vsel %vm744, %v728, %v731
        %v749 = vsel %vm747, %v737, 2102212464
        %v750 = vsel %vm746, %v734, %v749
        %v751 = vsel %vm745, %v748, %v750
        %v752 = vsel %vm744, %v731, %v734
        %v753 = vsel %vm747, %v740, 920167782
        %v754 = vsel %vm746, %v737, %v753
        %v755 = vsel %vm745, %v752, %v754
        %v756 = vsel %vm744, %v734, %v737
        %v757 = vsel %vm747, %v743, 1326507024
        %v758 = vsel %vm746, %v740, %v757
        %v759 = vsel %vm745, %v756, %v758
        %v760 = vshll.u32 %v720, 8
        %v761 = vand.u32 %v760, 65535
        %v762 = vshrl.u32 %v760, 16
        %v763 = vand.u32 %v759, 65535
        %v764 = vshrl.u32 %v759, 16
        %v765 = vmul.u32 %v761, %v763
        %v766 = vmul.u32 %v761, %v764
        %v767 = vmul.u32 %v762, %v763
        %v768 = vmul.u32 %v762, %v764
        %v769 = vshll.u32 %v766, 16
        %v770 = vshrl.u32 %v766, 16
        %v771 = vshll.u32 %v767, 16
        %v772 = vshrl.u32 %v767, 16
        %vm773 = vc.u32 %v765, %v769
        %v774 = vsel %vm773, 1, 0
        %v775 = vadd.s32 %v765, %v769
        %v776 = vadd.s32 %v768, %v774
        %vm777 = vc.u32 %v775, %v771
        %v778 = vsel %vm777, 1, 0
        %v779 = vadd.s32 %v775, %v771
        %v780 = vadd.s32 %v776, %v778
        %v781 = vadd.s32 %v780, %v770
        %v782 = vadd.s32 %v781, %v772
        %v783 = vand.u32 %v760, 65535
        %v784 = vshrl.u32 %v760, 16
        %v785 = vand.u32 %v755, 65535
        %v786 = vshrl.u32 %v755, 16
        %v787 = vmul.u32 %v783, %v785
        %v788 = vmul.u32 %v783, %v786
        %v789 = vmul.u32 %v784, %v785
        %v790 = vmul.u32 %v784, %v786
        %v791 = vshll.u32 %v788, 16
        %v792 = vshrl.u32 %v788, 16
        %v793 = vshll.u32 %v789, 16
        %v794 = vshrl.u32 %v789, 16
        %vm795 = vc.u32 %v787, %v791
        %v796 = vsel %vm795, 1, 0
        %v797 = vadd.s32 %v787, %v791
        %v798 = vadd.s32 %v790, %v796
        %vm799 = vc.u32 %v797, %v793
        %v800 = vsel %vm799, 1, 0
        %v801 = vadd.s32 %v797, %v793
        %v802 = vadd.s32 %v798, %v800
        %v803 = vadd.s32 %v802, %v792
        %v804 = vadd.s32 %v803, %v794
        %v805 = vmul.u32 %v760, %v751
        %v806 = vadd.s32 %v782, %v801
        %vm807 = vc.u32 %v782, %v801
        %v808 = vadd.s32 %v804, 1
        %v809 = vsel %vm807, %v808, %v804
        %v810 = vadd.s32 %v805, %v809
        %v811 = vadd.s32 %v810, 536870912
        %v812 = vshrl.u32 %v811, 30
        %v813 = vshll.u32 %v812, 30
        %v814 = vsub.s32 %v810, %v813
        %vm815 = vcmp.lt.s32.totalorder %v814, 0
        %v816 = vsub.s32 0, %v814
        %v817 = vsel %vm815, %v816, %v814
        %v818 = vclz %v817
        %v819 = vsub.s32 %v818, 2
        %vm820 = vcmp.gt.s32.totalorder 0, %v819
        %v821 = vsel %vm820, 0, %v819
        %v822 = vsub.s32 32, %v821
        %v823 = vshll.u32 %v814, %v821
        %v824 = vshrl.u32 %v806, %v822
        %v825 = vor.u32 %v823, %v824
        %v826 = vsub.s32 4294967266, %v821
        %v827 = vadd.s32 %v826, 127
        %v828 = vshll.u32 %v827, 23
        %v829 = vor.u32 4788187, %v828
        %v830 = vand.u32 2147483647, %v829
        %v832 = vcvt.s32.f32 %v825
        %v833 = vmul.f32 %v832, %v830
        %v834 = vxor.u32 %v833, 2147483648
        %v835 = vsel %vm714, %v834, %v833
        %v836 = vsub.s32 4, %v812
        %v837 = vsel %vm714, %v836, %v812
        %v838 = vsel %vm713, %v708, %v835
        %v839 = vsel %vm713, 0, %v837
        %v840 = vmul.f32 %v838, %v838
        %v841 = vmul.f32 %v840, -0.001358992
        %v842 = vadd.f32 %v841, 0.041655596
        %v843 = vmul.f32 %v840, %v842
        %v844 = vadd.f32 %v843, -0.4999988
        %v845 = vmul.f32 %v840, %v844
        %v846 = vadd.f32 1.0, %v845
        %v847 = vmul.f32 %v838, %v838
        %v848 = vmul.f32 %v847, -0.00019511016
        %v849 = vadd.f32 %v848, 0.008332121
        %v850 = vmul.f32 %v847, %v849
        %v851 = vadd.f32 %v850, -0.16666654
        %v852 = vmul.f32 %v847, %v851
        %v853 = vadd.f32 %v852, 1.0
        %v854 = vmul.f32 %v853, %v838
        %vm855 = vweird.f32 %v708
        %v856 = vand.u32 %v839, 3
        %vm857 = vcmp.lt.s32.totalorder %v856, 2
        %vm858 = vcmp.eq.s32.totalorder %v856, 0
        %v859 = vxor.u32 %v854, 2147483648
        %v860 = vsel %vm858, %v846, %v859
        %vm861 = vcmp.eq.s32.totalorder %v856, 2
        %v862 = vxor.u32 %v846, 2147483648
        %v863 = vsel %vm861, %v862, %v854
        %v864 = vsel %vm857, %v860, %v863
        %v865 = vsel %vm855, nan, %v864
        %v866 = vand.u32 2147483647, %v709
        %vm867 = vcmp.le.f32.partialorder %v866, 0.7853982
        %vm868 = vcmp.lt.s32.totalorder %v709, 0
        %v869 = vand.u32 %v709, 2139095040
        %v870 = vshrl.u32 %v869, 23
        %v871 = vsub.s32 %v870, 127
        %v872 = vand.u32 2147483647, %v709
        %v873 = vand.u32 %v872, 8388607
        %v874 = vor.u32 %v873, 8388608
        %v875 = vsub.s32 0, %v874
        %v876 = vadd.s32 %v871, 1
        %vm877 = vcmp.gt.s32.totalorder %v876, 0
        %v878 = vsel %vm877, %v876, 0
        %v879 = vshrl.u32 %v878, 5
        %v880 = vand.u32 %v878, 31
        %v881 = vsub.s32 32, %v880
        %v882 = vshrl.u32 683565275, %v881
        %v883 = vshll.u32 683565275, %v880
        %v884 = vshrl.u32 2475754826, %v881
        %v885 = vor.u32 %v883, %v884
        %v886 = vshll.u32 2475754826, %v880
        %v887 = vshrl.u32 2131351028, %v881
        %v888 = vor.u32 %v886, %v887
        %v889 = vshll.u32 2131351028, %v880
        %v890 = vshrl.u32 2102212464, %v881
        %v891 = vor.u32 %v889, %v890
        %v892 = vshll.u32 2102212464, %v880
        %v893 = vshrl.u32 920167782, %v881
        %v894 = vor.u32 %v892, %v893
        %v895 = vshll.u32 920167782, %v880
        %v896 = vshrl.u32 1326507024, %v881
        %v897 = vor.u32 %v895, %v896
        %vm898 = vcmp.lt.s32.totalorder %v879, 1
        %vm899 = vcmp.lt.s32.totalorder %v879, 2
        %vm900 = vcmp.lt.s32.totalorder %v879, 3
        %vm901 = vcmp.lt.s32.totalorder %v879, 4
        %v902 = vsel %vm898, %v882, %v885
        %v903 = vsel %vm901, %v891, 2102212464
        %v904 = vsel %vm900, %v888, %v903
        %v905 = vsel %vm899, %v902, %v904
        %v906 = vsel %vm898, %v885, %v888
        %v907 = vsel %vm901, %v894, 920167782
        %v908 = vsel %vm900, %v891, %v907
        %v909 = vsel %vm899, %v906, %v908
        %v910 = vsel %vm898, %v888, %v891
        %v911 = vsel %vm901, %v897, 1326507024
        %v912 = vsel %vm900, %v894, %v911
        %v913 = vsel %vm899, %v910, %v912
        %v914 = vshll.u32 %v874, 8
        %v915 = vand.u32 %v914, 65535
        %v916 = vshrl.u32 %v914, 16
        %v917 = vand.u32 %v913, 65535
        %v918 = vshrl.u32 %v913, 16
        %v919 = vmul.u32 %v915, %v917
        %v920 = vmul.u32 %v915, %v918
        %v921 = vmul.u32 %v916, %v917
        %v922 = vmul.u32 %v916, %v918
        %v923 = vshll.u32 %v920, 16
        %v924 = vshrl.u32 %v920, 16
        %v925 = vshll.u32 %v921, 16
        %v926 = vshrl.u32 %v921, 16
        %vm927 = vc.u32 %v919, %v923
        %v928 = vsel %vm927, 1, 0
        %v929 = vadd.s32 %v919, %v923
        %v930 = vadd.s32 %v922, %v928
        %vm931 = vc.u32 %v929, %v925
        %v932 = vsel %vm931, 1, 0
        %v933 = vadd.s32 %v929, %v925
        %v934 = vadd.s32 %v930, %v932
        %v935 = vadd.s32 %v934, %v924
        %v936 = vadd.s32 %v935, %v926
        %v937 = vand.u32 %v914, 65535
        %v938 = vshrl.u32 %v914, 16
        %v939 = vand.u32 %v909, 65535
        %v940 = vshrl.u32 %v909, 16
        %v941 = vmul.u32 %v937, %v939
        %v942 = vmul.u32 %v937, %v940
        %v943 = vmul.u32 %v938, %v939
        %v944 = vmul.u32 %v938, %v940
        %v945 = vshll.u32 %v942, 16
        %v946 = vshrl.u32 %v942, 16
        %v947 = vshll.u32 %v943, 16
        %v948 = vshrl.u32 %v943, 16
        %vm949 = vc.u32 %v941, %v945
        %v950 = vsel %vm949, 1, 0
        %v951 = vadd.s32 %v941, %v945
        %v952 = vadd.s32 %v944, %v950
        %vm953 = vc.u32 %v951, %v947
        %v954 = vsel %vm953, 1, 0
        %v955 = vadd.s32 %v951, %v947
        %v956 = vadd.s32 %v952, %v954
        %v957 = vadd.s32 %v956, %v946
        %v958 = vadd.s32 %v957, %v948
        %v959 = vmul.u32 %v914, %v905
        %v960 = vadd.s32 %v936, %v955
        %vm961 = vc.u32 %v936, %v955
        %v962 = vadd.s32 %v958, 1
        %v963 = vsel %vm961, %v962, %v958
        %v964 = vadd.s32 %v959, %v963
        %v965 = vadd.s32 %v964, 536870912
        %v966 = vshrl.u32 %v965, 30
        %v967 = vshll.u32 %v966, 30
        %v968 = vsub.s32 %v964, %v967
        %vm969 = vcmp.lt.s32.totalorder %v968, 0
        %v970 = vsub.s32 0, %v968
        %v971 = vsel %vm969, %v970, %v968
        %v972 = vclz %v971
        %v973 = vsub.s32 %v972, 2
        %vm974 = vcmp.gt.s32.totalorder 0, %v973
        %v975 = vsel %vm974, 0, %v973
        %v976 = vsub.s32 32, %v975
        %v977 = vshll.u32 %v968, %v975
        %v978 = vshrl.u32 %v960, %v976
        %v979 = vor.u32 %v977, %v978
        %v980 = vsub.s32 4294967266, %v975
        %v981 = vadd.s32 %v980, 127
        %v982 = vshll.u32 %v981, 23
        %v983 = vor.u32 4788187, %v982
        %v984 = vand.u32 2147483647, %v983
        %v986 = vcvt.s32.f32 %v979
        %v987 = vmul.f32 %v986, %v984
        %v988 = vxor.u32 %v987, 2147483648
        %v989 = vsel %vm868, %v988, %v987
        %v990 = vsub.s32 4, %v966
        %v991 = vsel %vm868, %v990, %v966
        %v992 = vsel %vm867, %v709, %v989
        %v993 = vsel %vm867, 0, %v991
        %v994 = vmul.f32 %v992, %v992
        %v995 = vmul.f32 %v994, -0.001358992
        %v996 = vadd.f32 %v995, 0.041655596
        %v997 = vmul.f32 %v994, %v996
        %v998 = vadd.f32 %v997, -0.4999988
        %v999 = vmul.f32 %v994, %v998
        %v1000 = vadd.f32 1.0, %v999
        %v1001 = vmul.f32 %v992, %v992
        %v1002 = vmul.f32 %v1001, -0.00019511016
        %v1003 = vadd.f32 %v1002, 0.008332121
        %v1004 = vmul.f32 %v1001, %v1003
        %v1005 = vadd.f32 %v1004, -0.16666654
        %v1006 = vmul.f32 %v1001, %v1005
        %v1007 = vadd.f32 %v1006, 1.0
        %v1008 = vmul.f32 %v1007, %v992
        %vm1009 = vweird.f32 %v709
        %v1010 = vand.u32 %v993, 3
        %vm1011 = vcmp.lt.s32.totalorder %v1010, 2
        %vm1012 = vcmp.eq.s32.totalorder %v1010, 0
        %v1013 = vxor.u32 %v1008, 2147483648
        %v1014 = vsel %vm1012, %v1000, %v1013
        %vm1015 = vcmp.eq.s32.totalorder %v1010, 2
        %v1016 = vxor.u32 %v1000, 2147483648
        %v1017 = vsel %vm1015, %v1016, %v1008
        %v1018 = vsel %vm1011, %v1014, %v1017
        %v1019 = vsel %vm1009, nan, %v1018
        %v1020 = vand.u32 2147483647, %v710
        %vm1021 = vcmp.le.f32.partialorder %v1020, 0.7853982
        %vm1022 = vcmp.lt.s32.totalorder %v710, 0
        %v1023 = vand.u32 %v710, 2139095040
        %v1024 = vshrl.u32 %v1023, 23
        %v1025 = vsub.s32 %v1024, 127
        %v1026 = vand.u32 2147483647, %v710
        %v1027 = vand.u32 %v1026, 8388607
        %v1028 = vor.u32 %v1027, 8388608
        %v1029 = vsub.s32 0, %v1028
        %v1030 = vadd.s32 %v1025, 1
        %vm1031 = vcmp.gt.s32.totalorder %v1030, 0
        %v1032 = vsel %vm1031, %v1030, 0
        %v1033 = vshrl.u32 %v1032, 5
        %v1034 = vand.u32 %v1032, 31
        %v1035 = vsub.s32 32, %v1034
        %v1036 = vshrl.u32 683565275, %v1035
        %v1037 = vshll.u32 683565275, %v1034
        %v1038 = vshrl.u32 2475754826, %v1035
        %v1039 = vor.u32 %v1037, %v1038
        %v1040 = vshll.u32 2475754826, %v1034
        %v1041 = vshrl.u32 2131351028, %v1035
        %v1042 = vor.u32 %v1040, %v1041
        %v1043 = vshll.u32 2131351028, %v1034
        %v1044 = vshrl.u32 2102212464, %v1035
        %v1045 = vor.u32 %v1043, %v1044
        %v1046 = vshll.u32 2102212464, %v1034
        %v1047 = vshrl.u32 920167782, %v1035
        %v1048 = vor.u32 %v1046, %v1047
        %v1049 = vshll.u32 920167782, %v1034
        %v1050 = vshrl.u32 1326507024, %v1035
        %v1051 = vor.u32 %v1049, %v1050
        %vm1052 = vcmp.lt.s32.totalorder %v1033, 1
        %vm1053 = vcmp.lt.s32.totalorder %v1033, 2
        %vm1054 = vcmp.lt.s32.totalorder %v1033, 3
        %vm1055 = vcmp.lt.s32.totalorder %v1033, 4
        %v1056 = vsel %vm1052, %v1036, %v1039
        %v1057 = vsel %vm1055, %v1045, 2102212464
        %v1058 = vsel %vm1054, %v1042, %v1057
        %v1059 = vsel %vm1053, %v1056, %v1058
        %v1060 = vsel %vm1052, %v1039, %v1042
        %v1061 = vsel %vm1055, %v1048, 920167782
        %v1062 = vsel %vm1054, %v1045, %v1061
        %v1063 = vsel %vm1053, %v1060, %v1062
        %v1064 = vsel %vm1052, %v1042, %v1045
        %v1065 = vsel %vm1055, %v1051, 1326507024
        %v1066 = vsel %vm1054, %v1048, %v1065
        %v1067 = vsel %vm1053, %v1064, %v1066
        %v1068 = vshll.u32 %v1028, 8
        %v1069 = vand.u32 %v1068, 65535
        %v1070 = vshrl.u32 %v1068, 16
        %v1071 = vand.u32 %v1067, 65535
        %v1072 = vshrl.u32 %v1067, 16
        %v1073 = vmul.u32 %v1069, %v1071
        %v1074 = vmul.u32 %v1069, %v1072
        %v1075 = vmul.u32 %v1070, %v1071
        %v1076 = vmul.u32 %v1070, %v1072
        %v1077 = vshll.u32 %v1074, 16
        %v1078 = vshrl.u32 %v1074, 16
        %v1079 = vshll.u32 %v1075, 16
        %v1080 = vshrl.u32 %v1075, 16
        %vm1081 = vc.u32 %v1073, %v1077
        %v1082 = vsel %vm1081, 1, 0
        %v1083 = vadd.s32 %v1073, %v1077
        %v1084 = vadd.s32 %v1076, %v1082
        %vm1085 = vc.u32 %v1083, %v1079
        %v1086 = vsel %vm1085, 1, 0
        %v1087 = vadd.s32 %v1083, %v1079
        %v1088 = vadd.s32 %v1084, %v1086
        %v1089 = vadd.s32 %v1088, %v1078
        %v1090 = vadd.s32 %v1089, %v1080
        %v1091 = vand.u32 %v1068, 65535
        %v1092 = vshrl.u32 %v1068, 16
        %v1093 = vand.u32 %v1063, 65535
        %v1094 = vshrl.u32 %v1063, 16
        %v1095 = vmul.u32 %v1091, %v1093
        %v1096 = vmul.u32 %v1091, %v1094
        %v1097 = vmul.u32 %v1092, %v1093
        %v1098 = vmul.u32 %v1092, %v1094
        %v1099 = vshll.u32 %v1096, 16
        %v1100 = vshrl.u32 %v1096, 16
        %v1101 = vshll.u32 %v1097, 16
        %v1102 = vshrl.u32 %v1097, 16
        %vm1103 = vc.u32 %v1095, %v1099
        %v1104 = vsel %vm1103, 1, 0
        %v1105 = vadd.s32 %v1095, %v1099
        %v1106 = vadd.s32 %v1098, %v1104
        %vm1107 = vc.u32 %v1105, %v1101
        %v1108 = vsel %vm1107, 1, 0
        %v1109 = vadd.s32 %v1105, %v1101
        %v1110 = vadd.s32 %v1106, %v1108
        %v1111 = vadd.s32 %v1110, %v1100
        %v1112 = vadd.s32 %v1111, %v1102
        %v1113 = vmul.u32 %v1068, %v1059
        %v1114 = vadd.s32 %v1090, %v1109
        %vm1115 = vc.u32 %v1090, %v1109
        %v1116 = vadd.s32 %v1112, 1
        %v1117 = vsel %vm1115, %v1116, %v1112
        %v1118 = vadd.s32 %v1113, %v1117
        %v1119 = vadd.s32 %v1118, 536870912
        %v1120 = vshrl.u32 %v1119, 30
        %v1121 = vshll.u32 %v1120, 30
        %v1122 = vsub.s32 %v1118, %v1121
        %vm1123 = vcmp.lt.s32.totalorder %v1122, 0
        %v1124 = vsub.s32 0, %v1122
        %v1125 = vsel %vm1123, %v1124, %v1122
        %v1126 = vclz %v1125
        %v1127 = vsub.s32 %v1126, 2
        %vm1128 = vcmp.gt.s32.totalorder 0, %v1127
        %v1129 = vsel %vm1128, 0, %v1127
        %v1130 = vsub.s32 32, %v1129
        %v1131 = vshll.u32 %v1122, %v1129
        %v1132 = vshrl.u32 %v1114, %v1130
        %v1133 = vor.u32 %v1131, %v1132
        %v1134 = vsub.s32 4294967266, %v1129
        %v1135 = vadd.s32 %v1134, 127
        %v1136 = vshll.u32 %v1135, 23
        %v1137 = vor.u32 4788187, %v1136
        %v1138 = vand.u32 2147483647, %v1137
        %v1140 = vcvt.s32.f32 %v1133
        %v1141 = vmul.f32 %v1140, %v1138
        %v1142 = vxor.u32 %v1141, 2147483648
        %v1143 = vsel %vm1022, %v1142, %v1141
        %v1144 = vsub.s32 4, %v1120
        %v1145 = vsel %vm1022, %v1144, %v1120
        %v1146 = vsel %vm1021, %v710, %v1143
        %v1147 = vsel %vm1021, 0, %v1145
        %v1148 = vmul.f32 %v1146, %v1146
        %v1149 = vmul.f32 %v1148, -0.001358992
        %v1150 = vadd.f32 %v1149, 0.041655596
        %v1151 = vmul.f32 %v1148, %v1150
        %v1152 = vadd.f32 %v1151, -0.4999988
        %v1153 = vmul.f32 %v1148, %v1152
        %v1154 = vadd.f32 1.0, %v1153
        %v1155 = vmul.f32 %v1146, %v1146
        %v1156 = vmul.f32 %v1155, -0.00019511016
        %v1157 = vadd.f32 %v1156, 0.008332121
        %v1158 = vmul.f32 %v1155, %v1157
        %v1159 = vadd.f32 %v1158, -0.16666654
        %v1160 = vmul.f32 %v1155, %v1159
        %v1161 = vadd.f32 %v1160, 1.0
        %v1162 = vmul.f32 %v1161, %v1146
        %vm1163 = vweird.f32 %v710
        %v1164 = vand.u32 %v1147, 3
        %vm1165 = vcmp.lt.s32.totalorder %v1164, 2
        %vm1166 = vcmp.eq.s32.totalorder %v1164, 0
        %v1167 = vxor.u32 %v1162, 2147483648
        %v1168 = vsel %vm1166, %v1154, %v1167
        %vm1169 = vcmp.eq.s32.totalorder %v1164, 2
        %v1170 = vxor.u32 %v1154, 2147483648
        %v1171 = vsel %vm1169, %v1170, %v1162
        %v1172 = vsel %vm1165, %v1168, %v1171
        %v1173 = vsel %vm1163, nan, %v1172
        %v1174 = vand.u32 2147483647, %v711
        %vm1175 = vcmp.le.f32.partialorder %v1174, 0.7853982
        %vm1176 = vcmp.lt.s32.totalorder %v711, 0
        %v1177 = vand.u32 %v711, 2139095040
        %v1178 = vshrl.u32 %v1177, 23
        %v1179 = vsub.s32 %v1178, 127
        %v1180 = vand.u32 2147483647, %v711
        %v1181 = vand.u32 %v1180, 8388607
        %v1182 = vor.u32 %v1181, 8388608
        %v1183 = vsub.s32 0, %v1182
        %v1184 = vadd.s32 %v1179, 1
        %vm1185 = vcmp.gt.s32.totalorder %v1184, 0
        %v1186 = vsel %vm1185, %v1184, 0
        %v1187 = vshrl.u32 %v1186, 5
        %v1188 = vand.u32 %v1186, 31
        %v1189 = vsub.s32 32, %v1188
        %v1190 = vshrl.u32 683565275, %v1189
        %v1191 = vshll.u32 683565275, %v1188
        %v1192 = vshrl.u32 2475754826, %v1189
        %v1193 = vor.u32 %v1191, %v1192
        %v1194 = vshll.u32 2475754826, %v1188
        %v1195 = vshrl.u32 2131351028, %v1189
        %v1196 = vor.u32 %v1194, %v1195
        %v1197 = vshll.u32 2131351028, %v1188
        %v1198 = vshrl.u32 2102212464, %v1189
        %v1199 = vor.u32 %v1197, %v1198
        %v1200 = vshll.u32 2102212464, %v1188
        %v1201 = vshrl.u32 920167782, %v1189
        %v1202 = vor.u32 %v1200, %v1201
        %v1203 = vshll.u32 920167782, %v1188
        %v1204 = vshrl.u32 1326507024, %v1189
        %v1205 = vor.u32 %v1203, %v1204
        %vm1206 = vcmp.lt.s32.totalorder %v1187, 1
        %vm1207 = vcmp.lt.s32.totalorder %v1187, 2
        %vm1208 = vcmp.lt.s32.totalorder %v1187, 3
        %vm1209 = vcmp.lt.s32.totalorder %v1187, 4
        %v1210 = vsel %vm1206, %v1190, %v1193
        %v1211 = vsel %vm1209, %v1199, 2102212464
        %v1212 = vsel %vm1208, %v1196, %v1211
        %v1213 = vsel %vm1207, %v1210, %v1212
        %v1214 = vsel %vm1206, %v1193, %v1196
        %v1215 = vsel %vm1209, %v1202, 920167782
        %v1216 = vsel %vm1208, %v1199, %v1215
        %v1217 = vsel %vm1207, %v1214, %v1216
        %v1218 = vsel %vm1206, %v1196, %v1199
        %v1219 = vsel %vm1209, %v1205, 1326507024
        %v1220 = vsel %vm1208, %v1202, %v1219
        %v1221 = vsel %vm1207, %v1218, %v1220
        %v1222 = vshll.u32 %v1182, 8
        %v1223 = vand.u32 %v1222, 65535
        %v1224 = vshrl.u32 %v1222, 16
        %v1225 = vand.u32 %v1221, 65535
        %v1226 = vshrl.u32 %v1221, 16
        %v1227 = vmul.u32 %v1223, %v1225
        %v1228 = vmul.u32 %v1223, %v1226
        %v1229 = vmul.u32 %v1224, %v1225
        %v1230 = vmul.u32 %v1224, %v1226
        %v1231 = vshll.u32 %v1228, 16
        %v1232 = vshrl.u32 %v1228, 16
        %v1233 = vshll.u32 %v1229, 16
        %v1234 = vshrl.u32 %v1229, 16
        %vm1235 = vc.u32 %v1227, %v1231
        %v1236 = vsel %vm1235, 1, 0
        %v1237 = vadd.s32 %v1227, %v1231
        %v1238 = vadd.s32 %v1230, %v1236
        %vm1239 = vc.u32 %v1237, %v1233
        %v1240 = vsel %vm1239, 1, 0
        %v1241 = vadd.s32 %v1237, %v1233
        %v1242 = vadd.s32 %v1238, %v1240
        %v1243 = vadd.s32 %v1242, %v1232
        %v1244 = vadd.s32 %v1243, %v1234
        %v1245 = vand.u32 %v1222, 65535
        %v1246 = vshrl.u32 %v1222, 16
        %v1247 = vand.u32 %v1217, 65535
        %v1248 = vshrl.u32 %v1217, 16
        %v1249 = vmul.u32 %v1245, %v1247
        %v1250 = vmul.u32 %v1245, %v1248
        %v1251 = vmul.u32 %v1246, %v1247
        %v1252 = vmul.u32 %v1246, %v1248
        %v1253 = vshll.u32 %v1250, 16
        %v1254 = vshrl.u32 %v1250, 16
        %v1255 = vshll.u32 %v1251, 16
        %v1256 = vshrl.u32 %v1251, 16
        %vm1257 = vc.u32 %v1249, %v1253
        %v1258 = vsel %vm1257, 1, 0
        %v1259 = vadd.s32 %v1249, %v1253
        %v1260 = vadd.s32 %v1252, %v1258
        %vm1261 = vc.u32 %v1259, %v1255
        %v1262 = vsel %vm1261, 1, 0
        %v1263 = vadd.s32 %v1259, %v1255
        %v1264 = vadd.s32 %v1260, %v1262
        %v1265 = vadd.s32 %v1264, %v1254
        %v1266 = vadd.s32 %v1265, %v1256
        %v1267 = vmul.u32 %v1222, %v1213
        %v1268 = vadd.s32 %v1244, %v1263
        %vm1269 = vc.u32 %v1244, %v1263
        %v1270 = vadd.s32 %v1266, 1
        %v1271 = vsel %vm1269, %v1270, %v1266
        %v1272 = vadd.s32 %v1267, %v1271
        %v1273 = vadd.s32 %v1272, 536870912
        %v1274 = vshrl.u32 %v1273, 30
        %v1275 = vshll.u32 %v1274, 30
        %v1276 = vsub.s32 %v1272, %v1275
        %vm1277 = vcmp.lt.s32.totalorder %v1276, 0
        %v1278 = vsub.s32 0, %v1276
        %v1279 = vsel %vm1277, %v1278, %v1276
        %v1280 = vclz %v1279
        %v1281 = vsub.s32 %v1280, 2
        %vm1282 = vcmp.gt.s32.totalorder 0, %v1281
        %v1283 = vsel %vm1282, 0, %v1281
        %v1284 = vsub.s32 32, %v1283
        %v1285 = vshll.u32 %v1276, %v1283
        %v1286 = vshrl.u32 %v1268, %v1284
        %v1287 = vor.u32 %v1285, %v1286
        %v1288 = vsub.s32 4294967266, %v1283
        %v1289 = vadd.s32 %v1288, 127
        %v1290 = vshll.u32 %v1289, 23
        %v1291 = vor.u32 4788187, %v1290
        %v1292 = vand.u32 2147483647, %v1291
        %v1294 = vcvt.s32.f32 %v1287
        %v1295 = vmul.f32 %v1294, %v1292
        %v1296 = vxor.u32 %v1295, 2147483648
        %v1297 = vsel %vm1176, %v1296, %v1295
        %v1298 = vsub.s32 4, %v1274
        %v1299 = vsel %vm1176, %v1298, %v1274
        %v1300 = vsel %vm1175, %v711, %v1297
        %v1301 = vsel %vm1175, 0, %v1299
        %v1302 = vmul.f32 %v1300, %v1300
        %v1303 = vmul.f32 %v1302, -0.001358992
        %v1304 = vadd.f32 %v1303, 0.041655596
        %v1305 = vmul.f32 %v1302, %v1304
        %v1306 = vadd.f32 %v1305, -0.4999988
        %v1307 = vmul.f32 %v1302, %v1306
        %v1308 = vadd.f32 1.0, %v1307
        %v1309 = vmul.f32 %v1300, %v1300
        %v1310 = vmul.f32 %v1309, -0.00019511016
        %v1311 = vadd.f32 %v1310, 0.008332121
        %v1312 = vmul.f32 %v1309, %v1311
        %v1313 = vadd.f32 %v1312, -0.16666654
        %v1314 = vmul.f32 %v1309, %v1313
        %v1315 = vadd.f32 %v1314, 1.0
        %v1316 = vmul.f32 %v1315, %v1300
        %vm1317 = vweird.f32 %v711
        %v1318 = vand.u32 %v1301, 3
        %vm1319 = vcmp.lt.s32.totalorder %v1318, 2
        %vm1320 = vcmp.eq.s32.totalorder %v1318, 0
        %v1321 = vxor.u32 %v1316, 2147483648
        %v1322 = vsel %vm1320, %v1308, %v1321
        %vm1323 = vcmp.eq.s32.totalorder %v1318, 2
        %v1324 = vxor.u32 %v1308, 2147483648
        %v1325 = vsel %vm1323, %v1324, %v1316
        %v1326 = vsel %vm1319, %v1322, %v1325
        %v1327 = vsel %vm1317, nan, %v1326
        %v1328 = vand.u32 2147483647, %v708
        %vm1329 = vcmp.le.f32.partialorder %v1328, 0.7853982
        %vm1330 = vcmp.lt.s32.totalorder %v708, 0
        %v1331 = vand.u32 %v708, 2139095040
        %v1332 = vshrl.u32 %v1331, 23
        %v1333 = vsub.s32 %v1332, 127
        %v1334 = vand.u32 2147483647, %v708
        %v1335 = vand.u32 %v1334, 8388607
        %v1336 = vor.u32 %v1335, 8388608
        %v1337 = vsub.s32 0, %v1336
        %v1338 = vadd.s32 %v1333, 1
        %vm1339 = vcmp.gt.s32.totalorder %v1338, 0
        %v1340 = vsel %vm1339, %v1338, 0
        %v1341 = vshrl.u32 %v1340, 5
        %v1342 = vand.u32 %v1340, 31
        %v1343 = vsub.s32 32, %v1342
        %v1344 = vshrl.u32 683565275, %v1343
        %v1345 = vshll.u32 683565275, %v1342
        %v1346 = vshrl.u32 2475754826, %v1343
        %v1347 = vor.u32 %v1345, %v1346
        %v1348 = vshll.u32 2475754826, %v1342
        %v1349 = vshrl.u32 2131351028, %v1343
        %v1350 = vor.u32 %v1348, %v1349
        %v1351 = vshll.u32 2131351028, %v1342
        %v1352 = vshrl.u32 2102212464, %v1343
        %v1353 = vor.u32 %v1351, %v1352
        %v1354 = vshll.u32 2102212464, %v1342
        %v1355 = vshrl.u32 920167782, %v1343
        %v1356 = vor.u32 %v1354, %v1355
        %v1357 = vshll.u32 920167782, %v1342
        %v1358 = vshrl.u32 1326507024, %v1343
        %v1359 = vor.u32 %v1357, %v1358
        %vm1360 = vcmp.lt.s32.totalorder %v1341, 1
        %vm1361 = vcmp.lt.s32.totalorder %v1341, 2
        %vm1362 = vcmp.lt.s32.totalorder %v1341, 3
        %vm1363 = vcmp.lt.s32.totalorder %v1341, 4
        %v1364 = vsel %vm1360, %v1344, %v1347
        %v1365 = vsel %vm1363, %v1353, 2102212464
        %v1366 = vsel %vm1362, %v1350, %v1365
        %v1367 = vsel %vm1361, %v1364, %v1366
        %v1368 = vsel %vm1360, %v1347, %v1350
        %v1369 = vsel %vm1363, %v1356, 920167782
        %v1370 = vsel %vm1362, %v1353, %v1369
        %v1371 = vsel %vm1361, %v1368, %v1370
        %v1372 = vsel %vm1360, %v1350, %v1353
        %v1373 = vsel %vm1363, %v1359, 1326507024
        %v1374 = vsel %vm1362, %v1356, %v1373
        %v1375 = vsel %vm1361, %v1372, %v1374
        %v1376 = vshll.u32 %v1336, 8
        %v1377 = vand.u32 %v1376, 65535
        %v1378 = vshrl.u32 %v1376, 16
        %v1379 = vand.u32 %v1375, 65535
        %v1380 = vshrl.u32 %v1375, 16
        %v1381 = vmul.u32 %v1377, %v1379
        %v1382 = vmul.u32 %v1377, %v1380
        %v1383 = vmul.u32 %v1378, %v1379
        %v1384 = vmul.u32 %v1378, %v1380
        %v1385 = vshll.u32 %v1382, 16
        %v1386 = vshrl.u32 %v1382, 16
        %v1387 = vshll.u32 %v1383, 16
        %v1388 = vshrl.u32 %v1383, 16
        %vm1389 = vc.u32 %v1381, %v1385
        %v1390 = vsel %vm1389, 1, 0
        %v1391 = vadd.s32 %v1381, %v1385
        %v1392 = vadd.s32 %v1384, %v1390
        %vm1393 = vc.u32 %v1391, %v1387
        %v1394 = vsel %vm1393, 1, 0
        %v1395 = vadd.s32 %v1391, %v1387
        %v1396 = vadd.s32 %v1392, %v1394
        %v1397 = vadd.s32 %v1396, %v1386
        %v1398 = vadd.s32 %v1397, %v1388
        %v1399 = vand.u32 %v1376, 65535
        %v1400 = vshrl.u32 %v1376, 16
        %v1401 = vand.u32 %v1371, 65535
        %v1402 = vshrl.u32 %v1371, 16
        %v1403 = vmul.u32 %v1399, %v1401
        %v1404 = vmul.u32 %v1399, %v1402
        %v1405 = vmul.u32 %v1400, %v1401
        %v1406 = vmul.u32 %v1400, %v1402
        %v1407 = vshll.u32 %v1404, 16
        %v1408 = vshrl.u32 %v1404, 16
        %v1409 = vshll.u32 %v1405, 16
        %v1410 = vshrl.u32 %v1405, 16
        %vm1411 = vc.u32 %v1403, %v1407
        %v1412 = vsel %vm1411, 1, 0
        %v1413 = vadd.s32 %v1403, %v1407
        %v1414 = vadd.s32 %v1406, %v1412
        %vm1415 = vc.u32 %v1413, %v1409
        %v1416 = vsel %vm1415, 1, 0
        %v1417 = vadd.s32 %v1413, %v1409
        %v1418 = vadd.s32 %v1414, %v1416
        %v1419 = vadd.s32 %v1418, %v1408
        %v1420 = vadd.s32 %v1419, %v1410
        %v1421 = vmul.u32 %v1376, %v1367
        %v1422 = vadd.s32 %v1398, %v1417
        %vm1423 = vc.u32 %v1398, %v1417
        %v1424 = vadd.s32 %v1420, 1
        %v1425 = vsel %vm1423, %v1424, %v1420
        %v1426 = vadd.s32 %v1421, %v1425
        %v1427 = vadd.s32 %v1426, 536870912
        %v1428 = vshrl.u32 %v1427, 30
        %v1429 = vshll.u32 %v1428, 30
        %v1430 = vsub.s32 %v1426, %v1429
        %vm1431 = vcmp.lt.s32.totalorder %v1430, 0
        %v1432 = vsub.s32 0, %v1430
        %v1433 = vsel %vm1431, %v1432, %v1430
        %v1434 = vclz %v1433
        %v1435 = vsub.s32 %v1434, 2
        %vm1436 = vcmp.gt.s32.totalorder 0, %v1435
        %v1437 = vsel %vm1436, 0, %v1435
        %v1438 = vsub.s32 32, %v1437
        %v1439 = vshll.u32 %v1430, %v1437
        %v1440 = vshrl.u32 %v1422, %v1438
        %v1441 = vor.u32 %v1439, %v1440
        %v1442 = vsub.s32 4294967266, %v1437
        %v1443 = vadd.s32 %v1442, 127
        %v1444 = vshll.u32 %v1443, 23
        %v1445 = vor.u32 4788187, %v1444
        %v1446 = vand.u32 2147483647, %v1445
        %v1448 = vcvt.s32.f32 %v1441
        %v1449 = vmul.f32 %v1448, %v1446
        %v1450 = vxor.u32 %v1449, 2147483648
        %v1451 = vsel %vm1330, %v1450, %v1449
        %v1452 = vsub.s32 4, %v1428
        %v1453 = vsel %vm1330, %v1452, %v1428
        %v1454 = vsel %vm1329, %v708, %v1451
        %v1455 = vsel %vm1329, 0, %v1453
        %v1456 = vmul.f32 %v1454, %v1454
        %v1457 = vmul.f32 %v1456, -0.001358992
        %v1458 = vadd.f32 %v1457, 0.041655596
        %v1459 = vmul.f32 %v1456, %v1458
        %v1460 = vadd.f32 %v1459, -0.4999988
        %v1461 = vmul.f32 %v1456, %v1460
        %v1462 = vadd.f32 1.0, %v1461
        %v1463 = vmul.f32 %v1454, %v1454
        %v1464 = vmul.f32 %v1463, -0.00019511016
        %v1465 = vadd.f32 %v1464, 0.008332121
        %v1466 = vmul.f32 %v1463, %v1465
        %v1467 = vadd.f32 %v1466, -0.16666654
        %v1468 = vmul.f32 %v1463, %v1467
        %v1469 = vadd.f32 %v1468, 1.0
        %v1470 = vmul.f32 %v1469, %v1454
        %vm1471 = vweird.f32 %v708
        %v1472 = vadd.s32 %v1455, 3
        %v1473 = vand.u32 %v1472, 3
        %vm1474 = vcmp.lt.s32.totalorder %v1473, 2
        %vm1475 = vcmp.eq.s32.totalorder %v1473, 0
        %v1476 = vxor.u32 %v1470, 2147483648
        %v1477 = vsel %vm1475, %v1462, %v1476
        %vm1478 = vcmp.eq.s32.totalorder %v1473, 2
        %v1479 = vxor.u32 %v1462, 2147483648
        %v1480 = vsel %vm1478, %v1479, %v1470
        %v1481 = vsel %vm1474, %v1477, %v1480
        %v1482 = vsel %vm1471, nan, %v1481
        %v1483 = vand.u32 2147483647, %v709
        %vm1484 = vcmp.le.f32.partialorder %v1483, 0.7853982
        %vm1485 = vcmp.lt.s32.totalorder %v709, 0
        %v1486 = vand.u32 %v709, 2139095040
        %v1487 = vshrl.u32 %v1486, 23
        %v1488 = vsub.s32 %v1487, 127
        %v1489 = vand.u32 2147483647, %v709
        %v1490 = vand.u32 %v1489, 8388607
        %v1491 = vor.u32 %v1490, 8388608
        %v1492 = vsub.s32 0, %v1491
        %v1493 = vadd.s32 %v1488, 1
        %vm1494 = vcmp.gt.s32.totalorder %v1493, 0
        %v1495 = vsel %vm1494, %v1493, 0
        %v1496 = vshrl.u32 %v1495, 5
        %v1497 = vand.u32 %v1495, 31
        %v1498 = vsub.s32 32, %v1497
        %v1499 = vshrl.u32 683565275, %v1498
        %v1500 = vshll.u32 683565275, %v1497
        %v1501 = vshrl.u32 2475754826, %v1498
        %v1502 = vor.u32 %v1500, %v1501
        %v1503 = vshll.u32 2475754826, %v1497
        %v1504 = vshrl.u32 2131351028, %v1498
        %v1505 = vor.u32 %v1503, %v1504
        %v1506 = vshll.u32 2131351028, %v1497
        %v1507 = vshrl.u32 2102212464, %v1498
        %v1508 = vor.u32 %v1506, %v1507
        %v1509 = vshll.u32 2102212464, %v1497
        %v1510 = vshrl.u32 920167782, %v1498
        %v1511 = vor.u32 %v1509, %v1510
        %v1512 = vshll.u32 920167782, %v1497
        %v1513 = vshrl.u32 1326507024, %v1498
        %v1514 = vor.u32 %v1512, %v1513
        %vm1515 = vcmp.lt.s32.totalorder %v1496, 1
        %vm1516 = vcmp.lt.s32.totalorder %v1496, 2
        %vm1517 = vcmp.lt.s32.totalorder %v1496, 3
        %vm1518 = vcmp.lt.s32.totalorder %v1496, 4
        %v1519 = vsel %vm1515, %v1499, %v1502
        %v1520 = vsel %vm1518, %v1508, 2102212464
        %v1521 = vsel %vm1517, %v1505, %v1520
        %v1522 = vsel %vm1516, %v1519, %v1521
        %v1523 = vsel %vm1515, %v1502, %v1505
        %v1524 = vsel %vm1518, %v1511, 920167782
        %v1525 = vsel %vm1517, %v1508, %v1524
        %v1526 = vsel %vm1516, %v1523, %v1525
        %v1527 = vsel %vm1515, %v1505, %v1508
        %v1528 = vsel %vm1518, %v1514, 1326507024
        %v1529 = vsel %vm1517, %v1511, %v1528
        %v1530 = vsel %vm1516, %v1527, %v1529
        %v1531 = vshll.u32 %v1491, 8
        %v1532 = vand.u32 %v1531, 65535
        %v1533 = vshrl.u32 %v1531, 16
        %v1534 = vand.u32 %v1530, 65535
        %v1535 = vshrl.u32 %v1530, 16
        %v1536 = vmul.u32 %v1532, %v1534
        %v1537 = vmul.u32 %v1532, %v1535
        %v1538 = vmul.u32 %v1533, %v1534
        %v1539 = vmul.u32 %v1533, %v1535
        %v1540 = vshll.u32 %v1537, 16
        %v1541 = vshrl.u32 %v1537, 16
        %v1542 = vshll.u32 %v1538, 16
        %v1543 = vshrl.u32 %v1538, 16
        %vm1544 = vc.u32 %v1536, %v1540
        %v1545 = vsel %vm1544, 1, 0
        %v1546 = vadd.s32 %v1536, %v1540
        %v1547 = vadd.s32 %v1539, %v1545
        %vm1548 = vc.u32 %v1546, %v1542
        %v1549 = vsel %vm1548, 1, 0
        %v1550 = vadd.s32 %v1546, %v1542
        %v1551 = vadd.s32 %v1547, %v1549
        %v1552 = vadd.s32 %v1551, %v1541
        %v1553 = vadd.s32 %v1552, %v1543
        %v1554 = vand.u32 %v1531, 65535
        %v1555 = vshrl.u32 %v1531, 16
        %v1556 = vand.u32 %v1526, 65535
        %v1557 = vshrl.u32 %v1526, 16
        %v1558 = vmul.u32 %v1554, %v1556
        %v1559 = vmul.u32 %v1554, %v1557
        %v1560 = vmul.u32 %v1555, %v1556
        %v1561 = vmul.u32 %v1555, %v1557
        %v1562 = vshll.u32 %v1559, 16
        %v1563 = vshrl.u32 %v1559, 16
        %v1564 = vshll.u32 %v1560, 16
        %v1565 = vshrl.u32 %v1560, 16
        %vm1566 = vc.u32 %v1558, %v1562
        %v1567 = vsel %vm1566, 1, 0
        %v1568 = vadd.s32 %v1558, %v1562
        %v1569 = vadd.s32 %v1561, %v1567
        %vm1570 = vc.u32 %v1568, %v1564
        %v1571 = vsel %vm1570, 1, 0
        %v1572 = vadd.s32 %v1568, %v1564
        %v1573 = vadd.s32 %v1569, %v1571
        %v1574 = vadd.s32 %v1573, %v1563
        %v1575 = vadd.s32 %v1574, %v1565
        %v1576 = vmul.u32 %v1531, %v1522
        %v1577 = vadd.s32 %v1553, %v1572
        %vm1578 = vc.u32 %v1553, %v1572
        %v1579 = vadd.s32 %v1575, 1
        %v1580 = vsel %vm1578, %v1579, %v1575
        %v1581 = vadd.s32 %v1576, %v1580
        %v1582 = vadd.s32 %v1581, 536870912
        %v1583 = vshrl.u32 %v1582, 30
        %v1584 = vshll.u32 %v1583, 30
        %v1585 = vsub.s32 %v1581, %v1584
        %vm1586 = vcmp.lt.s32.totalorder %v1585, 0
        %v1587 = vsub.s32 0, %v1585
        %v1588 = vsel %vm1586, %v1587, %v1585
        %v1589 = vclz %v1588
        %v1590 = vsub.s32 %v1589, 2
        %vm1591 = vcmp.gt.s32.totalorder 0, %v1590
        %v1592 = vsel %vm1591, 0, %v1590
        %v1593 = vsub.s32 32, %v1592
        %v1594 = vshll.u32 %v1585, %v1592
        %v1595 = vshrl.u32 %v1577, %v1593
        %v1596 = vor.u32 %v1594, %v1595
        %v1597 = vsub.s32 4294967266, %v1592
        %v1598 = vadd.s32 %v1597, 127
        %v1599 = vshll.u32 %v1598, 23
        %v1600 = vor.u32 4788187, %v1599
        %v1601 = vand.u32 2147483647, %v1600
        %v1603 = vcvt.s32.f32 %v1596
        %v1604 = vmul.f32 %v1603, %v1601
        %v1605 = vxor.u32 %v1604, 2147483648
        %v1606 = vsel %vm1485, %v1605, %v1604
        %v1607 = vsub.s32 4, %v1583
        %v1608 = vsel %vm1485, %v1607, %v1583
        %v1609 = vsel %vm1484, %v709, %v1606
        %v1610 = vsel %vm1484, 0, %v1608
        %v1611 = vmul.f32 %v1609, %v1609
        %v1612 = vmul.f32 %v1611, -0.001358992
        %v1613 = vadd.f32 %v1612, 0.041655596
        %v1614 = vmul.f32 %v1611, %v1613
        %v1615 = vadd.f32 %v1614, -0.4999988
        %v1616 = vmul.f32 %v1611, %v1615
        %v1617 = vadd.f32 1.0, %v1616
        %v1618 = vmul.f32 %v1609, %v1609
        %v1619 = vmul.f32 %v1618, -0.00019511016
        %v1620 = vadd.f32 %v1619, 0.008332121
        %v1621 = vmul.f32 %v1618, %v1620
        %v1622 = vadd.f32 %v1621, -0.16666654
        %v1623 = vmul.f32 %v1618, %v1622
        %v1624 = vadd.f32 %v1623, 1.0
        %v1625 = vmul.f32 %v1624, %v1609
        %vm1626 = vweird.f32 %v709
        %v1627 = vadd.s32 %v1610, 3
        %v1628 = vand.u32 %v1627, 3
        %vm1629 = vcmp.lt.s32.totalorder %v1628, 2
        %vm1630 = vcmp.eq.s32.totalorder %v1628, 0
        %v1631 = vxor.u32 %v1625, 2147483648
        %v1632 = vsel %vm1630, %v1617, %v1631
        %vm1633 = vcmp.eq.s32.totalorder %v1628, 2
        %v1634 = vxor.u32 %v1617, 2147483648
        %v1635 = vsel %vm1633, %v1634, %v1625
        %v1636 = vsel %vm1629, %v1632, %v1635
        %v1637 = vsel %vm1626, nan, %v1636
        %v1638 = vand.u32 2147483647, %v710
        %vm1639 = vcmp.le.f32.partialorder %v1638, 0.7853982
        %vm1640 = vcmp.lt.s32.totalorder %v710, 0
        %v1641 = vand.u32 %v710, 2139095040
        %v1642 = vshrl.u32 %v1641, 23
        %v1643 = vsub.s32 %v1642, 127
        %v1644 = vand.u32 2147483647, %v710
        %v1645 = vand.u32 %v1644, 8388607
        %v1646 = vor.u32 %v1645, 8388608
        %v1647 = vsub.s32 0, %v1646
        %v1648 = vadd.s32 %v1643, 1
        %vm1649 = vcmp.gt.s32.totalorder %v1648, 0
        %v1650 = vsel %vm1649, %v1648, 0
        %v1651 = vshrl.u32 %v1650, 5
        %v1652 = vand.u32 %v1650, 31
        %v1653 = vsub.s32 32, %v1652
        %v1654 = vshrl.u32 683565275, %v1653
        %v1655 = vshll.u32 683565275, %v1652
        %v1656 = vshrl.u32 2475754826, %v1653
        %v1657 = vor.u32 %v1655, %v1656
        %v1658 = vshll.u32 2475754826, %v1652
        %v1659 = vshrl.u32 2131351028, %v1653
        %v1660 = vor.u32 %v1658, %v1659
        %v1661 = vshll.u32 2131351028, %v1652
        %v1662 = vshrl.u32 2102212464, %v1653
        %v1663 = vor.u32 %v1661, %v1662
        %v1664 = vshll.u32 2102212464, %v1652
        %v1665 = vshrl.u32 920167782, %v1653
        %v1666 = vor.u32 %v1664, %v1665
        %v1667 = vshll.u32 920167782, %v1652
        %v1668 = vshrl.u32 1326507024, %v1653
        %v1669 = vor.u32 %v1667, %v1668
        %vm1670 = vcmp.lt.s32.totalorder %v1651, 1
        %vm1671 = vcmp.lt.s32.totalorder %v1651, 2
        %vm1672 = vcmp.lt.s32.totalorder %v1651, 3
        %vm1673 = vcmp.lt.s32.totalorder %v1651, 4
        %v1674 = vsel %vm1670, %v1654, %v1657
        %v1675 = vsel %vm1673, %v1663, 2102212464
        %v1676 = vsel %vm1672, %v1660, %v1675
        %v1677 = vsel %vm1671, %v1674, %v1676
        %v1678 = vsel %vm1670, %v1657, %v1660
        %v1679 = vsel %vm1673, %v1666, 920167782
        %v1680 = vsel %vm1672, %v1663, %v1679
        %v1681 = vsel %vm1671, %v1678, %v1680
        %v1682 = vsel %vm1670, %v1660, %v1663
        %v1683 = vsel %vm1673, %v1669, 1326507024
        %v1684 = vsel %vm1672, %v1666, %v1683
        %v1685 = vsel %vm1671, %v1682, %v1684
        %v1686 = vshll.u32 %v1646, 8
        %v1687 = vand.u32 %v1686, 65535
        %v1688 = vshrl.u32 %v1686, 16
        %v1689 = vand.u32 %v1685, 65535
        %v1690 = vshrl.u32 %v1685, 16
        %v1691 = vmul.u32 %v1687, %v1689
        %v1692 = vmul.u32 %v1687, %v1690
        %v1693 = vmul.u32 %v1688, %v1689
        %v1694 = vmul.u32 %v1688, %v1690
        %v1695 = vshll.u32 %v1692, 16
        %v1696 = vshrl.u32 %v1692, 16
        %v1697 = vshll.u32 %v1693, 16
        %v1698 = vshrl.u32 %v1693, 16
        %vm1699 = vc.u32 %v1691, %v1695
        %v1700 = vsel %vm1699, 1, 0
        %v1701 = vadd.s32 %v1691, %v1695
        %v1702 = vadd.s32 %v1694, %v1700
        %vm1703 = vc.u32 %v1701, %v1697
        %v1704 = vsel %vm1703, 1, 0
        %v1705 = vadd.s32 %v1701, %v1697
        %v1706 = vadd.s32 %v1702, %v1704
        %v1707 = vadd.s32 %v1706, %v1696
        %v1708 = vadd.s32 %v1707, %v1698
        %v1709 = vand.u32 %v1686, 65535
        %v1710 = vshrl.u32 %v1686, 16
        %v1711 = vand.u32 %v1681, 65535
        %v1712 = vshrl.u32 %v1681, 16
        %v1713 = vmul.u32 %v1709, %v1711
        %v1714 = vmul.u32 %v1709, %v1712
        %v1715 = vmul.u32 %v1710, %v1711
        %v1716 = vmul.u32 %v1710, %v1712
        %v1717 = vshll.u32 %v1714, 16
        %v1718 = vshrl.u32 %v1714, 16
        %v1719 = vshll.u32 %v1715, 16
        %v1720 = vshrl.u32 %v1715, 16
        %vm1721 = vc.u32 %v1713, %v1717
        %v1722 = vsel %vm1721, 1, 0
        %v1723 = vadd.s32 %v1713, %v1717
        %v1724 = vadd.s32 %v1716, %v1722
        %vm1725 = vc.u32 %v1723, %v1719
        %v1726 = vsel %vm1725, 1, 0
        %v1727 = vadd.s32 %v1723, %v1719
        %v1728 = vadd.s32 %v1724, %v1726
        %v1729 = vadd.s32 %v1728, %v1718
        %v1730 = vadd.s32 %v1729, %v1720
        %v1731 = vmul.u32 %v1686, %v1677
        %v1732 = vadd.s32 %v1708, %v1727
        %vm1733 = vc.u32 %v1708, %v1727
        %v1734 = vadd.s32 %v1730, 1
        %v1735 = vsel %vm1733, %v1734, %v1730
        %v1736 = vadd.s32 %v1731, %v1735
        %v1737 = vadd.s32 %v1736, 536870912
        %v1738 = vshrl.u32 %v1737, 30
        %v1739 = vshll.u32 %v1738, 30
        %v1740 = vsub.s32 %v1736, %v1739
        %vm1741 = vcmp.lt.s32.totalorder %v1740, 0
        %v1742 = vsub.s32 0, %v1740
        %v1743 = vsel %vm1741, %v1742, %v1740
        %v1744 = vclz %v1743
        %v1745 = vsub.s32 %v1744, 2
        %vm1746 = vcmp.gt.s32.totalorder 0, %v1745
        %v1747 = vsel %vm1746, 0, %v1745
        %v1748 = vsub.s32 32, %v1747
        %v1749 = vshll.u32 %v1740, %v1747
        %v1750 = vshrl.u32 %v1732, %v1748
        %v1751 = vor.u32 %v1749, %v1750
        %v1752 = vsub.s32 4294967266, %v1747
        %v1753 = vadd.s32 %v1752, 127
        %v1754 = vshll.u32 %v1753, 23
        %v1755 = vor.u32 4788187, %v1754
        %v1756 = vand.u32 2147483647, %v1755
        %v1758 = vcvt.s32.f32 %v1751
        %v1759 = vmul.f32 %v1758, %v1756
        %v1760 = vxor.u32 %v1759, 2147483648
        %v1761 = vsel %vm1640, %v1760, %v1759
        %v1762 = vsub.s32 4, %v1738
        %v1763 = vsel %vm1640, %v1762, %v1738
        %v1764 = vsel %vm1639, %v710, %v1761
        %v1765 = vsel %vm1639, 0, %v1763
        %v1766 = vmul.f32 %v1764, %v1764
        %v1767 = vmul.f32 %v1766, -0.001358992
        %v1768 = vadd.f32 %v1767, 0.041655596
        %v1769 = vmul.f32 %v1766, %v1768
        %v1770 = vadd.f32 %v1769, -0.4999988
        %v1771 = vmul.f32 %v1766, %v1770
        %v1772 = vadd.f32 1.0, %v1771
        %v1773 = vmul.f32 %v1764, %v1764
        %v1774 = vmul.f32 %v1773, -0.00019511016
        %v1775 = vadd.f32 %v1774, 0.008332121
        %v1776 = vmul.f32 %v1773, %v1775
        %v1777 = vadd.f32 %v1776, -0.16666654
        %v1778 = vmul.f32 %v1773, %v1777
        %v1779 = vadd.f32 %v1778, 1.0
        %v1780 = vmul.f32 %v1779, %v1764
        %vm1781 = vweird.f32 %v710
        %v1782 = vadd.s32 %v1765, 3
        %v1783 = vand.u32 %v1782, 3
        %vm1784 = vcmp.lt.s32.totalorder %v1783, 2
        %vm1785 = vcmp.eq.s32.totalorder %v1783, 0
        %v1786 = vxor.u32 %v1780, 2147483648
        %v1787 = vsel %vm1785, %v1772, %v1786
        %vm1788 = vcmp.eq.s32.totalorder %v1783, 2
        %v1789 = vxor.u32 %v1772, 2147483648
        %v1790 = vsel %vm1788, %v1789, %v1780
        %v1791 = vsel %vm1784, %v1787, %v1790
        %v1792 = vsel %vm1781, nan, %v1791
        %v1793 = vand.u32 2147483647, %v711
        %vm1794 = vcmp.le.f32.partialorder %v1793, 0.7853982
        %vm1795 = vcmp.lt.s32.totalorder %v711, 0
        %v1796 = vand.u32 %v711, 2139095040
        %v1797 = vshrl.u32 %v1796, 23
        %v1798 = vsub.s32 %v1797, 127
        %v1799 = vand.u32 2147483647, %v711
        %v1800 = vand.u32 %v1799, 8388607
        %v1801 = vor.u32 %v1800, 8388608
        %v1802 = vsub.s32 0, %v1801
        %v1803 = vadd.s32 %v1798, 1
        %vm1804 = vcmp.gt.s32.totalorder %v1803, 0
        %v1805 = vsel %vm1804, %v1803, 0
        %v1806 = vshrl.u32 %v1805, 5
        %v1807 = vand.u32 %v1805, 31
        %v1808 = vsub.s32 32, %v1807
        %v1809 = vshrl.u32 683565275, %v1808
        %v1810 = vshll.u32 683565275, %v1807
        %v1811 = vshrl.u32 2475754826, %v1808
        %v1812 = vor.u32 %v1810, %v1811
        %v1813 = vshll.u32 2475754826, %v1807
        %v1814 = vshrl.u32 2131351028, %v1808
        %v1815 = vor.u32 %v1813, %v1814
        %v1816 = vshll.u32 2131351028, %v1807
        %v1817 = vshrl.u32 2102212464, %v1808
        %v1818 = vor.u32 %v1816, %v1817
        %v1819 = vshll.u32 2102212464, %v1807
        %v1820 = vshrl.u32 920167782, %v1808
        %v1821 = vor.u32 %v1819, %v1820
        %v1822 = vshll.u32 920167782, %v1807
        %v1823 = vshrl.u32 1326507024, %v1808
        %v1824 = vor.u32 %v1822, %v1823
        %vm1825 = vcmp.lt.s32.totalorder %v1806, 1
        %vm1826 = vcmp.lt.s32.totalorder %v1806, 2
        %vm1827 = vcmp.lt.s32.totalorder %v1806, 3
        %vm1828 = vcmp.lt.s32.totalorder %v1806, 4
        %v1829 = vsel %vm1825, %v1809, %v1812
        %v1830 = vsel %vm1828, %v1818, 2102212464
        %v1831 = vsel %vm1827, %v1815, %v1830
        %v1832 = vsel %vm1826, %v1829, %v1831
        %v1833 = vsel %vm1825, %v1812, %v1815
        %v1834 = vsel %vm1828, %v1821, 920167782
        %v1835 = vsel %vm1827, %v1818, %v1834
        %v1836 = vsel %vm1826, %v1833, %v1835
        %v1837 = vsel %vm1825, %v1815, %v1818
        %v1838 = vsel %vm1828, %v1824, 1326507024
        %v1839 = vsel %vm1827, %v1821, %v1838
        %v1840 = vsel %vm1826, %v1837, %v1839
        %v1841 = vshll.u32 %v1801, 8
        %v1842 = vand.u32 %v1841, 65535
        %v1843 = vshrl.u32 %v1841, 16
        %v1844 = vand.u32 %v1840, 65535
        %v1845 = vshrl.u32 %v1840, 16
        %v1846 = vmul.u32 %v1842, %v1844
        %v1847 = vmul.u32 %v1842, %v1845
        %v1848 = vmul.u32 %v1843, %v1844
        %v1849 = vmul.u32 %v1843, %v1845
        %v1850 = vshll.u32 %v1847, 16
        %v1851 = vshrl.u32 %v1847, 16
        %v1852 = vshll.u32 %v1848, 16
        %v1853 = vshrl.u32 %v1848, 16
        %vm1854 = vc.u32 %v1846, %v1850
        %v1855 = vsel %vm1854, 1, 0
        %v1856 = vadd.s32 %v1846, %v1850
        %v1857 = vadd.s32 %v1849, %v1855
        %vm1858 = vc.u32 %v1856, %v1852
        %v1859 = vsel %vm1858, 1, 0
        %v1860 = vadd.s32 %v1856, %v1852
        %v1861 = vadd.s32 %v1857, %v1859
        %v1862 = vadd.s32 %v1861, %v1851
        %v1863 = vadd.s32 %v1862, %v1853
        %v1864 = vand.u32 %v1841, 65535
        %v1865 = vshrl.u32 %v1841, 16
        %v1866 = vand.u32 %v1836, 65535
        %v1867 = vshrl.u32 %v1836, 16
        %v1868 = vmul.u32 %v1864, %v1866
        %v1869 = vmul.u32 %v1864, %v1867
        %v1870 = vmul.u32 %v1865, %v1866
        %v1871 = vmul.u32 %v1865, %v1867
        %v1872 = vshll.u32 %v1869, 16
        %v1873 = vshrl.u32 %v1869, 16
        %v1874 = vshll.u32 %v1870, 16
        %v1875 = vshrl.u32 %v1870, 16
        %vm1876 = vc.u32 %v1868, %v1872
        %v1877 = vsel %vm1876, 1, 0
        %v1878 = vadd.s32 %v1868, %v1872
        %v1879 = vadd.s32 %v1871, %v1877
        %vm1880 = vc.u32 %v1878, %v1874
        %v1881 = vsel %vm1880, 1, 0
        %v1882 = vadd.s32 %v1878, %v1874
        %v1883 = vadd.s32 %v1879, %v1881
        %v1884 = vadd.s32 %v1883, %v1873
        %v1885 = vadd.s32 %v1884, %v1875
        %v1886 = vmul.u32 %v1841, %v1832
        %v1887 = vadd.s32 %v1863, %v1882
        %vm1888 = vc.u32 %v1863, %v1882
        %v1889 = vadd.s32 %v1885, 1
        %v1890 = vsel %vm1888, %v1889, %v1885
        %v1891 = vadd.s32 %v1886, %v1890
        %v1892 = vadd.s32 %v1891, 536870912
        %v1893 = vshrl.u32 %v1892, 30
        %v1894 = vshll.u32 %v1893, 30
        %v1895 = vsub.s32 %v1891, %v1894
        %vm1896 = vcmp.lt.s32.totalorder %v1895, 0
        %v1897 = vsub.s32 0, %v1895
        %v1898 = vsel %vm1896, %v1897, %v1895
        %v1899 = vclz %v1898
        %v1900 = vsub.s32 %v1899, 2
        %vm1901 = vcmp.gt.s32.totalorder 0, %v1900
        %v1902 = vsel %vm1901, 0, %v1900
        %v1903 = vsub.s32 32, %v1902
        %v1904 = vshll.u32 %v1895, %v1902
        %v1905 = vshrl.u32 %v1887, %v1903
        %v1906 = vor.u32 %v1904, %v1905
        %v1907 = vsub.s32 4294967266, %v1902
        %v1908 = vadd.s32 %v1907, 127
        %v1909 = vshll.u32 %v1908, 23
        %v1910 = vor.u32 4788187, %v1909
        %v1911 = vand.u32 2147483647, %v1910
        %v1913 = vcvt.s32.f32 %v1906
        %v1914 = vmul.f32 %v1913, %v1911
        %v1915 = vxor.u32 %v1914, 2147483648
        %v1916 = vsel %vm1795, %v1915, %v1914
        %v1917 = vsub.s32 4, %v1893
        %v1918 = vsel %vm1795, %v1917, %v1893
        %v1919 = vsel %vm1794, %v711, %v1916
        %v1920 = vsel %vm1794, 0, %v1918
        %v1921 = vmul.f32 %v1919, %v1919
        %v1922 = vmul.f32 %v1921, -0.001358992
        %v1923 = vadd.f32 %v1922, 0.041655596
        %v1924 = vmul.f32 %v1921, %v1923
        %v1925 = vadd.f32 %v1924, -0.4999988
        %v1926 = vmul.f32 %v1921, %v1925
        %v1927 = vadd.f32 1.0, %v1926
        %v1928 = vmul.f32 %v1919, %v1919
        %v1929 = vmul.f32 %v1928, -0.00019511016
        %v1930 = vadd.f32 %v1929, 0.008332121
        %v1931 = vmul.f32 %v1928, %v1930
        %v1932 = vadd.f32 %v1931, -0.16666654
        %v1933 = vmul.f32 %v1928, %v1932
        %v1934 = vadd.f32 %v1933, 1.0
        %v1935 = vmul.f32 %v1934, %v1919
        %vm1936 = vweird.f32 %v711
        %v1937 = vadd.s32 %v1920, 3
        %v1938 = vand.u32 %v1937, 3
        %vm1939 = vcmp.lt.s32.totalorder %v1938, 2
        %vm1940 = vcmp.eq.s32.totalorder %v1938, 0
        %v1941 = vxor.u32 %v1935, 2147483648
        %v1942 = vsel %vm1940, %v1927, %v1941
        %vm1943 = vcmp.eq.s32.totalorder %v1938, 2
        %v1944 = vxor.u32 %v1927, 2147483648
        %v1945 = vsel %vm1943, %v1944, %v1935
        %v1946 = vsel %vm1939, %v1942, %v1945
        %v1947 = vsel %vm1936, nan, %v1946
        %v1948 = vld [vmem:[#allocation7] sm:$0xff]
        %v1949 = vld [vmem:[#allocation7 + $0x8] sm:$0xff]
        %v1950 = vld [vmem:[#allocation7 + $0x10] sm:$0xff]
        %v1951 = vld [vmem:[#allocation7 + $0x18] sm:$0xff]
        %v1952 = vld [vmem:[#allocation7 + $0x20] sm:$0xff]
        %v1953 = vld [vmem:[#allocation7 + $0x28] sm:$0xff]
        %v1954 = vld [vmem:[#allocation7 + $0x30] sm:$0xff]
        %v1955 = vld [vmem:[#allocation7 + $0x38] sm:$0xff]
        %v1956 = vld [vmem:[#allocation7 + $0x40] sm:$0xff]
        %v1957 = vld [vmem:[#allocation7 + $0x48] sm:$0xff]
        %v1958 = vld [vmem:[#allocation7 + $0x50] sm:$0xff]
        %v1959 = vld [vmem:[#allocation7 + $0x58] sm:$0xff]
        %v1960 = vld [vmem:[#allocation7 + $0x60] sm:$0xff]
        %v1961 = vld [vmem:[#allocation7 + $0x68] sm:$0xff]
        %v1962 = vld [vmem:[#allocation7 + $0x70] sm:$0xff]
        %v1963 = vld [vmem:[#allocation7 + $0x78] sm:$0xff]
        %v1964 = vld [vmem:[#allocation7 + $0x80] sm:$0xff]
        %v1965 = vld [vmem:[#allocation7 + $0x88] sm:$0xff]
        %v1966 = vld [vmem:[#allocation7 + $0x90] sm:$0xff]
        %v1967 = vld [vmem:[#allocation7 + $0x98] sm:$0xff]
        %v1968 = vld [vmem:[#allocation7 + $0xa0] sm:$0xff]
        %v1969 = vld [vmem:[#allocation7 + $0xa8] sm:$0xff]
        %v1970 = vld [vmem:[#allocation7 + $0xb0] sm:$0xff]
        %v1971 = vld [vmem:[#allocation7 + $0xb8] sm:$0xff]
        %v1972 = vld [vmem:[#allocation7 + $0xc0] sm:$0xff]
        %v1973 = vld [vmem:[#allocation7 + $0xc8] sm:$0xff]
        %v1974 = vld [vmem:[#allocation7 + $0xd0] sm:$0xff]
        %v1975 = vld [vmem:[#allocation7 + $0xd8] sm:$0xff]
        %v1976 = vld [vmem:[#allocation7 + $0xe0] sm:$0xff]
        %v1977 = vld [vmem:[#allocation7 + $0xe8] sm:$0xff]
        %v1978 = vld [vmem:[#allocation7 + $0xf0] sm:$0xff]
        %v1979 = vld [vmem:[#allocation7 + $0xf8] sm:$0xff]
        %v1980 = vld [vmem:[#allocation8] sm:$0xff]
        %v1981 = vld [vmem:[#allocation8 + $0x8] sm:$0xff]
        %v1982 = vld [vmem:[#allocation8 + $0x10] sm:$0xff]
        %v1983 = vld [vmem:[#allocation8 + $0x18] sm:$0xff]
        %v1984 = vld [vmem:[#allocation8 + $0x20] sm:$0xff]
        %v1985 = vld [vmem:[#allocation8 + $0x28] sm:$0xff]
        %v1986 = vld [vmem:[#allocation8 + $0x30] sm:$0xff]
        %v1987 = vld [vmem:[#allocation8 + $0x38] sm:$0xff]
        %v1988 = vld [vmem:[#allocation8 + $0x40] sm:$0xff]
        %v1989 = vld [vmem:[#allocation8 + $0x48] sm:$0xff]
        %v1990 = vld [vmem:[#allocation8 + $0x50] sm:$0xff]
        %v1991 = vld [vmem:[#allocation8 + $0x58] sm:$0xff]
        %v1992 = vld [vmem:[#allocation8 + $0x60] sm:$0xff]
        %v1993 = vld [vmem:[#allocation8 + $0x68] sm:$0xff]
        %v1994 = vld [vmem:[#allocation8 + $0x70] sm:$0xff]
        %v1995 = vld [vmem:[#allocation8 + $0x78] sm:$0xff]
        %v1996 = vld [vmem:[#allocation8 + $0x80] sm:$0xff]
        %v1997 = vld [vmem:[#allocation8 + $0x88] sm:$0xff]
        %v1998 = vld [vmem:[#allocation8 + $0x90] sm:$0xff]
        %v1999 = vld [vmem:[#allocation8 + $0x98] sm:$0xff]
        %v2000 = vld [vmem:[#allocation8 + $0xa0] sm:$0xff]
        %v2001 = vld [vmem:[#allocation8 + $0xa8] sm:$0xff]
        %v2002 = vld [vmem:[#allocation8 + $0xb0] sm:$0xff]
        %v2003 = vld [vmem:[#allocation8 + $0xb8] sm:$0xff]
        %v2004 = vld [vmem:[#allocation8 + $0xc0] sm:$0xff]
        %v2005 = vld [vmem:[#allocation8 + $0xc8] sm:$0xff]
        %v2006 = vld [vmem:[#allocation8 + $0xd0] sm:$0xff]
        %v2007 = vld [vmem:[#allocation8 + $0xd8] sm:$0xff]
        %v2008 = vld [vmem:[#allocation8 + $0xe0] sm:$0xff]
        %v2009 = vld [vmem:[#allocation8 + $0xe8] sm:$0xff]
        %v2010 = vld [vmem:[#allocation8 + $0xf0] sm:$0xff]
        %v2011 = vld [vmem:[#allocation8 + $0xf8] sm:$0xff]
        %2012 = vmatpush.msra.mxu0 %v1995
        %2013 = vmatpush.msra.mxu0 %v1994
        %2014 = vmatpush.msra.mxu0 %v1993
        %2015 = vmatpush.msra.mxu0 %v1992
        %2016 = vmatpush.msra.mxu0 %v1991
        %2017 = vmatpush.msra.mxu0 %v1990
        %2018 = vmatpush.msra.mxu0 %v1989
        %2019 = vmatpush.msra.mxu0 %v1988
        %2020 = vmatpush.msra.mxu0 %v1987
        %2021 = vmatpush.msra.mxu0 %v1986
        %2022 = vmatpush.msra.mxu0 %v1985
        %2023 = vmatpush.msra.mxu0 %v1984
        %2024 = vmatpush.msra.mxu0 %v1983
        %2025 = vmatpush.msra.mxu0 %v1982
        %2026 = vmatpush.msra.mxu0 %v1981
        %2027 = vmatpush.msra.mxu0 %v1980
        %2028 = vmatmul.f32.gmra.mxu0 %v1482
        %v2029 = vpop.f32.mrf.mxu0
        %v2030 = vadd.f32 0.0, %v2029
        %2031 = vmatmul.f32.gmra.mxu0 %v1792
        %v2032 = vpop.f32.mrf.mxu0
        %v2033 = vadd.f32 0.0, %v2032
        %2034 = vdwg.mxu0
        %2035 = vmatpush.msra.mxu0 %v2011
        %2036 = vmatpush.msra.mxu0 %v2010
        %2037 = vmatpush.msra.mxu0 %v2009
        %2038 = vmatpush.msra.mxu0 %v2008
        %2039 = vmatpush.msra.mxu0 %v2007
        %2040 = vmatpush.msra.mxu0 %v2006
        %2041 = vmatpush.msra.mxu0 %v2005
        %2042 = vmatpush.msra.mxu0 %v2004
        %2043 = vmatpush.msra.mxu0 %v2003
        %2044 = vmatpush.msra.mxu0 %v2002
        %2045 = vmatpush.msra.mxu0 %v2001
        %2046 = vmatpush.msra.mxu0 %v2000
        %2047 = vmatpush.msra.mxu0 %v1999
        %2048 = vmatpush.msra.mxu0 %v1998
        %2049 = vmatpush.msra.mxu0 %v1997
        %2050 = vmatpush.msra.mxu0 %v1996
        %2051 = vmatmul.f32.gmra.mxu0 %v1637
        %v2052 = vpop.f32.mrf.mxu0
        %v2053 = vadd.f32 %v2030, %v2052
        %2054 = vmatmul.f32.gmra.mxu0 %v1947
        %v2055 = vpop.f32.mrf.mxu0
        %v2056 = vadd.f32 %v2033, %v2055
        %2057 = vdwg.mxu0
        %2058 = vmatpush.msra.mxu0 %v1963
        %2059 = vmatpush.msra.mxu0 %v1962
        %2060 = vmatpush.msra.mxu0 %v1961
        %2061 = vmatpush.msra.mxu0 %v1960
        %2062 = vmatpush.msra.mxu0 %v1959
        %2063 = vmatpush.msra.mxu0 %v1958
        %2064 = vmatpush.msra.mxu0 %v1957
        %2065 = vmatpush.msra.mxu0 %v1956
        %2066 = vmatpush.msra.mxu0 %v1955
        %2067 = vmatpush.msra.mxu0 %v1954
        %2068 = vmatpush.msra.mxu0 %v1953
        %2069 = vmatpush.msra.mxu0 %v1952
        %2070 = vmatpush.msra.mxu0 %v1951
        %2071 = vmatpush.msra.mxu0 %v1950
        %2072 = vmatpush.msra.mxu0 %v1949
        %2073 = vmatpush.msra.mxu0 %v1948
        %2074 = vmatmul.f32.gmra.mxu0 %v865
        %v2075 = vpop.f32.mrf.mxu0
        %v2076 = vadd.f32 %v2053, %v2075
        %2077 = vmatmul.f32.gmra.mxu0 %v1173
        %v2078 = vpop.f32.mrf.mxu0
        %v2079 = vadd.f32 %v2056, %v2078
        %2080 = vdwg.mxu0
        %2081 = vmatpush.msra.mxu0 %v1979
        %2082 = vmatpush.msra.mxu0 %v1978
        %2083 = vmatpush.msra.mxu0 %v1977
        %2084 = vmatpush.msra.mxu0 %v1976
        %2085 = vmatpush.msra.mxu0 %v1975
        %2086 = vmatpush.msra.mxu0 %v1974
        %2087 = vmatpush.msra.mxu0 %v1973
        %2088 = vmatpush.msra.mxu0 %v1972
        %2089 = vmatpush.msra.mxu0 %v1971
        %2090 = vmatpush.msra.mxu0 %v1970
        %2091 = vmatpush.msra.mxu0 %v1969
        %2092 = vmatpush.msra.mxu0 %v1968
        %2093 = vmatpush.msra.mxu0 %v1967
        %2094 = vmatpush.msra.mxu0 %v1966
        %2095 = vmatpush.msra.mxu0 %v1965
        %2096 = vmatpush.msra.mxu0 %v1964
        %2097 = vmatmul.f32.gmra.mxu0 %v1019
        %v2098 = vpop.f32.mrf.mxu0
        %v2099 = vadd.f32 %v2076, %v2098
        %2100 = vmatmul.f32.gmra.mxu0 %v1327
        %v2101 = vpop.f32.mrf.mxu0
        %v2102 = vadd.f32 %v2079, %v2101
        %2103 = vdwg.mxu0
        %v2104 = vld [vmem:[%s8] sm:$0x1]
        %v2106 = vperm.slane %v2104, 0
        %v2108 = vadd.f32 %v2099, %v2106
        %v2109 = vadd.f32 %v2102, %v2106
        %v2110 = vtanh.pop %v2108
        %v2111 = vtanh.pop %v2109
        %v2112 = vld [vmem:[#allocation10] sm:$0xff]
        %v2113 = vld [vmem:[#allocation10 + $0x8] sm:$0xff]
        %v2114 = vld [vmem:[#allocation10 + $0x10] sm:$0xff]
        %v2115 = vld [vmem:[#allocation10 + $0x18] sm:$0xff]
        %v2116 = vld [vmem:[#allocation10 + $0x20] sm:$0xff]
        %v2117 = vld [vmem:[#allocation10 + $0x28] sm:$0xff]
        %v2118 = vld [vmem:[#allocation10 + $0x30] sm:$0xff]
        %v2119 = vld [vmem:[#allocation10 + $0x38] sm:$0xff]
        %v2120 = vld [vmem:[#allocation10 + $0x40] sm:$0xff]
        %v2121 = vld [vmem:[#allocation10 + $0x48] sm:$0xff]
        %v2122 = vld [vmem:[#allocation10 + $0x50] sm:$0xff]
        %v2123 = vld [vmem:[#allocation10 + $0x58] sm:$0xff]
        %v2124 = vld [vmem:[#allocation10 + $0x60] sm:$0xff]
        %v2125 = vld [vmem:[#allocation10 + $0x68] sm:$0xff]
        %v2126 = vld [vmem:[#allocation10 + $0x70] sm:$0xff]
        %v2127 = vld [vmem:[#allocation10 + $0x78] sm:$0xff]
        %v2128 = vld [vmem:[%s10] sm:$0x1]
        %v2130 = vperm.slane %v2128, 0
        %2132 = vmatpush.msra.mxu0 %v2127
        %2133 = vmatpush.msra.mxu0 %v2126
        %2134 = vmatpush.msra.mxu0 %v2125
        %2135 = vmatpush.msra.mxu0 %v2124
        %2136 = vmatpush.msra.mxu0 %v2123
        %2137 = vmatpush.msra.mxu0 %v2122
        %2138 = vmatpush.msra.mxu0 %v2121
        %2139 = vmatpush.msra.mxu0 %v2120
        %2140 = vmatpush.msra.mxu0 %v2119
        %2141 = vmatpush.msra.mxu0 %v2118
        %2142 = vmatpush.msra.mxu0 %v2117
        %2143 = vmatpush.msra.mxu0 %v2116
        %2144 = vmatpush.msra.mxu0 %v2115
        %2145 = vmatpush.msra.mxu0 %v2114
        %2146 = vmatpush.msra.mxu0 %v2113
        %2147 = vmatpush.msra.mxu0 %v2112
        %2148 = vmatmul.f32.gmra.mxu0 %v2110
        %v2149 = vpop.f32.mrf.mxu0
        %v2150 = vadd.f32 %v2130, %v2149
        %2151 = vmatmul.f32.gmra.mxu0 %v2111
        %v2152 = vpop.f32.mrf.mxu0
        %v2153 = vadd.f32 %v2130, %v2152
        %2154 = vdwg.mxu0
        %v2155 = vtanh.pop %v2150
        %v2156 = vtanh.pop %v2153
        %s2157 = scalar_lea.vmem [#allocation10], 128
        %v2158 = vld [vmem:[%s2157] sm:$0xff]
        %v2159 = vld [vmem:[%s2157 + $0x8] sm:$0xff]
        %v2160 = vld [vmem:[%s2157 + $0x10] sm:$0xff]
        %v2161 = vld [vmem:[%s2157 + $0x18] sm:$0xff]
        %v2162 = vld [vmem:[%s2157 + $0x20] sm:$0xff]
        %v2163 = vld [vmem:[%s2157 + $0x28] sm:$0xff]
        %v2164 = vld [vmem:[%s2157 + $0x30] sm:$0xff]
        %v2165 = vld [vmem:[%s2157 + $0x38] sm:$0xff]
        %v2166 = vld [vmem:[%s2157 + $0x40] sm:$0xff]
        %v2167 = vld [vmem:[%s2157 + $0x48] sm:$0xff]
        %v2168 = vld [vmem:[%s2157 + $0x50] sm:$0xff]
        %v2169 = vld [vmem:[%s2157 + $0x58] sm:$0xff]
        %v2170 = vld [vmem:[%s2157 + $0x60] sm:$0xff]
        %v2171 = vld [vmem:[%s2157 + $0x68] sm:$0xff]
        %v2172 = vld [vmem:[%s2157 + $0x70] sm:$0xff]
        %v2173 = vld [vmem:[%s2157 + $0x78] sm:$0xff]
        %s2174 = scalar_lea.vmem %s10, 1
        %v2175 = vld [vmem:[%s2174] sm:$0x1]
        %v2177 = vperm.slane %v2175, 0
        %2179 = vmatpush.msra.mxu0 %v2173
        %2180 = vmatpush.msra.mxu0 %v2172
        %2181 = vmatpush.msra.mxu0 %v2171
        %2182 = vmatpush.msra.mxu0 %v2170
        %2183 = vmatpush.msra.mxu0 %v2169
        %2184 = vmatpush.msra.mxu0 %v2168
        %2185 = vmatpush.msra.mxu0 %v2167
        %2186 = vmatpush.msra.mxu0 %v2166
        %2187 = vmatpush.msra.mxu0 %v2165
        %2188 = vmatpush.msra.mxu0 %v2164
        %2189 = vmatpush.msra.mxu0 %v2163
        %2190 = vmatpush.msra.mxu0 %v2162
        %2191 = vmatpush.msra.mxu0 %v2161
        %2192 = vmatpush.msra.mxu0 %v2160
        %2193 = vmatpush.msra.mxu0 %v2159
        %2194 = vmatpush.msra.mxu0 %v2158
        %2195 = vmatmul.f32.gmra.mxu0 %v2155
        %v2196 = vpop.f32.mrf.mxu0
        %v2197 = vadd.f32 %v2177, %v2196
        %2198 = vmatmul.f32.gmra.mxu0 %v2156
        %v2199 = vpop.f32.mrf.mxu0
        %v2200 = vadd.f32 %v2177, %v2199
        %2201 = vdwg.mxu0
        %v2202 = vtanh.pop %v2197
        %v2203 = vtanh.pop %v2200
        %s2204 = scalar_lea.vmem [#allocation10], 256
        %v2205 = vld [vmem:[%s2204] sm:$0xff]
        %v2206 = vld [vmem:[%s2204 + $0x8] sm:$0xff]
        %v2207 = vld [vmem:[%s2204 + $0x10] sm:$0xff]
        %v2208 = vld [vmem:[%s2204 + $0x18] sm:$0xff]
        %v2209 = vld [vmem:[%s2204 + $0x20] sm:$0xff]
        %v2210 = vld [vmem:[%s2204 + $0x28] sm:$0xff]
        %v2211 = vld [vmem:[%s2204 + $0x30] sm:$0xff]
        %v2212 = vld [vmem:[%s2204 + $0x38] sm:$0xff]
        %v2213 = vld [vmem:[%s2204 + $0x40] sm:$0xff]
        %v2214 = vld [vmem:[%s2204 + $0x48] sm:$0xff]
        %v2215 = vld [vmem:[%s2204 + $0x50] sm:$0xff]
        %v2216 = vld [vmem:[%s2204 + $0x58] sm:$0xff]
        %v2217 = vld [vmem:[%s2204 + $0x60] sm:$0xff]
        %v2218 = vld [vmem:[%s2204 + $0x68] sm:$0xff]
        %v2219 = vld [vmem:[%s2204 + $0x70] sm:$0xff]
        %v2220 = vld [vmem:[%s2204 + $0x78] sm:$0xff]
        %s2221 = scalar_lea.vmem %s10, 2
        %v2222 = vld [vmem:[%s2221] sm:$0x1]
        %v2224 = vperm.slane %v2222, 0
        %2226 = vmatpush.msra.mxu0 %v2220
        %2227 = vmatpush.msra.mxu0 %v2219
        %2228 = vmatpush.msra.mxu0 %v2218
        %2229 = vmatpush.msra.mxu0 %v2217
        %2230 = vmatpush.msra.mxu0 %v2216
        %2231 = vmatpush.msra.mxu0 %v2215
        %2232 = vmatpush.msra.mxu0 %v2214
        %2233 = vmatpush.msra.mxu0 %v2213
        %2234 = vmatpush.msra.mxu0 %v2212
        %2235 = vmatpush.msra.mxu0 %v2211
        %2236 = vmatpush.msra.mxu0 %v2210
        %2237 = vmatpush.msra.mxu0 %v2209
        %2238 = vmatpush.msra.mxu0 %v2208
        %2239 = vmatpush.msra.mxu0 %v2207
        %2240 = vmatpush.msra.mxu0 %v2206
        %2241 = vmatpush.msra.mxu0 %v2205
        %2242 = vmatmul.f32.gmra.mxu0 %v2202
        %v2243 = vpop.f32.mrf.mxu0
        %v2244 = vadd.f32 %v2224, %v2243
        %2245 = vmatmul.f32.gmra.mxu0 %v2203
        %v2246 = vpop.f32.mrf.mxu0
        %v2247 = vadd.f32 %v2224, %v2246
        %2248 = vdwg.mxu0
        %v2249 = vtanh.pop %v2244
        %v2250 = vtanh.pop %v2247
        %s2251 = scalar_lea.vmem [#allocation10], 384
        %v2252 = vld [vmem:[%s2251] sm:$0xff]
        %v2253 = vld [vmem:[%s2251 + $0x8] sm:$0xff]
        %v2254 = vld [vmem:[%s2251 + $0x10] sm:$0xff]
        %v2255 = vld [vmem:[%s2251 + $0x18] sm:$0xff]
        %v2256 = vld [vmem:[%s2251 + $0x20] sm:$0xff]
        %v2257 = vld [vmem:[%s2251 + $0x28] sm:$0xff]
        %v2258 = vld [vmem:[%s2251 + $0x30] sm:$0xff]
        %v2259 = vld [vmem:[%s2251 + $0x38] sm:$0xff]
        %v2260 = vld [vmem:[%s2251 + $0x40] sm:$0xff]
        %v2261 = vld [vmem:[%s2251 + $0x48] sm:$0xff]
        %v2262 = vld [vmem:[%s2251 + $0x50] sm:$0xff]
        %v2263 = vld [vmem:[%s2251 + $0x58] sm:$0xff]
        %v2264 = vld [vmem:[%s2251 + $0x60] sm:$0xff]
        %v2265 = vld [vmem:[%s2251 + $0x68] sm:$0xff]
        %v2266 = vld [vmem:[%s2251 + $0x70] sm:$0xff]
        %v2267 = vld [vmem:[%s2251 + $0x78] sm:$0xff]
        %s2268 = scalar_lea.vmem %s10, 3
        %v2269 = vld [vmem:[%s2268] sm:$0x1]
        %v2271 = vperm.slane %v2269, 0
        %2273 = vmatpush.msra.mxu0 %v2267
        %2274 = vmatpush.msra.mxu0 %v2266
        %2275 = vmatpush.msra.mxu0 %v2265
        %2276 = vmatpush.msra.mxu0 %v2264
        %2277 = vmatpush.msra.mxu0 %v2263
        %2278 = vmatpush.msra.mxu0 %v2262
        %2279 = vmatpush.msra.mxu0 %v2261
        %2280 = vmatpush.msra.mxu0 %v2260
        %2281 = vmatpush.msra.mxu0 %v2259
        %2282 = vmatpush.msra.mxu0 %v2258
        %2283 = vmatpush.msra.mxu0 %v2257
        %2284 = vmatpush.msra.mxu0 %v2256
        %2285 = vmatpush.msra.mxu0 %v2255
        %2286 = vmatpush.msra.mxu0 %v2254
        %2287 = vmatpush.msra.mxu0 %v2253
        %2288 = vmatpush.msra.mxu0 %v2252
        %2289 = vmatmul.f32.gmra.mxu0 %v2249
        %v2290 = vpop.f32.mrf.mxu0
        %v2291 = vadd.f32 %v2271, %v2290
        %2292 = vmatmul.f32.gmra.mxu0 %v2250
        %v2293 = vpop.f32.mrf.mxu0
        %v2294 = vadd.f32 %v2271, %v2293
        %2295 = vdwg.mxu0
        %v2296 = vtanh.pop %v2291
        %v2297 = vtanh.pop %v2294
        %s2298 = scalar_lea.vmem [#allocation10], 512
        %v2299 = vld [vmem:[%s2298] sm:$0xff]
        %v2300 = vld [vmem:[%s2298 + $0x8] sm:$0xff]
        %v2301 = vld [vmem:[%s2298 + $0x10] sm:$0xff]
        %v2302 = vld [vmem:[%s2298 + $0x18] sm:$0xff]
        %v2303 = vld [vmem:[%s2298 + $0x20] sm:$0xff]
        %v2304 = vld [vmem:[%s2298 + $0x28] sm:$0xff]
        %v2305 = vld [vmem:[%s2298 + $0x30] sm:$0xff]
        %v2306 = vld [vmem:[%s2298 + $0x38] sm:$0xff]
        %v2307 = vld [vmem:[%s2298 + $0x40] sm:$0xff]
        %v2308 = vld [vmem:[%s2298 + $0x48] sm:$0xff]
        %v2309 = vld [vmem:[%s2298 + $0x50] sm:$0xff]
        %v2310 = vld [vmem:[%s2298 + $0x58] sm:$0xff]
        %v2311 = vld [vmem:[%s2298 + $0x60] sm:$0xff]
        %v2312 = vld [vmem:[%s2298 + $0x68] sm:$0xff]
        %v2313 = vld [vmem:[%s2298 + $0x70] sm:$0xff]
        %v2314 = vld [vmem:[%s2298 + $0x78] sm:$0xff]
        %s2315 = scalar_lea.vmem %s10, 4
        %v2316 = vld [vmem:[%s2315] sm:$0x1]
        %v2318 = vperm.slane %v2316, 0
        %2320 = vmatpush.msra.mxu0 %v2314
        %2321 = vmatpush.msra.mxu0 %v2313
        %2322 = vmatpush.msra.mxu0 %v2312
        %2323 = vmatpush.msra.mxu0 %v2311
        %2324 = vmatpush.msra.mxu0 %v2310
        %2325 = vmatpush.msra.mxu0 %v2309
        %2326 = vmatpush.msra.mxu0 %v2308
        %2327 = vmatpush.msra.mxu0 %v2307
        %2328 = vmatpush.msra.mxu0 %v2306
        %2329 = vmatpush.msra.mxu0 %v2305
        %2330 = vmatpush.msra.mxu0 %v2304
        %2331 = vmatpush.msra.mxu0 %v2303
        %2332 = vmatpush.msra.mxu0 %v2302
        %2333 = vmatpush.msra.mxu0 %v2301
        %2334 = vmatpush.msra.mxu0 %v2300
        %2335 = vmatpush.msra.mxu0 %v2299
        %2336 = vmatmul.f32.gmra.mxu0 %v2296
        %v2337 = vpop.f32.mrf.mxu0
        %v2338 = vadd.f32 %v2318, %v2337
        %2339 = vmatmul.f32.gmra.mxu0 %v2297
        %v2340 = vpop.f32.mrf.mxu0
        %v2341 = vadd.f32 %v2318, %v2340
        %2342 = vdwg.mxu0
        %v2343 = vtanh.pop %v2338
        %v2344 = vtanh.pop %v2341
        %s2345 = scalar_lea.vmem [#allocation10], 640
        %v2346 = vld [vmem:[%s2345] sm:$0xff]
        %v2347 = vld [vmem:[%s2345 + $0x8] sm:$0xff]
        %v2348 = vld [vmem:[%s2345 + $0x10] sm:$0xff]
        %v2349 = vld [vmem:[%s2345 + $0x18] sm:$0xff]
        %v2350 = vld [vmem:[%s2345 + $0x20] sm:$0xff]
        %v2351 = vld [vmem:[%s2345 + $0x28] sm:$0xff]
        %v2352 = vld [vmem:[%s2345 + $0x30] sm:$0xff]
        %v2353 = vld [vmem:[%s2345 + $0x38] sm:$0xff]
        %v2354 = vld [vmem:[%s2345 + $0x40] sm:$0xff]
        %v2355 = vld [vmem:[%s2345 + $0x48] sm:$0xff]
        %v2356 = vld [vmem:[%s2345 + $0x50] sm:$0xff]
        %v2357 = vld [vmem:[%s2345 + $0x58] sm:$0xff]
        %v2358 = vld [vmem:[%s2345 + $0x60] sm:$0xff]
        %v2359 = vld [vmem:[%s2345 + $0x68] sm:$0xff]
        %v2360 = vld [vmem:[%s2345 + $0x70] sm:$0xff]
        %v2361 = vld [vmem:[%s2345 + $0x78] sm:$0xff]
        %s2362 = scalar_lea.vmem %s10, 5
        %v2363 = vld [vmem:[%s2362] sm:$0x1]
        %v2365 = vperm.slane %v2363, 0
        %2367 = vmatpush.msra.mxu0 %v2361
        %2368 = vmatpush.msra.mxu0 %v2360
        %2369 = vmatpush.msra.mxu0 %v2359
        %2370 = vmatpush.msra.mxu0 %v2358
        %2371 = vmatpush.msra.mxu0 %v2357
        %2372 = vmatpush.msra.mxu0 %v2356
        %2373 = vmatpush.msra.mxu0 %v2355
        %2374 = vmatpush.msra.mxu0 %v2354
        %2375 = vmatpush.msra.mxu0 %v2353
        %2376 = vmatpush.msra.mxu0 %v2352
        %2377 = vmatpush.msra.mxu0 %v2351
        %2378 = vmatpush.msra.mxu0 %v2350
        %2379 = vmatpush.msra.mxu0 %v2349
        %2380 = vmatpush.msra.mxu0 %v2348
        %2381 = vmatpush.msra.mxu0 %v2347
        %2382 = vmatpush.msra.mxu0 %v2346
        %2383 = vmatmul.f32.gmra.mxu0 %v2343
        %v2384 = vpop.f32.mrf.mxu0
        %v2385 = vadd.f32 %v2365, %v2384
        %2386 = vmatmul.f32.gmra.mxu0 %v2344
        %v2387 = vpop.f32.mrf.mxu0
        %v2388 = vadd.f32 %v2365, %v2387
        %2389 = vdwg.mxu0
        %v2390 = vtanh.pop %v2385
        %v2391 = vtanh.pop %v2388
        %s2392 = scalar_lea.vmem [#allocation10], 768
        %v2393 = vld [vmem:[%s2392] sm:$0xff]
        %v2394 = vld [vmem:[%s2392 + $0x8] sm:$0xff]
        %v2395 = vld [vmem:[%s2392 + $0x10] sm:$0xff]
        %v2396 = vld [vmem:[%s2392 + $0x18] sm:$0xff]
        %v2397 = vld [vmem:[%s2392 + $0x20] sm:$0xff]
        %v2398 = vld [vmem:[%s2392 + $0x28] sm:$0xff]
        %v2399 = vld [vmem:[%s2392 + $0x30] sm:$0xff]
        %v2400 = vld [vmem:[%s2392 + $0x38] sm:$0xff]
        %v2401 = vld [vmem:[%s2392 + $0x40] sm:$0xff]
        %v2402 = vld [vmem:[%s2392 + $0x48] sm:$0xff]
        %v2403 = vld [vmem:[%s2392 + $0x50] sm:$0xff]
        %v2404 = vld [vmem:[%s2392 + $0x58] sm:$0xff]
        %v2405 = vld [vmem:[%s2392 + $0x60] sm:$0xff]
        %v2406 = vld [vmem:[%s2392 + $0x68] sm:$0xff]
        %v2407 = vld [vmem:[%s2392 + $0x70] sm:$0xff]
        %v2408 = vld [vmem:[%s2392 + $0x78] sm:$0xff]
        %s2409 = scalar_lea.vmem %s10, 6
        %v2410 = vld [vmem:[%s2409] sm:$0x1]
        %v2412 = vperm.slane %v2410, 0
        %2414 = vmatpush.msra.mxu0 %v2408
        %2415 = vmatpush.msra.mxu0 %v2407
        %2416 = vmatpush.msra.mxu0 %v2406
        %2417 = vmatpush.msra.mxu0 %v2405
        %2418 = vmatpush.msra.mxu0 %v2404
        %2419 = vmatpush.msra.mxu0 %v2403
        %2420 = vmatpush.msra.mxu0 %v2402
        %2421 = vmatpush.msra.mxu0 %v2401
        %2422 = vmatpush.msra.mxu0 %v2400
        %2423 = vmatpush.msra.mxu0 %v2399
        %2424 = vmatpush.msra.mxu0 %v2398
        %2425 = vmatpush.msra.mxu0 %v2397
        %2426 = vmatpush.msra.mxu0 %v2396
        %2427 = vmatpush.msra.mxu0 %v2395
        %2428 = vmatpush.msra.mxu0 %v2394
        %2429 = vmatpush.msra.mxu0 %v2393
        %2430 = vmatmul.f32.gmra.mxu0 %v2390
        %v2431 = vpop.f32.mrf.mxu0
        %v2432 = vadd.f32 %v2412, %v2431
        %2433 = vmatmul.f32.gmra.mxu0 %v2391
        %v2434 = vpop.f32.mrf.mxu0
        %v2435 = vadd.f32 %v2412, %v2434
        %2436 = vdwg.mxu0
        %v2437 = vtanh.pop %v2432
        %v2438 = vtanh.pop %v2435
        %s2439 = scalar_lea.vmem [#allocation10], 896
        %v2440 = vld [vmem:[%s2439] sm:$0xff]
        %v2441 = vld [vmem:[%s2439 + $0x8] sm:$0xff]
        %v2442 = vld [vmem:[%s2439 + $0x10] sm:$0xff]
        %v2443 = vld [vmem:[%s2439 + $0x18] sm:$0xff]
        %v2444 = vld [vmem:[%s2439 + $0x20] sm:$0xff]
        %v2445 = vld [vmem:[%s2439 + $0x28] sm:$0xff]
        %v2446 = vld [vmem:[%s2439 + $0x30] sm:$0xff]
        %v2447 = vld [vmem:[%s2439 + $0x38] sm:$0xff]
        %v2448 = vld [vmem:[%s2439 + $0x40] sm:$0xff]
        %v2449 = vld [vmem:[%s2439 + $0x48] sm:$0xff]
        %v2450 = vld [vmem:[%s2439 + $0x50] sm:$0xff]
        %v2451 = vld [vmem:[%s2439 + $0x58] sm:$0xff]
        %v2452 = vld [vmem:[%s2439 + $0x60] sm:$0xff]
        %v2453 = vld [vmem:[%s2439 + $0x68] sm:$0xff]
        %v2454 = vld [vmem:[%s2439 + $0x70] sm:$0xff]
        %v2455 = vld [vmem:[%s2439 + $0x78] sm:$0xff]
        %s2456 = scalar_lea.vmem %s10, 7
        %v2457 = vld [vmem:[%s2456] sm:$0x1]
        %v2459 = vperm.slane %v2457, 0
        %2461 = vmatpush.msra.mxu0 %v2455
        %2462 = vmatpush.msra.mxu0 %v2454
        %2463 = vmatpush.msra.mxu0 %v2453
        %2464 = vmatpush.msra.mxu0 %v2452
        %2465 = vmatpush.msra.mxu0 %v2451
        %2466 = vmatpush.msra.mxu0 %v2450
        %2467 = vmatpush.msra.mxu0 %v2449
        %2468 = vmatpush.msra.mxu0 %v2448
        %2469 = vmatpush.msra.mxu0 %v2447
        %2470 = vmatpush.msra.mxu0 %v2446
        %2471 = vmatpush.msra.mxu0 %v2445
        %2472 = vmatpush.msra.mxu0 %v2444
        %2473 = vmatpush.msra.mxu0 %v2443
        %2474 = vmatpush.msra.mxu0 %v2442
        %2475 = vmatpush.msra.mxu0 %v2441
        %2476 = vmatpush.msra.mxu0 %v2440
        %2477 = vmatmul.f32.gmra.mxu0 %v2437
        %v2478 = vpop.f32.mrf.mxu0
        %v2479 = vadd.f32 %v2459, %v2478
        %2480 = vmatmul.f32.gmra.mxu0 %v2438
        %v2481 = vpop.f32.mrf.mxu0
        %v2482 = vadd.f32 %v2459, %v2481
        %2483 = vdwg.mxu0
        %v2484 = vtanh.pop %v2479
        %v2485 = vtanh.pop %v2482
        %s2486 = scalar_lea.vmem [#allocation10], 1024
        %v2487 = vld [vmem:[%s2486] sm:$0xff]
        %v2488 = vld [vmem:[%s2486 + $0x8] sm:$0xff]
        %v2489 = vld [vmem:[%s2486 + $0x10] sm:$0xff]
        %v2490 = vld [vmem:[%s2486 + $0x18] sm:$0xff]
        %v2491 = vld [vmem:[%s2486 + $0x20] sm:$0xff]
        %v2492 = vld [vmem:[%s2486 + $0x28] sm:$0xff]
        %v2493 = vld [vmem:[%s2486 + $0x30] sm:$0xff]
        %v2494 = vld [vmem:[%s2486 + $0x38] sm:$0xff]
        %v2495 = vld [vmem:[%s2486 + $0x40] sm:$0xff]
        %v2496 = vld [vmem:[%s2486 + $0x48] sm:$0xff]
        %v2497 = vld [vmem:[%s2486 + $0x50] sm:$0xff]
        %v2498 = vld [vmem:[%s2486 + $0x58] sm:$0xff]
        %v2499 = vld [vmem:[%s2486 + $0x60] sm:$0xff]
        %v2500 = vld [vmem:[%s2486 + $0x68] sm:$0xff]
        %v2501 = vld [vmem:[%s2486 + $0x70] sm:$0xff]
        %v2502 = vld [vmem:[%s2486 + $0x78] sm:$0xff]
        %s2503 = scalar_lea.vmem %s10, 8
        %v2504 = vld [vmem:[%s2503] sm:$0x1]
        %v2506 = vperm.slane %v2504, 0
        %2508 = vmatpush.msra.mxu0 %v2502
        %2509 = vmatpush.msra.mxu0 %v2501
        %2510 = vmatpush.msra.mxu0 %v2500
        %2511 = vmatpush.msra.mxu0 %v2499
        %2512 = vmatpush.msra.mxu0 %v2498
        %2513 = vmatpush.msra.mxu0 %v2497
        %2514 = vmatpush.msra.mxu0 %v2496
        %2515 = vmatpush.msra.mxu0 %v2495
        %2516 = vmatpush.msra.mxu0 %v2494
        %2517 = vmatpush.msra.mxu0 %v2493
        %2518 = vmatpush.msra.mxu0 %v2492
        %2519 = vmatpush.msra.mxu0 %v2491
        %2520 = vmatpush.msra.mxu0 %v2490
        %2521 = vmatpush.msra.mxu0 %v2489
        %2522 = vmatpush.msra.mxu0 %v2488
        %2523 = vmatpush.msra.mxu0 %v2487
        %2524 = vmatmul.f32.gmra.mxu0 %v2484
        %v2525 = vpop.f32.mrf.mxu0
        %v2526 = vadd.f32 %v2506, %v2525
        %2527 = vmatmul.f32.gmra.mxu0 %v2485
        %v2528 = vpop.f32.mrf.mxu0
        %v2529 = vadd.f32 %v2506, %v2528
        %2530 = vdwg.mxu0
        %v2531 = vtanh.pop %v2526
        %v2532 = vtanh.pop %v2529
        %s2533 = scalar_lea.vmem [#allocation10], 1152
        %v2534 = vld [vmem:[%s2533] sm:$0xff]
        %v2535 = vld [vmem:[%s2533 + $0x8] sm:$0xff]
        %v2536 = vld [vmem:[%s2533 + $0x10] sm:$0xff]
        %v2537 = vld [vmem:[%s2533 + $0x18] sm:$0xff]
        %v2538 = vld [vmem:[%s2533 + $0x20] sm:$0xff]
        %v2539 = vld [vmem:[%s2533 + $0x28] sm:$0xff]
        %v2540 = vld [vmem:[%s2533 + $0x30] sm:$0xff]
        %v2541 = vld [vmem:[%s2533 + $0x38] sm:$0xff]
        %v2542 = vld [vmem:[%s2533 + $0x40] sm:$0xff]
        %v2543 = vld [vmem:[%s2533 + $0x48] sm:$0xff]
        %v2544 = vld [vmem:[%s2533 + $0x50] sm:$0xff]
        %v2545 = vld [vmem:[%s2533 + $0x58] sm:$0xff]
        %v2546 = vld [vmem:[%s2533 + $0x60] sm:$0xff]
        %v2547 = vld [vmem:[%s2533 + $0x68] sm:$0xff]
        %v2548 = vld [vmem:[%s2533 + $0x70] sm:$0xff]
        %v2549 = vld [vmem:[%s2533 + $0x78] sm:$0xff]
        %s2550 = scalar_lea.vmem %s10, 9
        %v2551 = vld [vmem:[%s2550] sm:$0x1]
        %v2553 = vperm.slane %v2551, 0
        %2555 = vmatpush.msra.mxu0 %v2549
        %2556 = vmatpush.msra.mxu0 %v2548
        %2557 = vmatpush.msra.mxu0 %v2547
        %2558 = vmatpush.msra.mxu0 %v2546
        %2559 = vmatpush.msra.mxu0 %v2545
        %2560 = vmatpush.msra.mxu0 %v2544
        %2561 = vmatpush.msra.mxu0 %v2543
        %2562 = vmatpush.msra.mxu0 %v2542
        %2563 = vmatpush.msra.mxu0 %v2541
        %2564 = vmatpush.msra.mxu0 %v2540
        %2565 = vmatpush.msra.mxu0 %v2539
        %2566 = vmatpush.msra.mxu0 %v2538
        %2567 = vmatpush.msra.mxu0 %v2537
        %2568 = vmatpush.msra.mxu0 %v2536
        %2569 = vmatpush.msra.mxu0 %v2535
        %2570 = vmatpush.msra.mxu0 %v2534
        %2571 = vmatmul.f32.gmra.mxu0 %v2531
        %v2572 = vpop.f32.mrf.mxu0
        %v2573 = vadd.f32 %v2553, %v2572
        %2574 = vmatmul.f32.gmra.mxu0 %v2532
        %v2575 = vpop.f32.mrf.mxu0
        %v2576 = vadd.f32 %v2553, %v2575
        %2577 = vdwg.mxu0
        %v2578 = vtanh.pop %v2573
        %v2579 = vtanh.pop %v2576
        %v2580 = vld [vmem:[#allocation11] sm:$0xff]
        %v2581 = vld [vmem:[#allocation11 + $0x8] sm:$0xff]
        %v2582 = vld [vmem:[#allocation11 + $0x10] sm:$0xff]
        %v2583 = vld [vmem:[#allocation11 + $0x18] sm:$0xff]
        %v2584 = vld [vmem:[#allocation11 + $0x20] sm:$0xff]
        %v2585 = vld [vmem:[#allocation11 + $0x28] sm:$0xff]
        %v2586 = vld [vmem:[#allocation11 + $0x30] sm:$0xff]
        %v2587 = vld [vmem:[#allocation11 + $0x38] sm:$0xff]
        %v2588 = vld [vmem:[#allocation11 + $0x40] sm:$0xff]
        %v2589 = vld [vmem:[#allocation11 + $0x48] sm:$0xff]
        %v2590 = vld [vmem:[#allocation11 + $0x50] sm:$0xff]
        %v2591 = vld [vmem:[#allocation11 + $0x58] sm:$0xff]
        %v2592 = vld [vmem:[#allocation11 + $0x60] sm:$0xff]
        %v2593 = vld [vmem:[#allocation11 + $0x68] sm:$0xff]
        %v2594 = vld [vmem:[#allocation11 + $0x70] sm:$0xff]
        %v2595 = vld [vmem:[#allocation11 + $0x78] sm:$0xff]
        %v2596 = vld [vmem:[%s12] sm:$0x1]
        %v2598 = vperm.slane %v2596, 0
        %2600 = vmatpush.msra.mxu0 %v2595
        %2601 = vmatpush.msra.mxu0 %v2594
        %2602 = vmatpush.msra.mxu0 %v2593
        %2603 = vmatpush.msra.mxu0 %v2592
        %2604 = vmatpush.msra.mxu0 %v2591
        %2605 = vmatpush.msra.mxu0 %v2590
        %2606 = vmatpush.msra.mxu0 %v2589
        %2607 = vmatpush.msra.mxu0 %v2588
        %2608 = vmatpush.msra.mxu0 %v2587
        %2609 = vmatpush.msra.mxu0 %v2586
        %2610 = vmatpush.msra.mxu0 %v2585
        %2611 = vmatpush.msra.mxu0 %v2584
        %2612 = vmatpush.msra.mxu0 %v2583
        %2613 = vmatpush.msra.mxu0 %v2582
        %2614 = vmatpush.msra.mxu0 %v2581
        %2615 = vmatpush.msra.mxu0 %v2580
        %2616 = vmatmul.f32.gmra.mxu0 %v2578
        %v2617 = vpop.f32.mrf.mxu0
        %v2618 = vadd.f32 %v2598, %v2617
        %2619 = vmatmul.f32.gmra.mxu0 %v2579
        %v2620 = vpop.f32.mrf.mxu0
        %v2621 = vadd.f32 %v2598, %v2620
        %2622 = vdwg.mxu0
        %v2623 = vtanh.pop %v2618
        %v2624 = vtanh.pop %v2621
        %s2625 = scalar_lea.vmem [#allocation11], 128
        %v2626 = vld [vmem:[%s2625] sm:$0xff]
        %v2627 = vld [vmem:[%s2625 + $0x8] sm:$0xff]
        %v2628 = vld [vmem:[%s2625 + $0x10] sm:$0xff]
        %v2629 = vld [vmem:[%s2625 + $0x18] sm:$0xff]
        %v2630 = vld [vmem:[%s2625 + $0x20] sm:$0xff]
        %v2631 = vld [vmem:[%s2625 + $0x28] sm:$0xff]
        %v2632 = vld [vmem:[%s2625 + $0x30] sm:$0xff]
        %v2633 = vld [vmem:[%s2625 + $0x38] sm:$0xff]
        %v2634 = vld [vmem:[%s2625 + $0x40] sm:$0xff]
        %v2635 = vld [vmem:[%s2625 + $0x48] sm:$0xff]
        %v2636 = vld [vmem:[%s2625 + $0x50] sm:$0xff]
        %v2637 = vld [vmem:[%s2625 + $0x58] sm:$0xff]
        %v2638 = vld [vmem:[%s2625 + $0x60] sm:$0xff]
        %v2639 = vld [vmem:[%s2625 + $0x68] sm:$0xff]
        %v2640 = vld [vmem:[%s2625 + $0x70] sm:$0xff]
        %v2641 = vld [vmem:[%s2625 + $0x78] sm:$0xff]
        %s2642 = scalar_lea.vmem %s12, 1
        %v2643 = vld [vmem:[%s2642] sm:$0x1]
        %v2645 = vperm.slane %v2643, 0
        %2647 = vmatpush.msra.mxu0 %v2641
        %2648 = vmatpush.msra.mxu0 %v2640
        %2649 = vmatpush.msra.mxu0 %v2639
        %2650 = vmatpush.msra.mxu0 %v2638
        %2651 = vmatpush.msra.mxu0 %v2637
        %2652 = vmatpush.msra.mxu0 %v2636
        %2653 = vmatpush.msra.mxu0 %v2635
        %2654 = vmatpush.msra.mxu0 %v2634
        %2655 = vmatpush.msra.mxu0 %v2633
        %2656 = vmatpush.msra.mxu0 %v2632
        %2657 = vmatpush.msra.mxu0 %v2631
        %2658 = vmatpush.msra.mxu0 %v2630
        %2659 = vmatpush.msra.mxu0 %v2629
        %2660 = vmatpush.msra.mxu0 %v2628
        %2661 = vmatpush.msra.mxu0 %v2627
        %2662 = vmatpush.msra.mxu0 %v2626
        %2663 = vmatmul.f32.gmra.mxu0 %v2623
        %v2664 = vpop.f32.mrf.mxu0
        %v2665 = vadd.f32 %v2645, %v2664
        %2666 = vmatmul.f32.gmra.mxu0 %v2624
        %v2667 = vpop.f32.mrf.mxu0
        %v2668 = vadd.f32 %v2645, %v2667
        %2669 = vdwg.mxu0
        %v2670 = vtanh.pop %v2665
        %v2671 = vtanh.pop %v2668
        %s2672 = scalar_lea.vmem [#allocation11], 256
        %v2673 = vld [vmem:[%s2672] sm:$0xff]
        %v2674 = vld [vmem:[%s2672 + $0x8] sm:$0xff]
        %v2675 = vld [vmem:[%s2672 + $0x10] sm:$0xff]
        %v2676 = vld [vmem:[%s2672 + $0x18] sm:$0xff]
        %v2677 = vld [vmem:[%s2672 + $0x20] sm:$0xff]
        %v2678 = vld [vmem:[%s2672 + $0x28] sm:$0xff]
        %v2679 = vld [vmem:[%s2672 + $0x30] sm:$0xff]
        %v2680 = vld [vmem:[%s2672 + $0x38] sm:$0xff]
        %v2681 = vld [vmem:[%s2672 + $0x40] sm:$0xff]
        %v2682 = vld [vmem:[%s2672 + $0x48] sm:$0xff]
        %v2683 = vld [vmem:[%s2672 + $0x50] sm:$0xff]
        %v2684 = vld [vmem:[%s2672 + $0x58] sm:$0xff]
        %v2685 = vld [vmem:[%s2672 + $0x60] sm:$0xff]
        %v2686 = vld [vmem:[%s2672 + $0x68] sm:$0xff]
        %v2687 = vld [vmem:[%s2672 + $0x70] sm:$0xff]
        %v2688 = vld [vmem:[%s2672 + $0x78] sm:$0xff]
        %s2689 = scalar_lea.vmem %s12, 2
        %v2690 = vld [vmem:[%s2689] sm:$0x1]
        %v2692 = vperm.slane %v2690, 0
        %2694 = vmatpush.msra.mxu0 %v2688
        %2695 = vmatpush.msra.mxu0 %v2687
        %2696 = vmatpush.msra.mxu0 %v2686
        %2697 = vmatpush.msra.mxu0 %v2685
        %2698 = vmatpush.msra.mxu0 %v2684
        %2699 = vmatpush.msra.mxu0 %v2683
        %2700 = vmatpush.msra.mxu0 %v2682
        %2701 = vmatpush.msra.mxu0 %v2681
        %2702 = vmatpush.msra.mxu0 %v2680
        %2703 = vmatpush.msra.mxu0 %v2679
        %2704 = vmatpush.msra.mxu0 %v2678
        %2705 = vmatpush.msra.mxu0 %v2677
        %2706 = vmatpush.msra.mxu0 %v2676
        %2707 = vmatpush.msra.mxu0 %v2675
        %2708 = vmatpush.msra.mxu0 %v2674
        %2709 = vmatpush.msra.mxu0 %v2673
        %2710 = vmatmul.f32.gmra.mxu0 %v2670
        %v2711 = vpop.f32.mrf.mxu0
        %v2712 = vadd.f32 %v2692, %v2711
        %2713 = vmatmul.f32.gmra.mxu0 %v2671
        %v2714 = vpop.f32.mrf.mxu0
        %v2715 = vadd.f32 %v2692, %v2714
        %2716 = vdwg.mxu0
        %v2717 = vtanh.pop %v2712
        %v2718 = vtanh.pop %v2715
        %s2719 = scalar_lea.vmem [#allocation11], 384
        %v2720 = vld [vmem:[%s2719] sm:$0xff]
        %v2721 = vld [vmem:[%s2719 + $0x8] sm:$0xff]
        %v2722 = vld [vmem:[%s2719 + $0x10] sm:$0xff]
        %v2723 = vld [vmem:[%s2719 + $0x18] sm:$0xff]
        %v2724 = vld [vmem:[%s2719 + $0x20] sm:$0xff]
        %v2725 = vld [vmem:[%s2719 + $0x28] sm:$0xff]
        %v2726 = vld [vmem:[%s2719 + $0x30] sm:$0xff]
        %v2727 = vld [vmem:[%s2719 + $0x38] sm:$0xff]
        %v2728 = vld [vmem:[%s2719 + $0x40] sm:$0xff]
        %v2729 = vld [vmem:[%s2719 + $0x48] sm:$0xff]
        %v2730 = vld [vmem:[%s2719 + $0x50] sm:$0xff]
        %v2731 = vld [vmem:[%s2719 + $0x58] sm:$0xff]
        %v2732 = vld [vmem:[%s2719 + $0x60] sm:$0xff]
        %v2733 = vld [vmem:[%s2719 + $0x68] sm:$0xff]
        %v2734 = vld [vmem:[%s2719 + $0x70] sm:$0xff]
        %v2735 = vld [vmem:[%s2719 + $0x78] sm:$0xff]
        %s2736 = scalar_lea.vmem %s12, 3
        %v2737 = vld [vmem:[%s2736] sm:$0x1]
        %v2739 = vperm.slane %v2737, 0
        %2741 = vmatpush.msra.mxu0 %v2735
        %2742 = vmatpush.msra.mxu0 %v2734
        %2743 = vmatpush.msra.mxu0 %v2733
        %2744 = vmatpush.msra.mxu0 %v2732
        %2745 = vmatpush.msra.mxu0 %v2731
        %2746 = vmatpush.msra.mxu0 %v2730
        %2747 = vmatpush.msra.mxu0 %v2729
        %2748 = vmatpush.msra.mxu0 %v2728
        %2749 = vmatpush.msra.mxu0 %v2727
        %2750 = vmatpush.msra.mxu0 %v2726
        %2751 = vmatpush.msra.mxu0 %v2725
        %2752 = vmatpush.msra.mxu0 %v2724
        %2753 = vmatpush.msra.mxu0 %v2723
        %2754 = vmatpush.msra.mxu0 %v2722
        %2755 = vmatpush.msra.mxu0 %v2721
        %2756 = vmatpush.msra.mxu0 %v2720
        %2757 = vmatmul.f32.gmra.mxu0 %v2717
        %v2758 = vpop.f32.mrf.mxu0
        %v2759 = vadd.f32 %v2739, %v2758
        %2760 = vmatmul.f32.gmra.mxu0 %v2718
        %v2761 = vpop.f32.mrf.mxu0
        %v2762 = vadd.f32 %v2739, %v2761
        %2763 = vdwg.mxu0
        %v2764 = vtanh.pop %v2759
        %v2765 = vtanh.pop %v2762
        %2766 = vst [vmem:[%s534] sm:$0xff] %v2764
        %2767 = vst [vmem:[%s534 + $0x8] sm:$0xff] %v2765
        %s2768 = sand.u32 %s317, 1
        %s2769 = scalar_lea.sflag [#allocation4], %s2768
        %s2770 = sand.u32 %s317, 1
        %s2771 = smul.addr %s2770, 16
        %s2772 = scalar_lea.vmem [#allocation13], %s2771
        // Predicated region
        $region97: #{tpu_custom_call.1} parent=71 // pred_check
          %p2773 = pneg %p327
        $region98: #{tpu_custom_call.1} parent=71 // pred_check_branch
          %2775 = sbr.rel (%p2773) target = $region100
        $region99: #{tpu_custom_call.1} parent=71 // pred_region
          %s2776 = smul.u32 2, %s31
          %2778 = vsyncadd %s2769, 0
          %s2779 = smul.addr %s2776, 8
          %s2780 = scalar_lea.hbm %s13, %s2779
          %s2781 = sshll.u32 %s2772, 4
          %s2782 = int_to_ptr.vmem [resolvable:$true] %s2781
          %s2783 = sshll.u32 %s2780, 4
          %s2784 = int_to_ptr.hbm [resolvable:$true] %s2783
          %2789 = dma.vmem_to_hbm [thread:$0]  %s2782, 256, %s2784, %s2769, 128, 128, 8
        $region100: #{tpu_custom_call.1} parent=71 // pred_fallthru
          _
      $region72: #{tpu_custom_call.1} parent=5 // pred_fallthru
        _
      %p2790 = scmp.le.s32.totalorder 2, %s26
      // Predicated region
      $region101: #{tpu_custom_call.1} parent=5 // pred_check
        %p2791 = pneg %p2790
      $region102: #{tpu_custom_call.1} parent=5 // pred_check_branch
        %2793 = sbr.rel (%p2791) target = $region104
      $region103: #{tpu_custom_call.1} parent=5 // pred_region
        %s2794 = ssub.s32 %s26, 2
        // Predicated region
        $region105: #{tpu_custom_call.1} parent=103 // pred_check
          %p2795 = pneg %p333
        $region106: #{tpu_custom_call.1} parent=103 // pred_check_branch
          %2797 = sbr.rel (%p2795) target = $region108
        $region107: #{tpu_custom_call.1} parent=103 // pred_region
          %s2798 = sand.u32 %s318, 1
          %s2799 = scalar_lea.sflag [#allocation4], %s2798
          %s2800 = sand.u32 %s318, 1
          %s2801 = smul.addr %s2800, 16
          %s2802 = scalar_lea.vmem [#allocation13], %s2801
          %2804 = dma.done %s2799, 256
        $region108: #{tpu_custom_call.1} parent=103 // pred_fallthru
          _
      $region104: #{tpu_custom_call.1} parent=5 // pred_fallthru
        _
    $region6: #{tpu_custom_call.1} parent=1 // loop_footer
      %s30 = sadd.s32 1, %s26
    $region7: #{tpu_custom_call.1} parent=1 // loop_footer_branch
      %25 = sbr.rel target = $region3
    $region8: #{tpu_custom_call.1} parent=1 // loop_exit
      _
    %2805 = vsyncpa [#allocation3], 1
    %s2806 = scalar_lea.sflag [#allocation3], 1
    %2807 = vsyncpa %s2806, 1
    %2808 = vsyncpa [#allocation6], 1
    %2809 = vsyncpa [#allocation9], 1
    %2810 = vsyncpa [#allocation12], 1
    %2811 = vsyncpa [#allocation4], 1
    %s2812 = scalar_lea.sflag [#allocation4], 1
    %2813 = vsyncpa %s2812, 1

</llo_original>
